<compile_context>
chip_gen: v7x
topology: tpu7x:2x2x1
jax: 0.10.0
libtpu: 0.0.40
codegen_flags: <defaults>
</compile_context>

<pallas_src>
import jax
import jax.numpy as jnp
from jax.experimental import pallas as pl
from jax.experimental.pallas import tpu as pltpu

EPS = 1e-5
SB = 24        # padded per-batch row stride of the a2 scratch (21 -> 24, 8-aligned)
H1, W1 = 5, 2  # conv1 output spatial size


# ----------------------------- pallas plumbing ------------------------------

def _full_spec(shape):
    n = len(shape)
    return pl.BlockSpec(shape, lambda i, _n=n: (0,) * _n)


# --------------------------------- kernel -----------------------------------

def _decoder_kernel(x_ref, lw_ref, lb_ref, g1_ref, be1_ref,
                    w1_ref, b1f_ref, g2_ref, be2_ref,
                    w2_ref, b2f_ref, b2r_ref, g3_ref, be3_ref,
                    w3_ref, b3r_ref,
                    out_ref,
                    a1_ref, a2_ref):
    B = x_ref.shape[0]

    # ---- Stage 1: Linear -> ReLU -> BatchNorm2d(256) over (B, 256, 1, 1) ----
    h = jnp.dot(x_ref[...].astype(jnp.bfloat16), lw_ref[...],
                preferred_element_type=jnp.float32) + lb_ref[...]
    h = jnp.maximum(h, 0.0)
    mu = jnp.mean(h, axis=0, keepdims=True)
    hc = h - mu
    var1 = jnp.mean(hc * hc, axis=0, keepdims=True)        # biased (PyTorch BN)
    h = hc * jax.lax.rsqrt(var1 + EPS) * g1_ref[...] + be1_ref[...]

    # ---- Stage 2: ConvTranspose2d(256->128, k=(5,2)) on a 1x1 input == matmul.
    # y1 columns ordered (kh1, kw1, c2); scatter into a1 rows (kw1, kh1, b),
    # lanes = c2 (128).  All lane slices are 128-aligned.
    y1 = jnp.dot(h.astype(jnp.bfloat16), w1_ref[...],
                 preferred_element_type=jnp.float32) + b1f_ref[...]
    for kw1 in range(W1):
        for kh1 in range(H1):
            dst = (kw1 * H1 + kh1) * B
            c0 = kh1 * (W1 * 128) + kw1 * 128
            a1_ref[dst:dst + B, :] = y1[:, c0:c0 + 128]

    # ---- BatchNorm2d(128) + ReLU.  a1 lanes are exactly the 128 channels, so
    # the per-channel stats are plain column reductions (no fold matrices).
    a1 = a1_ref[...]
    n2 = float(B * H1 * W1)
    cs2 = jnp.sum(a1, axis=0, keepdims=True)
    css2 = jnp.sum(a1 * a1, axis=0, keepdims=True)
    mean2 = cs2 / n2
    var2 = jnp.maximum(css2 / n2 - mean2 * mean2, 0.0)
    scale2 = g2_ref[...] * jax.lax.rsqrt(var2 + EPS)
    shift2 = be2_ref[...] - mean2 * scale2
    a1n = jnp.maximum(a1 * scale2 + shift2, 0.0)

    # ---- Stage 3: ConvTranspose2d(128->64, k=4x4, s=4, output_padding=(1,0)).
    # Non-overlapping -> one DENSE matmul; y2 rows = (iw1, ih1, b),
    # cols = (kh2, kw2, c3).  Scatter from registers into a2 with (4, 512)
    # block stores: a2 rows = (b, oh2) with padded stride SB, lanes = (ow2, c3).
    y2 = jnp.dot(a1n.astype(jnp.bfloat16), w2_ref[...],
                 preferred_element_type=jnp.float32) + b2f_ref[...]
    for b in range(B):
        for ih1 in range(H1):
            r_lo = ih1 * B + b              # iw1 = 0 source row of y2
            r_hi = H1 * B + ih1 * B + b     # iw1 = 1 source row of y2
            rows = []
            for kh2 in range(4):
                c0 = kh2 * 256
                rows.append(jnp.concatenate(
                    [y2[r_lo:r_lo + 1, c0:c0 + 256],
                     y2[r_hi:r_hi + 1, c0:c0 + 256]], axis=1))
            blk = jnp.concatenate(rows, axis=0)             # (4, 512), rows = kh2
            dst = b * SB + 4 * ih1                          # oh2 = 4*ih1 + kh2
            a2_ref[dst:dst + 4, :] = blk
        # output_padding row (oh2 == 20): conv2 bias only.
        a2_ref[b * SB + 20:b * SB + 21, :] = b2r_ref[...]
        # alignment pad rows: zero so full-buffer BN sums stay exact.
        a2_ref[b * SB + 21:b * SB + 24, :] = jnp.zeros((3, 512), jnp.float32)

    # ---- BatchNorm2d(64) + ReLU.  Per-channel stats: row-sum then fold the
    # 8 ow2 lane blocks with aligned slice adds (no MXU, no fold matrices).
    a2 = a2_ref[...]                                        # (SB*B, 512)
    n3 = float(B * 21 * 8)
    cs3 = jnp.sum(a2, axis=0, keepdims=True)                # pad rows are zero
    css3 = jnp.sum(a2 * a2, axis=0, keepdims=True)

    def _fold8(v):                                          # (1, 512) -> (1, 64)
        v = v[:, 0:256] + v[:, 256:512]
        v = v[:, 0:128] + v[:, 128:256]
        return v[:, 0:64] + v[:, 64:128]

    mean3 = _fold8(cs3) / n3
    var3 = jnp.maximum(_fold8(css3) / n3 - mean3 * mean3, 0.0)
    scale3 = g3_ref[...] * jax.lax.rsqrt(var3 + EPS)        # (1, 64)
    shift3 = be3_ref[...] - mean3 * scale3
    scale3_t = jnp.concatenate([scale3] * 8, axis=1)        # (1, 512)
    shift3_t = jnp.concatenate([shift3] * 8, axis=1)
    a2n = jnp.maximum(a2 * scale3_t + shift3_t, 0.0)

    # ---- Stage 4: ConvTranspose2d(64->4, k=(3,4), s=4) + ReLU, fused over the
    # whole padded batch block.  w3p is block-diagonal over ow2 with kh3 padded
    # 3 -> 4 (zero column => bias-only oh3 % 4 == 3 rows), so the matmul output
    # layout (b, co4, oh2, kh3*32 + ow3) is row-major identical to NCHW
    # (b, co4, 84, 32).  Output stores are lane-dense (21, 128) blocks.
    y3 = jnp.maximum(
        jnp.dot(a2n.astype(jnp.bfloat16), w3_ref[...],
                preferred_element_type=jnp.float32) + b3r_ref[...], 0.0)
    for b in range(B):
        for co4 in range(4):
            out_ref[b, co4, :, :] = y3[b * SB:b * SB + 21,
                                       co4 * 128:(co4 + 1) * 128]


# ------------------------------- parameters ---------------------------------

def init_params(key, latent_size):
    ks = jax.random.split(key, 8)
    s = 0.1
    lin_w = (jax.random.normal(ks[0], (latent_size, 256)) * s).astype(jnp.float32)
    lin_b = (jax.random.normal(ks[1], (256,)) * s).astype(jnp.float32)
    w1 = (jax.random.normal(ks[2], (256, 128, 5, 2)) * s).astype(jnp.float32)
    b1 = (jax.random.normal(ks[3], (128,)) * s).astype(jnp.float32)
    w2 = (jax.random.normal(ks[4], (128, 64, 4, 4)) * s).astype(jnp.float32)
    b2 = (jax.random.normal(ks[5], (64,)) * s).astype(jnp.float32)
    w3 = (jax.random.normal(ks[6], (64, 4, 3, 4)) * s).astype(jnp.float32)
    b3 = (jax.random.normal(ks[7], (4,)) * s).astype(jnp.float32)

    p = {}
    # Linear(latent, 256): weight in bf16 for the MXU, bias stays f32.
    p["lin_w"] = lin_w.astype(jnp.bfloat16)
    p["lin_b"] = lin_b.reshape(1, 256)
    # BatchNorm affine params (PyTorch default init: weight=1, bias=0), f32.
    p["bn1_g"] = jnp.ones((1, 256), jnp.float32)
    p["bn1_b"] = jnp.zeros((1, 256), jnp.float32)
    p["bn2_g"] = jnp.ones((1, 128), jnp.float32)
    p["bn2_b"] = jnp.zeros((1, 128), jnp.float32)
    p["bn3_g"] = jnp.ones((1, 64), jnp.float32)
    p["bn3_b"] = jnp.zeros((1, 64), jnp.float32)

    # --- pre-packed conv-transpose weights (hoisted out of the forward) ---
    # conv1 (256 -> 128, k=(5,2)): columns ordered (kh1, kw1, c2).  bf16.
    p["w1p"] = jnp.transpose(w1, (0, 2, 3, 1)).reshape(256, 5 * 2 * 128) \
                  .astype(jnp.bfloat16)
    p["b1f"] = jnp.tile(b1, 5 * 2).reshape(1, 1280)

    # conv2 (128 -> 64, k=4x4, s=4): DENSE packing, rows c2, cols (kh2, kw2, c3).
    p["w2d"] = jnp.transpose(w2, (0, 2, 3, 1)).reshape(128, 4 * 4 * 64) \
                  .astype(jnp.bfloat16)
    p["b2f"] = jnp.tile(b2, 4 * 4).reshape(1, 1024)        # bias per (kh2,kw2,c3)
    p["b2row"] = jnp.tile(b2, 8).reshape(1, 512)           # bias per (ow2, c3)

    # conv3 (64 -> 4, k=(3,4), s=4): rows (ow2, c3), cols (co4, kh3, ow3); kh3
    # padded 3 -> 4 with zeros (bias-only rows oh3 % 4 == 3); block-diagonal
    # over ow2 with ow3 = 4*ow2 + kw3.  bf16.
    w3p = jnp.pad(w3, ((0, 0), (0, 0), (0, 1), (0, 0)))      # (c3, co4, 4, kw3)
    base = w3p[:, :, :, None, :]                             # (c3, co4, kh3, 1, kw3)
    blocks = [jnp.pad(base, ((0, 0), (0, 0), (0, 0), (o, 7 - o), (0, 0)))
              for o in range(8)]
    p["w3p"] = jnp.stack(blocks, axis=0).reshape(8 * 64, 4 * 4 * 8 * 4) \
                  .astype(jnp.bfloat16)                      # (512, 512)
    p["b3r"] = jnp.repeat(b3, 128).reshape(1, 512)
    return p


# --------------------------------- forward ----------------------------------

@jax.jit
def decoder_forward(params, x):
    B = x.shape[0]
    args = (
        x, params["lin_w"], params["lin_b"], params["bn1_g"], params["bn1_b"],
        params["w1p"], params["b1f"], params["bn2_g"], params["bn2_b"],
        params["w2d"], params["b2f"], params["b2row"],
        params["bn3_g"], params["bn3_b"],
        params["w3p"], params["b3r"],
    )
    out_packed = pl.pallas_call(
        _decoder_kernel,
        grid=(1,),
        in_specs=[_full_spec(a.shape) for a in args],
        out_specs=_full_spec((B, 4, 21, 128)),
        out_shape=jax.ShapeDtypeStruct((B, 4, 21, 128), jnp.float32),
        scratch_shapes=[
            pltpu.VMEM((2 * H1 * B, 128), jnp.float32),   # a1: conv1 output, lanes = c2
            pltpu.VMEM((SB * B, 512), jnp.float32),       # a2: conv2 output (+pad rows)
        ],
        compiler_params=pltpu.CompilerParams(dimension_semantics=("arbitrary",)),
    )(*args)
    # (B, 4, 21, 128) is row-major (B, 4, 84, 32); conv3 output height is 83,
    # so drop the phantom last row (oh3 == 83).  Reshape is free; slice is tiny.
    return out_packed.reshape(B, 4, 84, 32)[:, :, :83, :]


if __name__ == "__main__":
    key = jax.random.PRNGKey(0)
    kp, kx = jax.random.split(key)
    latent_size = 16
    B = 2
    params = init_params(kp, latent_size)
    x = jax.random.normal(kx, (B, latent_size), dtype=jnp.float32)
    out = decoder_forward(params, x)
    out = jax.block_until_ready(out)
    assert out.shape == (B, 4, 83, 32), out.shape
    assert bool(jnp.all(jnp.isfinite(out)))
    print("KERNEL_OK")
</pallas_src>

<mosaic_0001>
module attributes {stable_mosaic.version = 11 : i64} {
  func.func @_decoder_kernel(%arg0: i32, %arg1: memref<2x16xf32, #tpu.memory_space<vmem>>, %arg2: memref<16x256xbf16, #tpu.memory_space<vmem>>, %arg3: memref<1x256xf32, #tpu.memory_space<vmem>>, %arg4: memref<1x256xf32, #tpu.memory_space<vmem>>, %arg5: memref<1x256xf32, #tpu.memory_space<vmem>>, %arg6: memref<256x1280xbf16, #tpu.memory_space<vmem>>, %arg7: memref<1x1280xf32, #tpu.memory_space<vmem>>, %arg8: memref<1x128xf32, #tpu.memory_space<vmem>>, %arg9: memref<1x128xf32, #tpu.memory_space<vmem>>, %arg10: memref<128x1024xbf16, #tpu.memory_space<vmem>>, %arg11: memref<1x1024xf32, #tpu.memory_space<vmem>>, %arg12: memref<1x512xf32, #tpu.memory_space<vmem>>, %arg13: memref<1x64xf32, #tpu.memory_space<vmem>>, %arg14: memref<1x64xf32, #tpu.memory_space<vmem>>, %arg15: memref<512x512xbf16, #tpu.memory_space<vmem>>, %arg16: memref<1x512xf32, #tpu.memory_space<vmem>>, %arg17: memref<2x4x21x128xf32, #tpu.memory_space<vmem>>, %arg18: memref<20x128xf32, #tpu.memory_space<vmem>>, %arg19: memref<48x512xf32, #tpu.memory_space<vmem>>) attributes {dimension_semantics = [#tpu.dimension_semantics<arbitrary>], iteration_bounds = array<i64: 1>, scalar_prefetch = 0 : i64, scratch_operands = 2 : i64, tpu.core_type = #tpu.core_type<tc>, window_params = [{pipeline_mode = #tpu.pipeline_mode<synchronous>, transform_indices = @transform_0, window_bounds = array<i64: 2, 16>}, {pipeline_mode = #tpu.pipeline_mode<synchronous>, transform_indices = @transform_1, window_bounds = array<i64: 16, 256>}, {pipeline_mode = #tpu.pipeline_mode<synchronous>, transform_indices = @transform_2, window_bounds = array<i64: 1, 256>}, {pipeline_mode = #tpu.pipeline_mode<synchronous>, transform_indices = @transform_3, window_bounds = array<i64: 1, 256>}, {pipeline_mode = #tpu.pipeline_mode<synchronous>, transform_indices = @transform_4, window_bounds = array<i64: 1, 256>}, {pipeline_mode = #tpu.pipeline_mode<synchronous>, transform_indices = @transform_5, window_bounds = array<i64: 256, 1280>}, {pipeline_mode = #tpu.pipeline_mode<synchronous>, transform_indices = @transform_6, window_bounds = array<i64: 1, 1280>}, {pipeline_mode = #tpu.pipeline_mode<synchronous>, transform_indices = @transform_7, window_bounds = array<i64: 1, 128>}, {pipeline_mode = #tpu.pipeline_mode<synchronous>, transform_indices = @transform_8, window_bounds = array<i64: 1, 128>}, {pipeline_mode = #tpu.pipeline_mode<synchronous>, transform_indices = @transform_9, window_bounds = array<i64: 128, 1024>}, {pipeline_mode = #tpu.pipeline_mode<synchronous>, transform_indices = @transform_10, window_bounds = array<i64: 1, 1024>}, {pipeline_mode = #tpu.pipeline_mode<synchronous>, transform_indices = @transform_11, window_bounds = array<i64: 1, 512>}, {pipeline_mode = #tpu.pipeline_mode<synchronous>, transform_indices = @transform_12, window_bounds = array<i64: 1, 64>}, {pipeline_mode = #tpu.pipeline_mode<synchronous>, transform_indices = @transform_13, window_bounds = array<i64: 1, 64>}, {pipeline_mode = #tpu.pipeline_mode<synchronous>, transform_indices = @transform_14, window_bounds = array<i64: 512, 512>}, {pipeline_mode = #tpu.pipeline_mode<synchronous>, transform_indices = @transform_15, window_bounds = array<i64: 1, 512>}, {pipeline_mode = #tpu.pipeline_mode<synchronous>, transform_indices = @transform_16, window_bounds = array<i64: 2, 4, 21, 128>}]} {
    %c0 = arith.constant 0 : index
    %c0_0 = arith.constant 0 : index
    %0 = vector.load %arg1[%c0, %c0_0] : memref<2x16xf32, #tpu.memory_space<vmem>>, vector<2x16xf32>
    %1 = arith.truncf %0 : vector<2x16xf32> to vector<2x16xbf16>
    %c0_1 = arith.constant 0 : index
    %c0_2 = arith.constant 0 : index
    %2 = vector.load %arg2[%c0_1, %c0_2] : memref<16x256xbf16, #tpu.memory_space<vmem>>, vector<16x256xbf16>
    %cst = arith.constant dense<0.000000e+00> : vector<2x256xf32>
    %3 = tpu.matmul %1, %2, %cst {dimension_numbers = #tpu.dot_dimension_numbers<[1], [0], [0], [1], [0, 0, 1, 1], [], []>} : vector<2x16xbf16>, vector<16x256xbf16>, vector<2x256xf32> -> vector<2x256xf32>
    %c0_3 = arith.constant 0 : index
    %c0_4 = arith.constant 0 : index
    %4 = vector.load %arg3[%c0_3, %c0_4] : memref<1x256xf32, #tpu.memory_space<vmem>>, vector<1x256xf32>
    %5 = vector.broadcast %4 : vector<1x256xf32> to vector<2x256xf32>
    %6 = arith.addf %3, %5 : vector<2x256xf32>
    %cst_5 = arith.constant 0.000000e+00 : f32
    %7 = vector.broadcast %cst_5 : f32 to vector<2x256xf32>
    %8 = arith.maximumf %6, %7 : vector<2x256xf32>
    %cst_6 = arith.constant dense<0.000000e+00> : vector<256xf32>
    %9 = vector.multi_reduction <add>, %8, %cst_6 [0] : vector<2x256xf32> to vector<256xf32>
    %10 = vector.shape_cast %9 : vector<256xf32> to vector<1x256xf32>
    %cst_7 = arith.constant 2.000000e+00 : f32
    %11 = vector.broadcast %cst_7 : f32 to vector<1x256xf32>
    %12 = arith.divf %10, %11 : vector<1x256xf32>
    %13 = vector.broadcast %12 : vector<1x256xf32> to vector<2x256xf32>
    %14 = arith.subf %8, %13 : vector<2x256xf32>
    %15 = arith.mulf %14, %14 : vector<2x256xf32>
    %cst_8 = arith.constant dense<0.000000e+00> : vector<256xf32>
    %16 = vector.multi_reduction <add>, %15, %cst_8 [0] : vector<2x256xf32> to vector<256xf32>
    %17 = vector.shape_cast %16 : vector<256xf32> to vector<1x256xf32>
    %cst_9 = arith.constant 2.000000e+00 : f32
    %18 = vector.broadcast %cst_9 : f32 to vector<1x256xf32>
    %19 = arith.divf %17, %18 : vector<1x256xf32>
    %cst_10 = arith.constant 9.99999974E-6 : f32
    %20 = vector.broadcast %cst_10 : f32 to vector<1x256xf32>
    %21 = arith.addf %19, %20 : vector<1x256xf32>
    %22 = math.rsqrt %21 : vector<1x256xf32>
    %23 = vector.broadcast %22 : vector<1x256xf32> to vector<2x256xf32>
    %24 = arith.mulf %14, %23 : vector<2x256xf32>
    %c0_11 = arith.constant 0 : index
    %c0_12 = arith.constant 0 : index
    %25 = vector.load %arg4[%c0_11, %c0_12] : memref<1x256xf32, #tpu.memory_space<vmem>>, vector<1x256xf32>
    %26 = vector.broadcast %25 : vector<1x256xf32> to vector<2x256xf32>
    %27 = arith.mulf %24, %26 : vector<2x256xf32>
    %c0_13 = arith.constant 0 : index
    %c0_14 = arith.constant 0 : index
    %28 = vector.load %arg5[%c0_13, %c0_14] : memref<1x256xf32, #tpu.memory_space<vmem>>, vector<1x256xf32>
    %29 = vector.broadcast %28 : vector<1x256xf32> to vector<2x256xf32>
    %30 = arith.addf %27, %29 : vector<2x256xf32>
    %31 = arith.truncf %30 : vector<2x256xf32> to vector<2x256xbf16>
    %c0_15 = arith.constant 0 : index
    %c0_16 = arith.constant 0 : index
    %32 = vector.load %arg6[%c0_15, %c0_16] : memref<256x1280xbf16, #tpu.memory_space<vmem>>, vector<256x1280xbf16>
    %cst_17 = arith.constant dense<0.000000e+00> : vector<2x1280xf32>
    %33 = tpu.matmul %31, %32, %cst_17 {dimension_numbers = #tpu.dot_dimension_numbers<[1], [0], [0], [1], [0, 0, 1, 1], [], []>} : vector<2x256xbf16>, vector<256x1280xbf16>, vector<2x1280xf32> -> vector<2x1280xf32>
    %c0_18 = arith.constant 0 : index
    %c0_19 = arith.constant 0 : index
    %34 = vector.load %arg7[%c0_18, %c0_19] : memref<1x1280xf32, #tpu.memory_space<vmem>>, vector<1x1280xf32>
    %35 = vector.broadcast %34 : vector<1x1280xf32> to vector<2x1280xf32>
    %36 = arith.addf %33, %35 : vector<2x1280xf32>
    %37 = vector.extract_strided_slice %36 {offsets = [0, 0], sizes = [2, 128], strides = [1, 1]} : vector<2x1280xf32> to vector<2x128xf32>
    %c0_20 = arith.constant 0 : index
    %c0_21 = arith.constant 0 : index
    %38 = vector.load %arg18[%c0_20, %c0_21] : memref<20x128xf32, #tpu.memory_space<vmem>>, vector<2x128xf32>
    tpu.vector_store %arg18[%c0_20, %c0_21], %37 {strides = array<i32>} : memref<20x128xf32, #tpu.memory_space<vmem>>, vector<2x128xf32>,
    %39 = vector.extract_strided_slice %36 {offsets = [0, 256], sizes = [2, 128], strides = [1, 1]} : vector<2x1280xf32> to vector<2x128xf32>
    %c2 = arith.constant 2 : index
    %c0_22 = arith.constant 0 : index
    %40 = vector.load %arg18[%c2, %c0_22] : memref<20x128xf32, #tpu.memory_space<vmem>>, vector<2x128xf32>
    tpu.vector_store %arg18[%c2, %c0_22], %39 {strides = array<i32>} : memref<20x128xf32, #tpu.memory_space<vmem>>, vector<2x128xf32>,
    %41 = vector.extract_strided_slice %36 {offsets = [0, 512], sizes = [2, 128], strides = [1, 1]} : vector<2x1280xf32> to vector<2x128xf32>
    %c4 = arith.constant 4 : index
    %c0_23 = arith.constant 0 : index
    %42 = vector.load %arg18[%c4, %c0_23] : memref<20x128xf32, #tpu.memory_space<vmem>>, vector<2x128xf32>
    tpu.vector_store %arg18[%c4, %c0_23], %41 {strides = array<i32>} : memref<20x128xf32, #tpu.memory_space<vmem>>, vector<2x128xf32>,
    %43 = vector.extract_strided_slice %36 {offsets = [0, 768], sizes = [2, 128], strides = [1, 1]} : vector<2x1280xf32> to vector<2x128xf32>
    %c6 = arith.constant 6 : index
    %c0_24 = arith.constant 0 : index
    %44 = vector.load %arg18[%c6, %c0_24] : memref<20x128xf32, #tpu.memory_space<vmem>>, vector<2x128xf32>
    tpu.vector_store %arg18[%c6, %c0_24], %43 {strides = array<i32>} : memref<20x128xf32, #tpu.memory_space<vmem>>, vector<2x128xf32>,
    %45 = vector.extract_strided_slice %36 {offsets = [0, 1024], sizes = [2, 128], strides = [1, 1]} : vector<2x1280xf32> to vector<2x128xf32>
    %c8 = arith.constant 8 : index
    %c0_25 = arith.constant 0 : index
    %46 = vector.load %arg18[%c8, %c0_25] : memref<20x128xf32, #tpu.memory_space<vmem>>, vector<2x128xf32>
    tpu.vector_store %arg18[%c8, %c0_25], %45 {strides = array<i32>} : memref<20x128xf32, #tpu.memory_space<vmem>>, vector<2x128xf32>,
    %47 = vector.extract_strided_slice %36 {offsets = [0, 128], sizes = [2, 128], strides = [1, 1]} : vector<2x1280xf32> to vector<2x128xf32>
    %c10 = arith.constant 10 : index
    %c0_26 = arith.constant 0 : index
    %48 = vector.load %arg18[%c10, %c0_26] : memref<20x128xf32, #tpu.memory_space<vmem>>, vector<2x128xf32>
    tpu.vector_store %arg18[%c10, %c0_26], %47 {strides = array<i32>} : memref<20x128xf32, #tpu.memory_space<vmem>>, vector<2x128xf32>,
    %49 = vector.extract_strided_slice %36 {offsets = [0, 384], sizes = [2, 128], strides = [1, 1]} : vector<2x1280xf32> to vector<2x128xf32>
    %c12 = arith.constant 12 : index
    %c0_27 = arith.constant 0 : index
    %50 = vector.load %arg18[%c12, %c0_27] : memref<20x128xf32, #tpu.memory_space<vmem>>, vector<2x128xf32>
    tpu.vector_store %arg18[%c12, %c0_27], %49 {strides = array<i32>} : memref<20x128xf32, #tpu.memory_space<vmem>>, vector<2x128xf32>,
    %51 = vector.extract_strided_slice %36 {offsets = [0, 640], sizes = [2, 128], strides = [1, 1]} : vector<2x1280xf32> to vector<2x128xf32>
    %c14 = arith.constant 14 : index
    %c0_28 = arith.constant 0 : index
    %52 = vector.load %arg18[%c14, %c0_28] : memref<20x128xf32, #tpu.memory_space<vmem>>, vector<2x128xf32>
    tpu.vector_store %arg18[%c14, %c0_28], %51 {strides = array<i32>} : memref<20x128xf32, #tpu.memory_space<vmem>>, vector<2x128xf32>,
    %53 = vector.extract_strided_slice %36 {offsets = [0, 896], sizes = [2, 128], strides = [1, 1]} : vector<2x1280xf32> to vector<2x128xf32>
    %c16 = arith.constant 16 : index
    %c0_29 = arith.constant 0 : index
    %54 = vector.load %arg18[%c16, %c0_29] : memref<20x128xf32, #tpu.memory_space<vmem>>, vector<2x128xf32>
    tpu.vector_store %arg18[%c16, %c0_29], %53 {strides = array<i32>} : memref<20x128xf32, #tpu.memory_space<vmem>>, vector<2x128xf32>,
    %55 = vector.extract_strided_slice %36 {offsets = [0, 1152], sizes = [2, 128], strides = [1, 1]} : vector<2x1280xf32> to vector<2x128xf32>
    %c18 = arith.constant 18 : index
    %c0_30 = arith.constant 0 : index
    %56 = vector.load %arg18[%c18, %c0_30] : memref<20x128xf32, #tpu.memory_space<vmem>>, vector<2x128xf32>
    tpu.vector_store %arg18[%c18, %c0_30], %55 {strides = array<i32>} : memref<20x128xf32, #tpu.memory_space<vmem>>, vector<2x128xf32>,
    %c0_31 = arith.constant 0 : index
    %c0_32 = arith.constant 0 : index
    %57 = vector.load %arg18[%c0_31, %c0_32] : memref<20x128xf32, #tpu.memory_space<vmem>>, vector<20x128xf32>
    %cst_33 = arith.constant dense<0.000000e+00> : vector<128xf32>
    %58 = vector.multi_reduction <add>, %57, %cst_33 [0] : vector<20x128xf32> to vector<128xf32>
    %59 = vector.shape_cast %58 : vector<128xf32> to vector<1x128xf32>
    %60 = arith.mulf %57, %57 : vector<20x128xf32>
    %cst_34 = arith.constant dense<0.000000e+00> : vector<128xf32>
    %61 = vector.multi_reduction <add>, %60, %cst_34 [0] : vector<20x128xf32> to vector<128xf32>
    %62 = vector.shape_cast %61 : vector<128xf32> to vector<1x128xf32>
    %cst_35 = arith.constant 2.000000e+01 : f32
    %63 = vector.broadcast %cst_35 : f32 to vector<1x128xf32>
    %64 = arith.divf %59, %63 : vector<1x128xf32>
    %cst_36 = arith.constant 2.000000e+01 : f32
    %65 = vector.broadcast %cst_36 : f32 to vector<1x128xf32>
    %66 = arith.divf %62, %65 : vector<1x128xf32>
    %67 = arith.mulf %64, %64 : vector<1x128xf32>
    %68 = arith.subf %66, %67 : vector<1x128xf32>
    %cst_37 = arith.constant 0.000000e+00 : f32
    %69 = vector.broadcast %cst_37 : f32 to vector<1x128xf32>
    %70 = arith.maximumf %68, %69 : vector<1x128xf32>
    %c0_38 = arith.constant 0 : index
    %c0_39 = arith.constant 0 : index
    %71 = vector.load %arg8[%c0_38, %c0_39] : memref<1x128xf32, #tpu.memory_space<vmem>>, vector<1x128xf32>
    %cst_40 = arith.constant 9.99999974E-6 : f32
    %72 = vector.broadcast %cst_40 : f32 to vector<1x128xf32>
    %73 = arith.addf %70, %72 : vector<1x128xf32>
    %74 = math.rsqrt %73 : vector<1x128xf32>
    %75 = arith.mulf %71, %74 : vector<1x128xf32>
    %c0_41 = arith.constant 0 : index
    %c0_42 = arith.constant 0 : index
    %76 = vector.load %arg9[%c0_41, %c0_42] : memref<1x128xf32, #tpu.memory_space<vmem>>, vector<1x128xf32>
    %77 = arith.mulf %64, %75 : vector<1x128xf32>
    %78 = arith.subf %76, %77 : vector<1x128xf32>
    %79 = vector.broadcast %75 : vector<1x128xf32> to vector<20x128xf32>
    %80 = arith.mulf %57, %79 : vector<20x128xf32>
    %81 = vector.broadcast %78 : vector<1x128xf32> to vector<20x128xf32>
    %82 = arith.addf %80, %81 : vector<20x128xf32>
    %cst_43 = arith.constant 0.000000e+00 : f32
    %83 = vector.broadcast %cst_43 : f32 to vector<20x128xf32>
    %84 = arith.maximumf %82, %83 : vector<20x128xf32>
    %85 = arith.truncf %84 : vector<20x128xf32> to vector<20x128xbf16>
    %c0_44 = arith.constant 0 : index
    %c0_45 = arith.constant 0 : index
    %86 = vector.load %arg10[%c0_44, %c0_45] : memref<128x1024xbf16, #tpu.memory_space<vmem>>, vector<128x1024xbf16>
    %cst_46 = arith.constant dense<0.000000e+00> : vector<20x1024xf32>
    %87 = tpu.matmul %85, %86, %cst_46 {dimension_numbers = #tpu.dot_dimension_numbers<[1], [0], [0], [1], [0, 0, 1, 1], [], []>} : vector<20x128xbf16>, vector<128x1024xbf16>, vector<20x1024xf32> -> vector<20x1024xf32>
    %c0_47 = arith.constant 0 : index
    %c0_48 = arith.constant 0 : index
    %88 = vector.load %arg11[%c0_47, %c0_48] : memref<1x1024xf32, #tpu.memory_space<vmem>>, vector<1x1024xf32>
    %89 = vector.broadcast %88 : vector<1x1024xf32> to vector<20x1024xf32>
    %90 = arith.addf %87, %89 : vector<20x1024xf32>
    %91 = vector.extract_strided_slice %90 {offsets = [0, 0], sizes = [1, 256], strides = [1, 1]} : vector<20x1024xf32> to vector<1x256xf32>
    %92 = vector.extract_strided_slice %90 {offsets = [10, 0], sizes = [1, 256], strides = [1, 1]} : vector<20x1024xf32> to vector<1x256xf32>
    %93 = tpu.concatenate %91, %92 in 1 : vector<1x256xf32>, vector<1x256xf32> -> vector<1x512xf32>
    %94 = vector.extract_strided_slice %90 {offsets = [0, 256], sizes = [1, 256], strides = [1, 1]} : vector<20x1024xf32> to vector<1x256xf32>
    %95 = vector.extract_strided_slice %90 {offsets = [10, 256], sizes = [1, 256], strides = [1, 1]} : vector<20x1024xf32> to vector<1x256xf32>
    %96 = tpu.concatenate %94, %95 in 1 : vector<1x256xf32>, vector<1x256xf32> -> vector<1x512xf32>
    %97 = vector.extract_strided_slice %90 {offsets = [0, 512], sizes = [1, 256], strides = [1, 1]} : vector<20x1024xf32> to vector<1x256xf32>
    %98 = vector.extract_strided_slice %90 {offsets = [10, 512], sizes = [1, 256], strides = [1, 1]} : vector<20x1024xf32> to vector<1x256xf32>
    %99 = tpu.concatenate %97, %98 in 1 : vector<1x256xf32>, vector<1x256xf32> -> vector<1x512xf32>
    %100 = vector.extract_strided_slice %90 {offsets = [0, 768], sizes = [1, 256], strides = [1, 1]} : vector<20x1024xf32> to vector<1x256xf32>
    %101 = vector.extract_strided_slice %90 {offsets = [10, 768], sizes = [1, 256], strides = [1, 1]} : vector<20x1024xf32> to vector<1x256xf32>
    %102 = tpu.concatenate %100, %101 in 1 : vector<1x256xf32>, vector<1x256xf32> -> vector<1x512xf32>
    %103 = tpu.concatenate %93, %96, %99, %102 in 0 : vector<1x512xf32>, vector<1x512xf32>, vector<1x512xf32>, vector<1x512xf32> -> vector<4x512xf32>
    %c0_49 = arith.constant 0 : index
    %c0_50 = arith.constant 0 : index
    %104 = vector.load %arg19[%c0_49, %c0_50] : memref<48x512xf32, #tpu.memory_space<vmem>>, vector<4x512xf32>
    tpu.vector_store %arg19[%c0_49, %c0_50], %103 {strides = array<i32>} : memref<48x512xf32, #tpu.memory_space<vmem>>, vector<4x512xf32>,
    %105 = vector.extract_strided_slice %90 {offsets = [2, 0], sizes = [1, 256], strides = [1, 1]} : vector<20x1024xf32> to vector<1x256xf32>
    %106 = vector.extract_strided_slice %90 {offsets = [12, 0], sizes = [1, 256], strides = [1, 1]} : vector<20x1024xf32> to vector<1x256xf32>
    %107 = tpu.concatenate %105, %106 in 1 : vector<1x256xf32>, vector<1x256xf32> -> vector<1x512xf32>
    %108 = vector.extract_strided_slice %90 {offsets = [2, 256], sizes = [1, 256], strides = [1, 1]} : vector<20x1024xf32> to vector<1x256xf32>
    %109 = vector.extract_strided_slice %90 {offsets = [12, 256], sizes = [1, 256], strides = [1, 1]} : vector<20x1024xf32> to vector<1x256xf32>
    %110 = tpu.concatenate %108, %109 in 1 : vector<1x256xf32>, vector<1x256xf32> -> vector<1x512xf32>
    %111 = vector.extract_strided_slice %90 {offsets = [2, 512], sizes = [1, 256], strides = [1, 1]} : vector<20x1024xf32> to vector<1x256xf32>
    %112 = vector.extract_strided_slice %90 {offsets = [12, 512], sizes = [1, 256], strides = [1, 1]} : vector<20x1024xf32> to vector<1x256xf32>
    %113 = tpu.concatenate %111, %112 in 1 : vector<1x256xf32>, vector<1x256xf32> -> vector<1x512xf32>
    %114 = vector.extract_strided_slice %90 {offsets = [2, 768], sizes = [1, 256], strides = [1, 1]} : vector<20x1024xf32> to vector<1x256xf32>
    %115 = vector.extract_strided_slice %90 {offsets = [12, 768], sizes = [1, 256], strides = [1, 1]} : vector<20x1024xf32> to vector<1x256xf32>
    %116 = tpu.concatenate %114, %115 in 1 : vector<1x256xf32>, vector<1x256xf32> -> vector<1x512xf32>
    %117 = tpu.concatenate %107, %110, %113, %116 in 0 : vector<1x512xf32>, vector<1x512xf32>, vector<1x512xf32>, vector<1x512xf32> -> vector<4x512xf32>
    %c4_51 = arith.constant 4 : index
    %c0_52 = arith.constant 0 : index
    %118 = vector.load %arg19[%c4_51, %c0_52] : memref<48x512xf32, #tpu.memory_space<vmem>>, vector<4x512xf32>
    tpu.vector_store %arg19[%c4_51, %c0_52], %117 {strides = array<i32>} : memref<48x512xf32, #tpu.memory_space<vmem>>, vector<4x512xf32>,
    %119 = vector.extract_strided_slice %90 {offsets = [4, 0], sizes = [1, 256], strides = [1, 1]} : vector<20x1024xf32> to vector<1x256xf32>
    %120 = vector.extract_strided_slice %90 {offsets = [14, 0], sizes = [1, 256], strides = [1, 1]} : vector<20x1024xf32> to vector<1x256xf32>
    %121 = tpu.concatenate %119, %120 in 1 : vector<1x256xf32>, vector<1x256xf32> -> vector<1x512xf32>
    %122 = vector.extract_strided_slice %90 {offsets = [4, 256], sizes = [1, 256], strides = [1, 1]} : vector<20x1024xf32> to vector<1x256xf32>
    %123 = vector.extract_strided_slice %90 {offsets = [14, 256], sizes = [1, 256], strides = [1, 1]} : vector<20x1024xf32> to vector<1x256xf32>
    %124 = tpu.concatenate %122, %123 in 1 : vector<1x256xf32>, vector<1x256xf32> -> vector<1x512xf32>
    %125 = vector.extract_strided_slice %90 {offsets = [4, 512], sizes = [1, 256], strides = [1, 1]} : vector<20x1024xf32> to vector<1x256xf32>
    %126 = vector.extract_strided_slice %90 {offsets = [14, 512], sizes = [1, 256], strides = [1, 1]} : vector<20x1024xf32> to vector<1x256xf32>
    %127 = tpu.concatenate %125, %126 in 1 : vector<1x256xf32>, vector<1x256xf32> -> vector<1x512xf32>
    %128 = vector.extract_strided_slice %90 {offsets = [4, 768], sizes = [1, 256], strides = [1, 1]} : vector<20x1024xf32> to vector<1x256xf32>
    %129 = vector.extract_strided_slice %90 {offsets = [14, 768], sizes = [1, 256], strides = [1, 1]} : vector<20x1024xf32> to vector<1x256xf32>
    %130 = tpu.concatenate %128, %129 in 1 : vector<1x256xf32>, vector<1x256xf32> -> vector<1x512xf32>
    %131 = tpu.concatenate %121, %124, %127, %130 in 0 : vector<1x512xf32>, vector<1x512xf32>, vector<1x512xf32>, vector<1x512xf32> -> vector<4x512xf32>
    %c8_53 = arith.constant 8 : index
    %c0_54 = arith.constant 0 : index
    %132 = vector.load %arg19[%c8_53, %c0_54] : memref<48x512xf32, #tpu.memory_space<vmem>>, vector<4x512xf32>
    tpu.vector_store %arg19[%c8_53, %c0_54], %131 {strides = array<i32>} : memref<48x512xf32, #tpu.memory_space<vmem>>, vector<4x512xf32>,
    %133 = vector.extract_strided_slice %90 {offsets = [6, 0], sizes = [1, 256], strides = [1, 1]} : vector<20x1024xf32> to vector<1x256xf32>
    %134 = vector.extract_strided_slice %90 {offsets = [16, 0], sizes = [1, 256], strides = [1, 1]} : vector<20x1024xf32> to vector<1x256xf32>
    %135 = tpu.concatenate %133, %134 in 1 : vector<1x256xf32>, vector<1x256xf32> -> vector<1x512xf32>
    %136 = vector.extract_strided_slice %90 {offsets = [6, 256], sizes = [1, 256], strides = [1, 1]} : vector<20x1024xf32> to vector<1x256xf32>
    %137 = vector.extract_strided_slice %90 {offsets = [16, 256], sizes = [1, 256], strides = [1, 1]} : vector<20x1024xf32> to vector<1x256xf32>
    %138 = tpu.concatenate %136, %137 in 1 : vector<1x256xf32>, vector<1x256xf32> -> vector<1x512xf32>
    %139 = vector.extract_strided_slice %90 {offsets = [6, 512], sizes = [1, 256], strides = [1, 1]} : vector<20x1024xf32> to vector<1x256xf32>
    %140 = vector.extract_strided_slice %90 {offsets = [16, 512], sizes = [1, 256], strides = [1, 1]} : vector<20x1024xf32> to vector<1x256xf32>
    %141 = tpu.concatenate %139, %140 in 1 : vector<1x256xf32>, vector<1x256xf32> -> vector<1x512xf32>
    %142 = vector.extract_strided_slice %90 {offsets = [6, 768], sizes = [1, 256], strides = [1, 1]} : vector<20x1024xf32> to vector<1x256xf32>
    %143 = vector.extract_strided_slice %90 {offsets = [16, 768], sizes = [1, 256], strides = [1, 1]} : vector<20x1024xf32> to vector<1x256xf32>
    %144 = tpu.concatenate %142, %143 in 1 : vector<1x256xf32>, vector<1x256xf32> -> vector<1x512xf32>
    %145 = tpu.concatenate %135, %138, %141, %144 in 0 : vector<1x512xf32>, vector<1x512xf32>, vector<1x512xf32>, vector<1x512xf32> -> vector<4x512xf32>
    %c12_55 = arith.constant 12 : index
    %c0_56 = arith.constant 0 : index
    %146 = vector.load %arg19[%c12_55, %c0_56] : memref<48x512xf32, #tpu.memory_space<vmem>>, vector<4x512xf32>
    tpu.vector_store %arg19[%c12_55, %c0_56], %145 {strides = array<i32>} : memref<48x512xf32, #tpu.memory_space<vmem>>, vector<4x512xf32>,
    %147 = vector.extract_strided_slice %90 {offsets = [8, 0], sizes = [1, 256], strides = [1, 1]} : vector<20x1024xf32> to vector<1x256xf32>
    %148 = vector.extract_strided_slice %90 {offsets = [18, 0], sizes = [1, 256], strides = [1, 1]} : vector<20x1024xf32> to vector<1x256xf32>
    %149 = tpu.concatenate %147, %148 in 1 : vector<1x256xf32>, vector<1x256xf32> -> vector<1x512xf32>
    %150 = vector.extract_strided_slice %90 {offsets = [8, 256], sizes = [1, 256], strides = [1, 1]} : vector<20x1024xf32> to vector<1x256xf32>
    %151 = vector.extract_strided_slice %90 {offsets = [18, 256], sizes = [1, 256], strides = [1, 1]} : vector<20x1024xf32> to vector<1x256xf32>
    %152 = tpu.concatenate %150, %151 in 1 : vector<1x256xf32>, vector<1x256xf32> -> vector<1x512xf32>
    %153 = vector.extract_strided_slice %90 {offsets = [8, 512], sizes = [1, 256], strides = [1, 1]} : vector<20x1024xf32> to vector<1x256xf32>
    %154 = vector.extract_strided_slice %90 {offsets = [18, 512], sizes = [1, 256], strides = [1, 1]} : vector<20x1024xf32> to vector<1x256xf32>
    %155 = tpu.concatenate %153, %154 in 1 : vector<1x256xf32>, vector<1x256xf32> -> vector<1x512xf32>
    %156 = vector.extract_strided_slice %90 {offsets = [8, 768], sizes = [1, 256], strides = [1, 1]} : vector<20x1024xf32> to vector<1x256xf32>
    %157 = vector.extract_strided_slice %90 {offsets = [18, 768], sizes = [1, 256], strides = [1, 1]} : vector<20x1024xf32> to vector<1x256xf32>
    %158 = tpu.concatenate %156, %157 in 1 : vector<1x256xf32>, vector<1x256xf32> -> vector<1x512xf32>
    %159 = tpu.concatenate %149, %152, %155, %158 in 0 : vector<1x512xf32>, vector<1x512xf32>, vector<1x512xf32>, vector<1x512xf32> -> vector<4x512xf32>
    %c16_57 = arith.constant 16 : index
    %c0_58 = arith.constant 0 : index
    %160 = vector.load %arg19[%c16_57, %c0_58] : memref<48x512xf32, #tpu.memory_space<vmem>>, vector<4x512xf32>
    tpu.vector_store %arg19[%c16_57, %c0_58], %159 {strides = array<i32>} : memref<48x512xf32, #tpu.memory_space<vmem>>, vector<4x512xf32>,
    %c0_59 = arith.constant 0 : index
    %c0_60 = arith.constant 0 : index
    %161 = vector.load %arg12[%c0_59, %c0_60] : memref<1x512xf32, #tpu.memory_space<vmem>>, vector<1x512xf32>
    %c20 = arith.constant 20 : index
    %c0_61 = arith.constant 0 : index
    %162 = vector.load %arg19[%c20, %c0_61] : memref<48x512xf32, #tpu.memory_space<vmem>>, vector<1x512xf32>
    tpu.vector_store %arg19[%c20, %c0_61], %161 {strides = array<i32>} : memref<48x512xf32, #tpu.memory_space<vmem>>, vector<1x512xf32>,
    %cst_62 = arith.constant 0.000000e+00 : f32
    %163 = vector.broadcast %cst_62 : f32 to vector<3x512xf32>
    %c21 = arith.constant 21 : index
    %c0_63 = arith.constant 0 : index
    %164 = vector.load %arg19[%c21, %c0_63] : memref<48x512xf32, #tpu.memory_space<vmem>>, vector<3x512xf32>
    tpu.vector_store %arg19[%c21, %c0_63], %163 {strides = array<i32>} : memref<48x512xf32, #tpu.memory_space<vmem>>, vector<3x512xf32>,
    %165 = vector.extract_strided_slice %90 {offsets = [1, 0], sizes = [1, 256], strides = [1, 1]} : vector<20x1024xf32> to vector<1x256xf32>
    %166 = vector.extract_strided_slice %90 {offsets = [11, 0], sizes = [1, 256], strides = [1, 1]} : vector<20x1024xf32> to vector<1x256xf32>
    %167 = tpu.concatenate %165, %166 in 1 : vector<1x256xf32>, vector<1x256xf32> -> vector<1x512xf32>
    %168 = vector.extract_strided_slice %90 {offsets = [1, 256], sizes = [1, 256], strides = [1, 1]} : vector<20x1024xf32> to vector<1x256xf32>
    %169 = vector.extract_strided_slice %90 {offsets = [11, 256], sizes = [1, 256], strides = [1, 1]} : vector<20x1024xf32> to vector<1x256xf32>
    %170 = tpu.concatenate %168, %169 in 1 : vector<1x256xf32>, vector<1x256xf32> -> vector<1x512xf32>
    %171 = vector.extract_strided_slice %90 {offsets = [1, 512], sizes = [1, 256], strides = [1, 1]} : vector<20x1024xf32> to vector<1x256xf32>
    %172 = vector.extract_strided_slice %90 {offsets = [11, 512], sizes = [1, 256], strides = [1, 1]} : vector<20x1024xf32> to vector<1x256xf32>
    %173 = tpu.concatenate %171, %172 in 1 : vector<1x256xf32>, vector<1x256xf32> -> vector<1x512xf32>
    %174 = vector.extract_strided_slice %90 {offsets = [1, 768], sizes = [1, 256], strides = [1, 1]} : vector<20x1024xf32> to vector<1x256xf32>
    %175 = vector.extract_strided_slice %90 {offsets = [11, 768], sizes = [1, 256], strides = [1, 1]} : vector<20x1024xf32> to vector<1x256xf32>
    %176 = tpu.concatenate %174, %175 in 1 : vector<1x256xf32>, vector<1x256xf32> -> vector<1x512xf32>
    %177 = tpu.concatenate %167, %170, %173, %176 in 0 : vector<1x512xf32>, vector<1x512xf32>, vector<1x512xf32>, vector<1x512xf32> -> vector<4x512xf32>
    %c24 = arith.constant 24 : index
    %c0_64 = arith.constant 0 : index
    %178 = vector.load %arg19[%c24, %c0_64] : memref<48x512xf32, #tpu.memory_space<vmem>>, vector<4x512xf32>
    tpu.vector_store %arg19[%c24, %c0_64], %177 {strides = array<i32>} : memref<48x512xf32, #tpu.memory_space<vmem>>, vector<4x512xf32>,
    %179 = vector.extract_strided_slice %90 {offsets = [3, 0], sizes = [1, 256], strides = [1, 1]} : vector<20x1024xf32> to vector<1x256xf32>
    %180 = vector.extract_strided_slice %90 {offsets = [13, 0], sizes = [1, 256], strides = [1, 1]} : vector<20x1024xf32> to vector<1x256xf32>
    %181 = tpu.concatenate %179, %180 in 1 : vector<1x256xf32>, vector<1x256xf32> -> vector<1x512xf32>
    %182 = vector.extract_strided_slice %90 {offsets = [3, 256], sizes = [1, 256], strides = [1, 1]} : vector<20x1024xf32> to vector<1x256xf32>
    %183 = vector.extract_strided_slice %90 {offsets = [13, 256], sizes = [1, 256], strides = [1, 1]} : vector<20x1024xf32> to vector<1x256xf32>
    %184 = tpu.concatenate %182, %183 in 1 : vector<1x256xf32>, vector<1x256xf32> -> vector<1x512xf32>
    %185 = vector.extract_strided_slice %90 {offsets = [3, 512], sizes = [1, 256], strides = [1, 1]} : vector<20x1024xf32> to vector<1x256xf32>
    %186 = vector.extract_strided_slice %90 {offsets = [13, 512], sizes = [1, 256], strides = [1, 1]} : vector<20x1024xf32> to vector<1x256xf32>
    %187 = tpu.concatenate %185, %186 in 1 : vector<1x256xf32>, vector<1x256xf32> -> vector<1x512xf32>
    %188 = vector.extract_strided_slice %90 {offsets = [3, 768], sizes = [1, 256], strides = [1, 1]} : vector<20x1024xf32> to vector<1x256xf32>
    %189 = vector.extract_strided_slice %90 {offsets = [13, 768], sizes = [1, 256], strides = [1, 1]} : vector<20x1024xf32> to vector<1x256xf32>
    %190 = tpu.concatenate %188, %189 in 1 : vector<1x256xf32>, vector<1x256xf32> -> vector<1x512xf32>
    %191 = tpu.concatenate %181, %184, %187, %190 in 0 : vector<1x512xf32>, vector<1x512xf32>, vector<1x512xf32>, vector<1x512xf32> -> vector<4x512xf32>
    %c28 = arith.constant 28 : index
    %c0_65 = arith.constant 0 : index
    %192 = vector.load %arg19[%c28, %c0_65] : memref<48x512xf32, #tpu.memory_space<vmem>>, vector<4x512xf32>
    tpu.vector_store %arg19[%c28, %c0_65], %191 {strides = array<i32>} : memref<48x512xf32, #tpu.memory_space<vmem>>, vector<4x512xf32>,
    %193 = vector.extract_strided_slice %90 {offsets = [5, 0], sizes = [1, 256], strides = [1, 1]} : vector<20x1024xf32> to vector<1x256xf32>
    %194 = vector.extract_strided_slice %90 {offsets = [15, 0], sizes = [1, 256], strides = [1, 1]} : vector<20x1024xf32> to vector<1x256xf32>
    %195 = tpu.concatenate %193, %194 in 1 : vector<1x256xf32>, vector<1x256xf32> -> vector<1x512xf32>
    %196 = vector.extract_strided_slice %90 {offsets = [5, 256], sizes = [1, 256], strides = [1, 1]} : vector<20x1024xf32> to vector<1x256xf32>
    %197 = vector.extract_strided_slice %90 {offsets = [15, 256], sizes = [1, 256], strides = [1, 1]} : vector<20x1024xf32> to vector<1x256xf32>
    %198 = tpu.concatenate %196, %197 in 1 : vector<1x256xf32>, vector<1x256xf32> -> vector<1x512xf32>
    %199 = vector.extract_strided_slice %90 {offsets = [5, 512], sizes = [1, 256], strides = [1, 1]} : vector<20x1024xf32> to vector<1x256xf32>
    %200 = vector.extract_strided_slice %90 {offsets = [15, 512], sizes = [1, 256], strides = [1, 1]} : vector<20x1024xf32> to vector<1x256xf32>
    %201 = tpu.concatenate %199, %200 in 1 : vector<1x256xf32>, vector<1x256xf32> -> vector<1x512xf32>
    %202 = vector.extract_strided_slice %90 {offsets = [5, 768], sizes = [1, 256], strides = [1, 1]} : vector<20x1024xf32> to vector<1x256xf32>
    %203 = vector.extract_strided_slice %90 {offsets = [15, 768], sizes = [1, 256], strides = [1, 1]} : vector<20x1024xf32> to vector<1x256xf32>
    %204 = tpu.concatenate %202, %203 in 1 : vector<1x256xf32>, vector<1x256xf32> -> vector<1x512xf32>
    %205 = tpu.concatenate %195, %198, %201, %204 in 0 : vector<1x512xf32>, vector<1x512xf32>, vector<1x512xf32>, vector<1x512xf32> -> vector<4x512xf32>
    %c32 = arith.constant 32 : index
    %c0_66 = arith.constant 0 : index
    %206 = vector.load %arg19[%c32, %c0_66] : memref<48x512xf32, #tpu.memory_space<vmem>>, vector<4x512xf32>
    tpu.vector_store %arg19[%c32, %c0_66], %205 {strides = array<i32>} : memref<48x512xf32, #tpu.memory_space<vmem>>, vector<4x512xf32>,
    %207 = vector.extract_strided_slice %90 {offsets = [7, 0], sizes = [1, 256], strides = [1, 1]} : vector<20x1024xf32> to vector<1x256xf32>
    %208 = vector.extract_strided_slice %90 {offsets = [17, 0], sizes = [1, 256], strides = [1, 1]} : vector<20x1024xf32> to vector<1x256xf32>
    %209 = tpu.concatenate %207, %208 in 1 : vector<1x256xf32>, vector<1x256xf32> -> vector<1x512xf32>
    %210 = vector.extract_strided_slice %90 {offsets = [7, 256], sizes = [1, 256], strides = [1, 1]} : vector<20x1024xf32> to vector<1x256xf32>
    %211 = vector.extract_strided_slice %90 {offsets = [17, 256], sizes = [1, 256], strides = [1, 1]} : vector<20x1024xf32> to vector<1x256xf32>
    %212 = tpu.concatenate %210, %211 in 1 : vector<1x256xf32>, vector<1x256xf32> -> vector<1x512xf32>
    %213 = vector.extract_strided_slice %90 {offsets = [7, 512], sizes = [1, 256], strides = [1, 1]} : vector<20x1024xf32> to vector<1x256xf32>
    %214 = vector.extract_strided_slice %90 {offsets = [17, 512], sizes = [1, 256], strides = [1, 1]} : vector<20x1024xf32> to vector<1x256xf32>
    %215 = tpu.concatenate %213, %214 in 1 : vector<1x256xf32>, vector<1x256xf32> -> vector<1x512xf32>
    %216 = vector.extract_strided_slice %90 {offsets = [7, 768], sizes = [1, 256], strides = [1, 1]} : vector<20x1024xf32> to vector<1x256xf32>
    %217 = vector.extract_strided_slice %90 {offsets = [17, 768], sizes = [1, 256], strides = [1, 1]} : vector<20x1024xf32> to vector<1x256xf32>
    %218 = tpu.concatenate %216, %217 in 1 : vector<1x256xf32>, vector<1x256xf32> -> vector<1x512xf32>
    %219 = tpu.concatenate %209, %212, %215, %218 in 0 : vector<1x512xf32>, vector<1x512xf32>, vector<1x512xf32>, vector<1x512xf32> -> vector<4x512xf32>
    %c36 = arith.constant 36 : index
    %c0_67 = arith.constant 0 : index
    %220 = vector.load %arg19[%c36, %c0_67] : memref<48x512xf32, #tpu.memory_space<vmem>>, vector<4x512xf32>
    tpu.vector_store %arg19[%c36, %c0_67], %219 {strides = array<i32>} : memref<48x512xf32, #tpu.memory_space<vmem>>, vector<4x512xf32>,
    %221 = vector.extract_strided_slice %90 {offsets = [9, 0], sizes = [1, 256], strides = [1, 1]} : vector<20x1024xf32> to vector<1x256xf32>
    %222 = vector.extract_strided_slice %90 {offsets = [19, 0], sizes = [1, 256], strides = [1, 1]} : vector<20x1024xf32> to vector<1x256xf32>
    %223 = tpu.concatenate %221, %222 in 1 : vector<1x256xf32>, vector<1x256xf32> -> vector<1x512xf32>
    %224 = vector.extract_strided_slice %90 {offsets = [9, 256], sizes = [1, 256], strides = [1, 1]} : vector<20x1024xf32> to vector<1x256xf32>
    %225 = vector.extract_strided_slice %90 {offsets = [19, 256], sizes = [1, 256], strides = [1, 1]} : vector<20x1024xf32> to vector<1x256xf32>
    %226 = tpu.concatenate %224, %225 in 1 : vector<1x256xf32>, vector<1x256xf32> -> vector<1x512xf32>
    %227 = vector.extract_strided_slice %90 {offsets = [9, 512], sizes = [1, 256], strides = [1, 1]} : vector<20x1024xf32> to vector<1x256xf32>
    %228 = vector.extract_strided_slice %90 {offsets = [19, 512], sizes = [1, 256], strides = [1, 1]} : vector<20x1024xf32> to vector<1x256xf32>
    %229 = tpu.concatenate %227, %228 in 1 : vector<1x256xf32>, vector<1x256xf32> -> vector<1x512xf32>
    %230 = vector.extract_strided_slice %90 {offsets = [9, 768], sizes = [1, 256], strides = [1, 1]} : vector<20x1024xf32> to vector<1x256xf32>
    %231 = vector.extract_strided_slice %90 {offsets = [19, 768], sizes = [1, 256], strides = [1, 1]} : vector<20x1024xf32> to vector<1x256xf32>
    %232 = tpu.concatenate %230, %231 in 1 : vector<1x256xf32>, vector<1x256xf32> -> vector<1x512xf32>
    %233 = tpu.concatenate %223, %226, %229, %232 in 0 : vector<1x512xf32>, vector<1x512xf32>, vector<1x512xf32>, vector<1x512xf32> -> vector<4x512xf32>
    %c40 = arith.constant 40 : index
    %c0_68 = arith.constant 0 : index
    %234 = vector.load %arg19[%c40, %c0_68] : memref<48x512xf32, #tpu.memory_space<vmem>>, vector<4x512xf32>
    tpu.vector_store %arg19[%c40, %c0_68], %233 {strides = array<i32>} : memref<48x512xf32, #tpu.memory_space<vmem>>, vector<4x512xf32>,
    %c0_69 = arith.constant 0 : index
    %c0_70 = arith.constant 0 : index
    %235 = vector.load %arg12[%c0_69, %c0_70] : memref<1x512xf32, #tpu.memory_space<vmem>>, vector<1x512xf32>
    %c44 = arith.constant 44 : index
    %c0_71 = arith.constant 0 : index
    %236 = vector.load %arg19[%c44, %c0_71] : memref<48x512xf32, #tpu.memory_space<vmem>>, vector<1x512xf32>
    tpu.vector_store %arg19[%c44, %c0_71], %235 {strides = array<i32>} : memref<48x512xf32, #tpu.memory_space<vmem>>, vector<1x512xf32>,
    %cst_72 = arith.constant 0.000000e+00 : f32
    %237 = vector.broadcast %cst_72 : f32 to vector<3x512xf32>
    %c45 = arith.constant 45 : index
    %c0_73 = arith.constant 0 : index
    %238 = vector.load %arg19[%c45, %c0_73] : memref<48x512xf32, #tpu.memory_space<vmem>>, vector<3x512xf32>
    tpu.vector_store %arg19[%c45, %c0_73], %237 {strides = array<i32>} : memref<48x512xf32, #tpu.memory_space<vmem>>, vector<3x512xf32>,
    %c0_74 = arith.constant 0 : index
    %c0_75 = arith.constant 0 : index
    %239 = vector.load %arg19[%c0_74, %c0_75] : memref<48x512xf32, #tpu.memory_space<vmem>>, vector<48x512xf32>
    %cst_76 = arith.constant dense<0.000000e+00> : vector<512xf32>
    %240 = vector.multi_reduction <add>, %239, %cst_76 [0] : vector<48x512xf32> to vector<512xf32>
    %241 = vector.shape_cast %240 : vector<512xf32> to vector<1x512xf32>
    %242 = arith.mulf %239, %239 : vector<48x512xf32>
    %cst_77 = arith.constant dense<0.000000e+00> : vector<512xf32>
    %243 = vector.multi_reduction <add>, %242, %cst_77 [0] : vector<48x512xf32> to vector<512xf32>
    %244 = vector.shape_cast %243 : vector<512xf32> to vector<1x512xf32>
    %245 = vector.extract_strided_slice %241 {offsets = [0, 0], sizes = [1, 256], strides = [1, 1]} : vector<1x512xf32> to vector<1x256xf32>
    %246 = vector.extract_strided_slice %241 {offsets = [0, 256], sizes = [1, 256], strides = [1, 1]} : vector<1x512xf32> to vector<1x256xf32>
    %247 = arith.addf %245, %246 : vector<1x256xf32>
    %248 = vector.extract_strided_slice %247 {offsets = [0, 0], sizes = [1, 128], strides = [1, 1]} : vector<1x256xf32> to vector<1x128xf32>
    %249 = vector.extract_strided_slice %247 {offsets = [0, 128], sizes = [1, 128], strides = [1, 1]} : vector<1x256xf32> to vector<1x128xf32>
    %250 = arith.addf %248, %249 : vector<1x128xf32>
    %251 = vector.extract_strided_slice %250 {offsets = [0, 0], sizes = [1, 64], strides = [1, 1]} : vector<1x128xf32> to vector<1x64xf32>
    %252 = vector.extract_strided_slice %250 {offsets = [0, 64], sizes = [1, 64], strides = [1, 1]} : vector<1x128xf32> to vector<1x64xf32>
    %253 = arith.addf %251, %252 : vector<1x64xf32>
    %cst_78 = arith.constant 3.360000e+02 : f32
    %254 = vector.broadcast %cst_78 : f32 to vector<1x64xf32>
    %255 = arith.divf %253, %254 : vector<1x64xf32>
    %256 = vector.extract_strided_slice %244 {offsets = [0, 0], sizes = [1, 256], strides = [1, 1]} : vector<1x512xf32> to vector<1x256xf32>
    %257 = vector.extract_strided_slice %244 {offsets = [0, 256], sizes = [1, 256], strides = [1, 1]} : vector<1x512xf32> to vector<1x256xf32>
    %258 = arith.addf %256, %257 : vector<1x256xf32>
    %259 = vector.extract_strided_slice %258 {offsets = [0, 0], sizes = [1, 128], strides = [1, 1]} : vector<1x256xf32> to vector<1x128xf32>
    %260 = vector.extract_strided_slice %258 {offsets = [0, 128], sizes = [1, 128], strides = [1, 1]} : vector<1x256xf32> to vector<1x128xf32>
    %261 = arith.addf %259, %260 : vector<1x128xf32>
    %262 = vector.extract_strided_slice %261 {offsets = [0, 0], sizes = [1, 64], strides = [1, 1]} : vector<1x128xf32> to vector<1x64xf32>
    %263 = vector.extract_strided_slice %261 {offsets = [0, 64], sizes = [1, 64], strides = [1, 1]} : vector<1x128xf32> to vector<1x64xf32>
    %264 = arith.addf %262, %263 : vector<1x64xf32>
    %cst_79 = arith.constant 3.360000e+02 : f32
    %265 = vector.broadcast %cst_79 : f32 to vector<1x64xf32>
    %266 = arith.divf %264, %265 : vector<1x64xf32>
    %267 = arith.mulf %255, %255 : vector<1x64xf32>
    %268 = arith.subf %266, %267 : vector<1x64xf32>
    %cst_80 = arith.constant 0.000000e+00 : f32
    %269 = vector.broadcast %cst_80 : f32 to vector<1x64xf32>
    %270 = arith.maximumf %268, %269 : vector<1x64xf32>
    %c0_81 = arith.constant 0 : index
    %c0_82 = arith.constant 0 : index
    %271 = vector.load %arg13[%c0_81, %c0_82] : memref<1x64xf32, #tpu.memory_space<vmem>>, vector<1x64xf32>
    %cst_83 = arith.constant 9.99999974E-6 : f32
    %272 = vector.broadcast %cst_83 : f32 to vector<1x64xf32>
    %273 = arith.addf %270, %272 : vector<1x64xf32>
    %274 = math.rsqrt %273 : vector<1x64xf32>
    %275 = arith.mulf %271, %274 : vector<1x64xf32>
    %c0_84 = arith.constant 0 : index
    %c0_85 = arith.constant 0 : index
    %276 = vector.load %arg14[%c0_84, %c0_85] : memref<1x64xf32, #tpu.memory_space<vmem>>, vector<1x64xf32>
    %277 = arith.mulf %255, %275 : vector<1x64xf32>
    %278 = arith.subf %276, %277 : vector<1x64xf32>
    %279 = tpu.concatenate %275, %275, %275, %275, %275, %275, %275, %275 in 1 : vector<1x64xf32>, vector<1x64xf32>, vector<1x64xf32>, vector<1x64xf32>, vector<1x64xf32>, vector<1x64xf32>, vector<1x64xf32>, vector<1x64xf32> -> vector<1x512xf32>
    %280 = tpu.concatenate %278, %278, %278, %278, %278, %278, %278, %278 in 1 : vector<1x64xf32>, vector<1x64xf32>, vector<1x64xf32>, vector<1x64xf32>, vector<1x64xf32>, vector<1x64xf32>, vector<1x64xf32>, vector<1x64xf32> -> vector<1x512xf32>
    %281 = vector.broadcast %279 : vector<1x512xf32> to vector<48x512xf32>
    %282 = arith.mulf %239, %281 : vector<48x512xf32>
    %283 = vector.broadcast %280 : vector<1x512xf32> to vector<48x512xf32>
    %284 = arith.addf %282, %283 : vector<48x512xf32>
    %cst_86 = arith.constant 0.000000e+00 : f32
    %285 = vector.broadcast %cst_86 : f32 to vector<48x512xf32>
    %286 = arith.maximumf %284, %285 : vector<48x512xf32>
    %287 = arith.truncf %286 : vector<48x512xf32> to vector<48x512xbf16>
    %c0_87 = arith.constant 0 : index
    %c0_88 = arith.constant 0 : index
    %288 = vector.load %arg15[%c0_87, %c0_88] : memref<512x512xbf16, #tpu.memory_space<vmem>>, vector<512x512xbf16>
    %cst_89 = arith.constant dense<0.000000e+00> : vector<48x512xf32>
    %289 = tpu.matmul %287, %288, %cst_89 {dimension_numbers = #tpu.dot_dimension_numbers<[1], [0], [0], [1], [0, 0, 1, 1], [], []>} : vector<48x512xbf16>, vector<512x512xbf16>, vector<48x512xf32> -> vector<48x512xf32>
    %c0_90 = arith.constant 0 : index
    %c0_91 = arith.constant 0 : index
    %290 = vector.load %arg16[%c0_90, %c0_91] : memref<1x512xf32, #tpu.memory_space<vmem>>, vector<1x512xf32>
    %291 = vector.broadcast %290 : vector<1x512xf32> to vector<48x512xf32>
    %292 = arith.addf %289, %291 : vector<48x512xf32>
    %cst_92 = arith.constant 0.000000e+00 : f32
    %293 = vector.broadcast %cst_92 : f32 to vector<48x512xf32>
    %294 = arith.maximumf %292, %293 : vector<48x512xf32>
    %295 = vector.extract_strided_slice %294 {offsets = [0, 0], sizes = [21, 128], strides = [1, 1]} : vector<48x512xf32> to vector<21x128xf32>
    %c0_93 = arith.constant 0 : index
    %c0_94 = arith.constant 0 : index
    %c0_95 = arith.constant 0 : index
    %c0_96 = arith.constant 0 : index
    %296 = vector.load %arg17[%c0_93, %c0_94, %c0_95, %c0_96] : memref<2x4x21x128xf32, #tpu.memory_space<vmem>>, vector<1x1x21x128xf32>
    %297 = vector.shape_cast %296 : vector<1x1x21x128xf32> to vector<21x128xf32>
    %298 = vector.shape_cast %295 : vector<21x128xf32> to vector<1x1x21x128xf32>
    tpu.vector_store %arg17[%c0_93, %c0_94, %c0_95, %c0_96], %298 {strides = array<i32>} : memref<2x4x21x128xf32, #tpu.memory_space<vmem>>, vector<1x1x21x128xf32>,
    %299 = vector.extract_strided_slice %294 {offsets = [0, 128], sizes = [21, 128], strides = [1, 1]} : vector<48x512xf32> to vector<21x128xf32>
    %c0_97 = arith.constant 0 : index
    %c1 = arith.constant 1 : index
    %c0_98 = arith.constant 0 : index
    %c0_99 = arith.constant 0 : index
    %300 = vector.load %arg17[%c0_97, %c1, %c0_98, %c0_99] : memref<2x4x21x128xf32, #tpu.memory_space<vmem>>, vector<1x1x21x128xf32>
    %301 = vector.shape_cast %300 : vector<1x1x21x128xf32> to vector<21x128xf32>
    %302 = vector.shape_cast %299 : vector<21x128xf32> to vector<1x1x21x128xf32>
    tpu.vector_store %arg17[%c0_97, %c1, %c0_98, %c0_99], %302 {strides = array<i32>} : memref<2x4x21x128xf32, #tpu.memory_space<vmem>>, vector<1x1x21x128xf32>,
    %303 = vector.extract_strided_slice %294 {offsets = [0, 256], sizes = [21, 128], strides = [1, 1]} : vector<48x512xf32> to vector<21x128xf32>
    %c0_100 = arith.constant 0 : index
    %c2_101 = arith.constant 2 : index
    %c0_102 = arith.constant 0 : index
    %c0_103 = arith.constant 0 : index
    %304 = vector.load %arg17[%c0_100, %c2_101, %c0_102, %c0_103] : memref<2x4x21x128xf32, #tpu.memory_space<vmem>>, vector<1x1x21x128xf32>
    %305 = vector.shape_cast %304 : vector<1x1x21x128xf32> to vector<21x128xf32>
    %306 = vector.shape_cast %303 : vector<21x128xf32> to vector<1x1x21x128xf32>
    tpu.vector_store %arg17[%c0_100, %c2_101, %c0_102, %c0_103], %306 {strides = array<i32>} : memref<2x4x21x128xf32, #tpu.memory_space<vmem>>, vector<1x1x21x128xf32>,
    %307 = vector.extract_strided_slice %294 {offsets = [0, 384], sizes = [21, 128], strides = [1, 1]} : vector<48x512xf32> to vector<21x128xf32>
    %c0_104 = arith.constant 0 : index
    %c3 = arith.constant 3 : index
    %c0_105 = arith.constant 0 : index
    %c0_106 = arith.constant 0 : index
    %308 = vector.load %arg17[%c0_104, %c3, %c0_105, %c0_106] : memref<2x4x21x128xf32, #tpu.memory_space<vmem>>, vector<1x1x21x128xf32>
    %309 = vector.shape_cast %308 : vector<1x1x21x128xf32> to vector<21x128xf32>
    %310 = vector.shape_cast %307 : vector<21x128xf32> to vector<1x1x21x128xf32>
    tpu.vector_store %arg17[%c0_104, %c3, %c0_105, %c0_106], %310 {strides = array<i32>} : memref<2x4x21x128xf32, #tpu.memory_space<vmem>>, vector<1x1x21x128xf32>,
    %311 = vector.extract_strided_slice %294 {offsets = [24, 0], sizes = [21, 128], strides = [1, 1]} : vector<48x512xf32> to vector<21x128xf32>
    %c1_107 = arith.constant 1 : index
    %c0_108 = arith.constant 0 : index
    %c0_109 = arith.constant 0 : index
    %c0_110 = arith.constant 0 : index
    %312 = vector.load %arg17[%c1_107, %c0_108, %c0_109, %c0_110] : memref<2x4x21x128xf32, #tpu.memory_space<vmem>>, vector<1x1x21x128xf32>
    %313 = vector.shape_cast %312 : vector<1x1x21x128xf32> to vector<21x128xf32>
    %314 = vector.shape_cast %311 : vector<21x128xf32> to vector<1x1x21x128xf32>
    tpu.vector_store %arg17[%c1_107, %c0_108, %c0_109, %c0_110], %314 {strides = array<i32>} : memref<2x4x21x128xf32, #tpu.memory_space<vmem>>, vector<1x1x21x128xf32>,
    %315 = vector.extract_strided_slice %294 {offsets = [24, 128], sizes = [21, 128], strides = [1, 1]} : vector<48x512xf32> to vector<21x128xf32>
    %c1_111 = arith.constant 1 : index
    %c1_112 = arith.constant 1 : index
    %c0_113 = arith.constant 0 : index
    %c0_114 = arith.constant 0 : index
    %316 = vector.load %arg17[%c1_111, %c1_112, %c0_113, %c0_114] : memref<2x4x21x128xf32, #tpu.memory_space<vmem>>, vector<1x1x21x128xf32>
    %317 = vector.shape_cast %316 : vector<1x1x21x128xf32> to vector<21x128xf32>
    %318 = vector.shape_cast %315 : vector<21x128xf32> to vector<1x1x21x128xf32>
    tpu.vector_store %arg17[%c1_111, %c1_112, %c0_113, %c0_114], %318 {strides = array<i32>} : memref<2x4x21x128xf32, #tpu.memory_space<vmem>>, vector<1x1x21x128xf32>,
    %319 = vector.extract_strided_slice %294 {offsets = [24, 256], sizes = [21, 128], strides = [1, 1]} : vector<48x512xf32> to vector<21x128xf32>
    %c1_115 = arith.constant 1 : index
    %c2_116 = arith.constant 2 : index
    %c0_117 = arith.constant 0 : index
    %c0_118 = arith.constant 0 : index
    %320 = vector.load %arg17[%c1_115, %c2_116, %c0_117, %c0_118] : memref<2x4x21x128xf32, #tpu.memory_space<vmem>>, vector<1x1x21x128xf32>
    %321 = vector.shape_cast %320 : vector<1x1x21x128xf32> to vector<21x128xf32>
    %322 = vector.shape_cast %319 : vector<21x128xf32> to vector<1x1x21x128xf32>
    tpu.vector_store %arg17[%c1_115, %c2_116, %c0_117, %c0_118], %322 {strides = array<i32>} : memref<2x4x21x128xf32, #tpu.memory_space<vmem>>, vector<1x1x21x128xf32>,
    %323 = vector.extract_strided_slice %294 {offsets = [24, 384], sizes = [21, 128], strides = [1, 1]} : vector<48x512xf32> to vector<21x128xf32>
    %c1_119 = arith.constant 1 : index
    %c3_120 = arith.constant 3 : index
    %c0_121 = arith.constant 0 : index
    %c0_122 = arith.constant 0 : index
    %324 = vector.load %arg17[%c1_119, %c3_120, %c0_121, %c0_122] : memref<2x4x21x128xf32, #tpu.memory_space<vmem>>, vector<1x1x21x128xf32>
    %325 = vector.shape_cast %324 : vector<1x1x21x128xf32> to vector<21x128xf32>
    %326 = vector.shape_cast %323 : vector<21x128xf32> to vector<1x1x21x128xf32>
    tpu.vector_store %arg17[%c1_119, %c3_120, %c0_121, %c0_122], %326 {strides = array<i32>} : memref<2x4x21x128xf32, #tpu.memory_space<vmem>>, vector<1x1x21x128xf32>,
    return
  }
  func.func @transform_0(%arg0: i32) -> (i32, i32) {
    %c0_i32 = arith.constant 0 : i32
    %c0_i32_0 = arith.constant 0 : i32
    %c0_i32_1 = arith.constant 0 : i32
    return %c0_i32, %c0_i32_0 : i32, i32
  }
  func.func @transform_1(%arg0: i32) -> (i32, i32) {
    %c0_i32 = arith.constant 0 : i32
    %c0_i32_0 = arith.constant 0 : i32
    %c0_i32_1 = arith.constant 0 : i32
    return %c0_i32, %c0_i32_0 : i32, i32
  }
  func.func @transform_2(%arg0: i32) -> (i32, i32) {
    %c0_i32 = arith.constant 0 : i32
    %c0_i32_0 = arith.constant 0 : i32
    %c0_i32_1 = arith.constant 0 : i32
    return %c0_i32, %c0_i32_0 : i32, i32
  }
  func.func @transform_3(%arg0: i32) -> (i32, i32) {
    %c0_i32 = arith.constant 0 : i32
    %c0_i32_0 = arith.constant 0 : i32
    %c0_i32_1 = arith.constant 0 : i32
    return %c0_i32, %c0_i32_0 : i32, i32
  }
  func.func @transform_4(%arg0: i32) -> (i32, i32) {
    %c0_i32 = arith.constant 0 : i32
    %c0_i32_0 = arith.constant 0 : i32
    %c0_i32_1 = arith.constant 0 : i32
    return %c0_i32, %c0_i32_0 : i32, i32
  }
  func.func @transform_5(%arg0: i32) -> (i32, i32) {
    %c0_i32 = arith.constant 0 : i32
    %c0_i32_0 = arith.constant 0 : i32
    %c0_i32_1 = arith.constant 0 : i32
    return %c0_i32, %c0_i32_0 : i32, i32
  }
  func.func @transform_6(%arg0: i32) -> (i32, i32) {
    %c0_i32 = arith.constant 0 : i32
    %c0_i32_0 = arith.constant 0 : i32
    %c0_i32_1 = arith.constant 0 : i32
    return %c0_i32, %c0_i32_0 : i32, i32
  }
  func.func @transform_7(%arg0: i32) -> (i32, i32) {
    %c0_i32 = arith.constant 0 : i32
    %c0_i32_0 = arith.constant 0 : i32
    %c0_i32_1 = arith.constant 0 : i32
    return %c0_i32, %c0_i32_0 : i32, i32
  }
  func.func @transform_8(%arg0: i32) -> (i32, i32) {
    %c0_i32 = arith.constant 0 : i32
    %c0_i32_0 = arith.constant 0 : i32
    %c0_i32_1 = arith.constant 0 : i32
    return %c0_i32, %c0_i32_0 : i32, i32
  }
  func.func @transform_9(%arg0: i32) -> (i32, i32) {
    %c0_i32 = arith.constant 0 : i32
    %c0_i32_0 = arith.constant 0 : i32
    %c0_i32_1 = arith.constant 0 : i32
    return %c0_i32, %c0_i32_0 : i32, i32
  }
  func.func @transform_10(%arg0: i32) -> (i32, i32) {
    %c0_i32 = arith.constant 0 : i32
    %c0_i32_0 = arith.constant 0 : i32
    %c0_i32_1 = arith.constant 0 : i32
    return %c0_i32, %c0_i32_0 : i32, i32
  }
  func.func @transform_11(%arg0: i32) -> (i32, i32) {
    %c0_i32 = arith.constant 0 : i32
    %c0_i32_0 = arith.constant 0 : i32
    %c0_i32_1 = arith.constant 0 : i32
    return %c0_i32, %c0_i32_0 : i32, i32
  }
  func.func @transform_12(%arg0: i32) -> (i32, i32) {
    %c0_i32 = arith.constant 0 : i32
    %c0_i32_0 = arith.constant 0 : i32
    %c0_i32_1 = arith.constant 0 : i32
    return %c0_i32, %c0_i32_0 : i32, i32
  }
  func.func @transform_13(%arg0: i32) -> (i32, i32) {
    %c0_i32 = arith.constant 0 : i32
    %c0_i32_0 = arith.constant 0 : i32
    %c0_i32_1 = arith.constant 0 : i32
    return %c0_i32, %c0_i32_0 : i32, i32
  }
  func.func @transform_14(%arg0: i32) -> (i32, i32) {
    %c0_i32 = arith.constant 0 : i32
    %c0_i32_0 = arith.constant 0 : i32
    %c0_i32_1 = arith.constant 0 : i32
    return %c0_i32, %c0_i32_0 : i32, i32
  }
  func.func @transform_15(%arg0: i32) -> (i32, i32) {
    %c0_i32 = arith.constant 0 : i32
    %c0_i32_0 = arith.constant 0 : i32
    %c0_i32_1 = arith.constant 0 : i32
    return %c0_i32, %c0_i32_0 : i32, i32
  }
  func.func @transform_16(%arg0: i32) -> (i32, i32, i32, i32) {
    %c0_i32 = arith.constant 0 : i32
    %c0_i32_0 = arith.constant 0 : i32
    %c0_i32_1 = arith.constant 0 : i32
    %c0_i32_2 = arith.constant 0 : i32
    %c0_i32_3 = arith.constant 0 : i32
    return %c0_i32, %c0_i32_0, %c0_i32_1, %c0_i32_2 : i32, i32, i32, i32
  }
}

</mosaic_0001>

<llo_original>
// kernel: decoder_forward.1
$region0: #{decoder_forward.1}
  #allocation0 [shape = 'u32[]', space=smem, size = 0x4, offset = 0x4, fixed_abs, tag = 'smem constant byte address 0x4 - core index']
  #allocation1 [shape = 'u32[144,128]{1,0:T(1,128)}', space=vmem, size = 0x12000, scoped, tag = 'internal scratch']
  #allocation2 [shape = 'f32[20,128]{1,0:T(8,128)}', space=vmem, size = 0x3000, scoped, tag = 'scratch operand']
  #allocation3 [shape = 'f32[48,512]{1,0:T(8,128)}', space=vmem, size = 0x18000, scoped, tag = 'scratch operand']
  %s0 = inlined_call_operand.vmem [shape: f32[2,16], index: 0, kind: input, shape index: {}]
  %s1 = inlined_call_operand.vmem [shape: bf16[16,256], index: 1, kind: input, shape index: {}]
  %s2 = inlined_call_operand.vmem [shape: f32[1,256], index: 2, kind: input, shape index: {}]
  %s3 = inlined_call_operand.vmem [shape: f32[1,256], index: 3, kind: input, shape index: {}]
  %s4 = inlined_call_operand.hbm [shape: f32[1,256], index: 4, kind: input, shape index: {}]
  %s5 = inlined_call_operand.hbm [shape: bf16[256,1280], index: 5, kind: input, shape index: {}]
  %s6 = inlined_call_operand.hbm [shape: f32[1,1280], index: 6, kind: input, shape index: {}]
  %s7 = inlined_call_operand.hbm [shape: f32[1,128], index: 7, kind: input, shape index: {}]
  %s8 = inlined_call_operand.hbm [shape: f32[1,128], index: 8, kind: input, shape index: {}]
  %s9 = inlined_call_operand.hbm [shape: bf16[128,1024], index: 9, kind: input, shape index: {}]
  %s10 = inlined_call_operand.hbm [shape: f32[1,1024], index: 10, kind: input, shape index: {}]
  %s11 = inlined_call_operand.vmem [shape: f32[1,512], index: 11, kind: input, shape index: {}]
  %s12 = inlined_call_operand.vmem [shape: f32[1,64], index: 12, kind: input, shape index: {}]
  %s13 = inlined_call_operand.hbm [shape: f32[1,64], index: 13, kind: input, shape index: {}]
  %s14 = inlined_call_operand.hbm [shape: bf16[512,512], index: 14, kind: input, shape index: {}]
  %s15 = inlined_call_operand.vmem [shape: f32[1,512], index: 15, kind: input, shape index: {}]
  %s16 = inlined_call_operand.vmem [shape: f32[2,4,21,128], index: 16, kind: output, shape index: {}]
  %s17 = sld [smem:[#allocation0]]
  $region110: #{decoder_forward.1} parent=0
    _
  %s19 = ssub.s32 1, %s17
  %s20 = scalar_select 0, %s19, %s17
  $region1: #{decoder_forward.1} parent=0
    #allocation4 [shape = 'u8[1024]{0}', space=vmem, size = 0x400, scoped, tag = 'input window, operand 4, single buffered']
    #allocation5 [shape = 's32[1]{0}', space=sflag, size = 0x4, scoped, tag = 'scoped memory for decoder_forward.1']
    #allocation6 [shape = 'u8[655360]{0}', space=vmem, size = 0xa0000, scoped, tag = 'input window, operand 5, single buffered']
    #allocation7 [shape = 's32[1]{0}', space=sflag, size = 0x4, scoped, tag = 'scoped memory for decoder_forward.1']
    #allocation8 [shape = 'u8[5120]{0}', space=vmem, size = 0x1400, scoped, tag = 'input window, operand 6, single buffered']
    #allocation9 [shape = 'u8[512]{0}', space=vmem, size = 0x400, scoped, tag = 'input window, operand 7, single buffered']
    #allocation10 [shape = 's32[1]{0}', space=sflag, size = 0x4, scoped, tag = 'scoped memory for decoder_forward.1']
    #allocation11 [shape = 'u8[512]{0}', space=vmem, size = 0x400, scoped, tag = 'input window, operand 8, single buffered']
    #allocation12 [shape = 'u8[262144]{0}', space=vmem, size = 0x40000, scoped, tag = 'input window, operand 9, single buffered']
    #allocation13 [shape = 's32[1]{0}', space=sflag, size = 0x4, scoped, tag = 'scoped memory for decoder_forward.1']
    #allocation14 [shape = 'u8[4096]{0}', space=vmem, size = 0x1000, scoped, tag = 'input window, operand 10, single buffered']
    #allocation15 [shape = 'u8[512]{0}', space=vmem, size = 0x400, scoped, tag = 'input window, operand 13, single buffered']
    #allocation16 [shape = 's32[1]{0}', space=sflag, size = 0x4, scoped, tag = 'scoped memory for decoder_forward.1']
    #allocation17 [shape = 'u8[524288]{0}', space=vmem, size = 0x80000, scoped, tag = 'input window, operand 14, single buffered']
    %21 = vsyncpa [#allocation5], 0
    %22 = vsyncpa [#allocation7], 0
    %23 = vsyncpa [#allocation10], 0
    %24 = vsyncpa [#allocation13], 0
    %25 = vsyncpa [#allocation16], 0
    // Predicated region
    $region2: #{decoder_forward.1} parent=1 // pred_check
      _
    $region3: #{decoder_forward.1} parent=1 // pred_check_branch
      %27 = sbr.rel (0) target = $region5
    $region4: #{decoder_forward.1} parent=1 // pred_region
      _
    $region5: #{decoder_forward.1} parent=1 // pred_fallthru
      _
    // Predicated region
    $region6: #{decoder_forward.1} parent=1 // pred_check
      _
    $region7: #{decoder_forward.1} parent=1 // pred_check_branch
      %29 = sbr.rel (0) target = $region9
    $region8: #{decoder_forward.1} parent=1 // pred_region
      _
    $region9: #{decoder_forward.1} parent=1 // pred_fallthru
      _
    // Predicated region
    $region10: #{decoder_forward.1} parent=1 // pred_check
      _
    $region11: #{decoder_forward.1} parent=1 // pred_check_branch
      %31 = sbr.rel (0) target = $region13
    $region12: #{decoder_forward.1} parent=1 // pred_region
      _
    $region13: #{decoder_forward.1} parent=1 // pred_fallthru
      _
    // Predicated region
    $region14: #{decoder_forward.1} parent=1 // pred_check
      _
    $region15: #{decoder_forward.1} parent=1 // pred_check_branch
      %33 = sbr.rel (0) target = $region17
    $region16: #{decoder_forward.1} parent=1 // pred_region
      _
    $region17: #{decoder_forward.1} parent=1 // pred_fallthru
      _
    // Predicated region
    $region18: #{decoder_forward.1} parent=1 // pred_check
      _
    $region19: #{decoder_forward.1} parent=1 // pred_check_branch
      %35 = sbr.rel (0) target = $region21
    $region20: #{decoder_forward.1} parent=1 // pred_region
      %s37 = ssub.s32 32, 32
      %38 = vsyncadd [#allocation5], %s37
      %s40 = sshll.u32 [#allocation4], 4
      %s41 = int_to_ptr.vmem [resolvable:$true] %s40
      %43 = dma.hbm_to_vmem [thread:$0]  %s4, 32, %s41, [#allocation5]
    $region21: #{decoder_forward.1} parent=1 // pred_fallthru
      _
    // Predicated region
    $region22: #{decoder_forward.1} parent=1 // pred_check
      _
    $region23: #{decoder_forward.1} parent=1 // pred_check_branch
      %45 = sbr.rel (0) target = $region25
    $region24: #{decoder_forward.1} parent=1 // pred_region
      %s47 = ssub.s32 20480, 20480
      %48 = vsyncadd [#allocation7], %s47
      %s49 = sshll.u32 [#allocation6], 4
      %s50 = int_to_ptr.vmem [resolvable:$true] %s49
      %55 = dma.hbm_to_vmem [thread:$0]  %s5, 20480, %s50, [#allocation7], 640, 640, 40
    $region25: #{decoder_forward.1} parent=1 // pred_fallthru
      _
    // Predicated region
    $region26: #{decoder_forward.1} parent=1 // pred_check
      _
    $region27: #{decoder_forward.1} parent=1 // pred_check_branch
      %57 = sbr.rel (0) target = $region29
    $region28: #{decoder_forward.1} parent=1 // pred_region
      %s59 = ssub.s32 160, 160
      %60 = vsyncadd [#allocation7], %s59
      %s62 = sshll.u32 [#allocation8], 4
      %s63 = int_to_ptr.vmem [resolvable:$true] %s62
      %65 = dma.hbm_to_vmem [thread:$0]  %s6, 160, %s63, [#allocation7]
    $region29: #{decoder_forward.1} parent=1 // pred_fallthru
      _
    // Predicated region
    $region30: #{decoder_forward.1} parent=1 // pred_check
      _
    $region31: #{decoder_forward.1} parent=1 // pred_check_branch
      %67 = sbr.rel (0) target = $region33
    $region32: #{decoder_forward.1} parent=1 // pred_region
      %s69 = ssub.s32 16, 16
      %70 = vsyncadd [#allocation10], %s69
      %s72 = sshll.u32 [#allocation9], 4
      %s73 = int_to_ptr.vmem [resolvable:$true] %s72
      %75 = dma.hbm_to_vmem [thread:$0]  %s7, 16, %s73, [#allocation10]
    $region33: #{decoder_forward.1} parent=1 // pred_fallthru
      _
    // Predicated region
    $region34: #{decoder_forward.1} parent=1 // pred_check
      _
    $region35: #{decoder_forward.1} parent=1 // pred_check_branch
      %77 = sbr.rel (0) target = $region37
    $region36: #{decoder_forward.1} parent=1 // pred_region
      %s79 = ssub.s32 16, 16
      %80 = vsyncadd [#allocation10], %s79
      %s82 = sshll.u32 [#allocation11], 4
      %s83 = int_to_ptr.vmem [resolvable:$true] %s82
      %85 = dma.hbm_to_vmem [thread:$0]  %s8, 16, %s83, [#allocation10]
    $region37: #{decoder_forward.1} parent=1 // pred_fallthru
      _
    // Predicated region
    $region38: #{decoder_forward.1} parent=1 // pred_check
      _
    $region39: #{decoder_forward.1} parent=1 // pred_check_branch
      %87 = sbr.rel (0) target = $region41
    $region40: #{decoder_forward.1} parent=1 // pred_region
      %s89 = ssub.s32 8192, 8192
      %90 = vsyncadd [#allocation13], %s89
      %s91 = sshll.u32 [#allocation12], 4
      %s92 = int_to_ptr.vmem [resolvable:$true] %s91
      %97 = dma.hbm_to_vmem [thread:$0]  %s9, 8192, %s92, [#allocation13], 512, 512, 32
    $region41: #{decoder_forward.1} parent=1 // pred_fallthru
      _
    // Predicated region
    $region42: #{decoder_forward.1} parent=1 // pred_check
      _
    $region43: #{decoder_forward.1} parent=1 // pred_check_branch
      %99 = sbr.rel (0) target = $region45
    $region44: #{decoder_forward.1} parent=1 // pred_region
      %s101 = ssub.s32 128, 128
      %102 = vsyncadd [#allocation13], %s101
      %s104 = sshll.u32 [#allocation14], 4
      %s105 = int_to_ptr.vmem [resolvable:$true] %s104
      %107 = dma.hbm_to_vmem [thread:$0]  %s10, 128, %s105, [#allocation13]
    $region45: #{decoder_forward.1} parent=1 // pred_fallthru
      _
    // Predicated region
    $region46: #{decoder_forward.1} parent=1 // pred_check
      _
    $region47: #{decoder_forward.1} parent=1 // pred_check_branch
      %109 = sbr.rel (0) target = $region49
    $region48: #{decoder_forward.1} parent=1 // pred_region
      _
    $region49: #{decoder_forward.1} parent=1 // pred_fallthru
      _
    // Predicated region
    $region50: #{decoder_forward.1} parent=1 // pred_check
      _
    $region51: #{decoder_forward.1} parent=1 // pred_check_branch
      %111 = sbr.rel (0) target = $region53
    $region52: #{decoder_forward.1} parent=1 // pred_region
      _
    $region53: #{decoder_forward.1} parent=1 // pred_fallthru
      _
    // Predicated region
    $region54: #{decoder_forward.1} parent=1 // pred_check
      _
    $region55: #{decoder_forward.1} parent=1 // pred_check_branch
      %113 = sbr.rel (0) target = $region57
    $region56: #{decoder_forward.1} parent=1 // pred_region
      %s115 = ssub.s32 16, 16
      %116 = vsyncadd [#allocation16], %s115
      %s118 = sshll.u32 [#allocation15], 4
      %s119 = int_to_ptr.vmem [resolvable:$true] %s118
      %121 = dma.hbm_to_vmem [thread:$0]  %s13, 16, %s119, [#allocation16]
    $region57: #{decoder_forward.1} parent=1 // pred_fallthru
      _
    // Predicated region
    $region58: #{decoder_forward.1} parent=1 // pred_check
      _
    $region59: #{decoder_forward.1} parent=1 // pred_check_branch
      %123 = sbr.rel (0) target = $region61
    $region60: #{decoder_forward.1} parent=1 // pred_region
      %s125 = ssub.s32 16384, 16384
      %126 = vsyncadd [#allocation16], %s125
      %s127 = sshll.u32 [#allocation17], 4
      %s128 = int_to_ptr.vmem [resolvable:$true] %s127
      %133 = dma.hbm_to_vmem [thread:$0]  %s14, 16384, %s128, [#allocation16], 256, 256, 16
    $region61: #{decoder_forward.1} parent=1 // pred_fallthru
      _
    // Predicated region
    $region62: #{decoder_forward.1} parent=1 // pred_check
      _
    $region63: #{decoder_forward.1} parent=1 // pred_check_branch
      %135 = sbr.rel (0) target = $region65
    $region64: #{decoder_forward.1} parent=1 // pred_region
      _
    $region65: #{decoder_forward.1} parent=1 // pred_fallthru
      _
    // Predicated region
    $region66: #{decoder_forward.1} parent=1 // pred_check
      _
    $region67: #{decoder_forward.1} parent=1 // pred_check_branch
      %137 = sbr.rel (0) target = $region69
    $region68: #{decoder_forward.1} parent=1 // pred_region
      %138 = dma.done [#allocation5], 32
    $region69: #{decoder_forward.1} parent=1 // pred_fallthru
      _
    // Predicated region
    $region70: #{decoder_forward.1} parent=1 // pred_check
      _
    $region71: #{decoder_forward.1} parent=1 // pred_check_branch
      %140 = sbr.rel (0) target = $region73
    $region72: #{decoder_forward.1} parent=1 // pred_region
      %141 = dma.done [#allocation7], 20480
    $region73: #{decoder_forward.1} parent=1 // pred_fallthru
      _
    // Predicated region
    $region74: #{decoder_forward.1} parent=1 // pred_check
      _
    $region75: #{decoder_forward.1} parent=1 // pred_check_branch
      %143 = sbr.rel (0) target = $region77
    $region76: #{decoder_forward.1} parent=1 // pred_region
      %144 = dma.done [#allocation7], 160
    $region77: #{decoder_forward.1} parent=1 // pred_fallthru
      _
    // Predicated region
    $region78: #{decoder_forward.1} parent=1 // pred_check
      _
    $region79: #{decoder_forward.1} parent=1 // pred_check_branch
      %146 = sbr.rel (0) target = $region81
    $region80: #{decoder_forward.1} parent=1 // pred_region
      %147 = dma.done [#allocation10], 16
    $region81: #{decoder_forward.1} parent=1 // pred_fallthru
      _
    // Predicated region
    $region82: #{decoder_forward.1} parent=1 // pred_check
      _
    $region83: #{decoder_forward.1} parent=1 // pred_check_branch
      %149 = sbr.rel (0) target = $region85
    $region84: #{decoder_forward.1} parent=1 // pred_region
      %150 = dma.done [#allocation10], 16
    $region85: #{decoder_forward.1} parent=1 // pred_fallthru
      _
    // Predicated region
    $region86: #{decoder_forward.1} parent=1 // pred_check
      _
    $region87: #{decoder_forward.1} parent=1 // pred_check_branch
      %152 = sbr.rel (0) target = $region89
    $region88: #{decoder_forward.1} parent=1 // pred_region
      %153 = dma.done [#allocation13], 8192
    $region89: #{decoder_forward.1} parent=1 // pred_fallthru
      _
    // Predicated region
    $region90: #{decoder_forward.1} parent=1 // pred_check
      _
    $region91: #{decoder_forward.1} parent=1 // pred_check_branch
      %155 = sbr.rel (0) target = $region93
    $region92: #{decoder_forward.1} parent=1 // pred_region
      %156 = dma.done [#allocation13], 128
    $region93: #{decoder_forward.1} parent=1 // pred_fallthru
      _
    // Predicated region
    $region94: #{decoder_forward.1} parent=1 // pred_check
      _
    $region95: #{decoder_forward.1} parent=1 // pred_check_branch
      %158 = sbr.rel (0) target = $region97
    $region96: #{decoder_forward.1} parent=1 // pred_region
      %159 = dma.done [#allocation16], 16
    $region97: #{decoder_forward.1} parent=1 // pred_fallthru
      _
    // Predicated region
    $region98: #{decoder_forward.1} parent=1 // pred_check
      _
    $region99: #{decoder_forward.1} parent=1 // pred_check_branch
      %161 = sbr.rel (0) target = $region101
    $region100: #{decoder_forward.1} parent=1 // pred_region
      %162 = dma.done [#allocation16], 16384
    $region101: #{decoder_forward.1} parent=1 // pred_fallthru
      _
    %v164 = vld [vmem:[%s0] sm:$0x3]
    %v165 = vpack.c.bf16 %v164, %v164
    %v166 = vld [vmem:[%s1] sm:$0xff]
    %v167 = vld [vmem:[%s1 + $0x8] sm:$0xff]
    %v168 = vld [vmem:[%s2] sm:$0x3]
    %v170 = vlaneseq
    %v171 = vshrl.u32 %v170, 7
    %v172 = vsub.s32 0, %v171
    %v173 = vrot.slane %v168, %v172
    %v174 = vlaneseq
    %v175 = vshrl.u32 %v174, 7
    %v176 = vsub.s32 1, %v175
    %v177 = vrot.slane %v168, %v176
    %v182 = vunpack.c.l.b16 %v166
    %v183 = vunpack.c.h.b16 %v166
    %v184 = vunpack.c.l.b16 %v167
    %v185 = vunpack.c.h.b16 %v167
    %v186 = vpack.c.b16 %v184, %v182
    %v187 = vpack.c.b16 %v185, %v183
    %vm190 = vcmask 130048
    %v192 = vsel %vm190, %v165, 0
    %194 = vmatprep.subr.bf16.mxu0 %v187
    %195 = vmatpush1.bf16.msra.mxu0 %v186
    %196 = vmatprep.subr.bf16.mxu0 0
    %197 = vmatpush1.bf16.msra.mxu0 0
    %198 = vmatprep.subr.bf16.mxu0 0
    %199 = vmatpush1.bf16.msra.mxu0 0
    %200 = vmatprep.subr.bf16.mxu0 0
    %201 = vmatpush1.bf16.msra.mxu0 0
    %202 = vmatprep.subr.bf16.mxu0 0
    %203 = vmatpush1.bf16.msra.mxu0 0
    %204 = vmatprep.subr.bf16.mxu0 0
    %205 = vmatpush1.bf16.msra.mxu0 0
    %206 = vmatprep.subr.bf16.mxu0 0
    %207 = vmatpush1.bf16.msra.mxu0 0
    %208 = vmatprep.subr.bf16.mxu0 0
    %209 = vmatpush1.bf16.msra.mxu0 0
    %210 = vmatprep.subr.bf16.mxu0 0
    %211 = vmatpush1.bf16.msra.mxu0 0
    %212 = vmatprep.subr.bf16.mxu0 0
    %213 = vmatpush1.bf16.msra.mxu0 0
    %214 = vmatprep.subr.bf16.mxu0 0
    %215 = vmatpush1.bf16.msra.mxu0 0
    %216 = vmatprep.subr.bf16.mxu0 0
    %217 = vmatpush1.bf16.msra.mxu0 0
    %218 = vmatprep.subr.bf16.mxu0 0
    %219 = vmatpush1.bf16.msra.mxu0 0
    %220 = vmatprep.subr.bf16.mxu0 0
    %221 = vmatpush1.bf16.msra.mxu0 0
    %222 = vmatprep.subr.bf16.mxu0 0
    %223 = vmatpush1.bf16.msra.mxu0 0
    %224 = vmatprep.subr.bf16.mxu0 0
    %225 = vmatpush1.bf16.msra.mxu0 0
    %226 = vmatprep.mubr.bf16.mxu0 0
    %227 = vmatmul.mubr.bf16.gmra.mrb[0].mxu0 %v192
    %v228 = vpop.f32.mrb[0].mxu0
    %v229 = vadd.f32 %v173, %v228
    %v230 = vpop.f32.mrb[0].mxu0
    %v231 = vadd.f32 %v177, %v230
    %v232 = vpop.f32.mrb[0].mxu0
    %v233 = vpop.f32.mrb[0].mxu0
    %234 = vdwg.mxu0
    %v235 = vmax.f32 %v229, 0.0
    %v236 = vmax.f32 %v231, 0.0
    %vm237 = vcmask 1041408
    %v238 = vsel %vm237, %v235, 0.0
    %v239 = vrot.slane %v238, 4
    %v240 = vadd.f32 %v238, %v239
    %v241 = vrot.slane %v240, 2
    %v242 = vadd.f32 %v240, %v241
    %v243 = vrot.slane %v242, 1
    %v244 = vadd.f32 %v242, %v243
    %v245 = vsel %vm237, %v236, 0.0
    %v246 = vrot.slane %v245, 4
    %v247 = vadd.f32 %v245, %v246
    %v248 = vrot.slane %v247, 2
    %v249 = vadd.f32 %v247, %v248
    %v250 = vrot.slane %v249, 1
    %v251 = vadd.f32 %v249, %v250
    %v252 = vrcp.pop 2.0
    %v253 = vmul.f32 %v244, %v252
    %v254 = vmul.f32 %v251, %v252
    %v255 = vsub.f32 %v235, %v253
    %v256 = vsub.f32 %v236, %v254
    %v257 = vmul.f32 %v255, %v255
    %v258 = vmul.f32 %v256, %v256
    %v259 = vsel %vm237, %v257, 0.0
    %v260 = vrot.slane %v259, 4
    %v261 = vadd.f32 %v259, %v260
    %v262 = vrot.slane %v261, 2
    %v263 = vadd.f32 %v261, %v262
    %v264 = vrot.slane %v263, 1
    %v265 = vadd.f32 %v263, %v264
    %v266 = vsel %vm237, %v258, 0.0
    %v267 = vrot.slane %v266, 4
    %v268 = vadd.f32 %v266, %v267
    %v269 = vrot.slane %v268, 2
    %v270 = vadd.f32 %v268, %v269
    %v271 = vrot.slane %v270, 1
    %v272 = vadd.f32 %v270, %v271
    %v273 = vmul.f32 %v265, %v252
    %v274 = vmul.f32 %v272, %v252
    %v275 = vadd.f32 %v273, 1e-05
    %v276 = vadd.f32 %v274, 1e-05
    %v277 = vrsqrt.pop %v275
    %v278 = vrsqrt.pop %v276
    %v279 = vmul.f32 %v255, %v277
    %v280 = vmul.f32 %v256, %v278
    %v281 = vld [vmem:[%s3] sm:$0x3]
    %v283 = vlaneseq
    %v284 = vshrl.u32 %v283, 7
    %v285 = vsub.s32 0, %v284
    %v286 = vrot.slane %v281, %v285
    %v287 = vlaneseq
    %v288 = vshrl.u32 %v287, 7
    %v289 = vsub.s32 1, %v288
    %v290 = vrot.slane %v281, %v289
    %v293 = vmul.f32 %v279, %v286
    %v294 = vmul.f32 %v280, %v290
    %v295 = vld [vmem:[#allocation4] sm:$0x3]
    %v297 = vlaneseq
    %v298 = vshrl.u32 %v297, 7
    %v299 = vsub.s32 0, %v298
    %v300 = vrot.slane %v295, %v299
    %v301 = vlaneseq
    %v302 = vshrl.u32 %v301, 7
    %v303 = vsub.s32 1, %v302
    %v304 = vrot.slane %v295, %v303
    %v307 = vadd.f32 %v293, %v300
    %v308 = vadd.f32 %v294, %v304
    %v309 = vpack.c.bf16 %v307, %v307
    %v310 = vpack.c.bf16 %v308, %v308
    %v311 = vld [vmem:[#allocation6] sm:$0xff]
    %v312 = vld [vmem:[#allocation6 + $0x8] sm:$0xff]
    %v313 = vld [vmem:[#allocation6 + $0x10] sm:$0xff]
    %v314 = vld [vmem:[#allocation6 + $0x18] sm:$0xff]
    %v315 = vld [vmem:[#allocation6 + $0x20] sm:$0xff]
    %v316 = vld [vmem:[#allocation6 + $0x28] sm:$0xff]
    %v317 = vld [vmem:[#allocation6 + $0x30] sm:$0xff]
    %v318 = vld [vmem:[#allocation6 + $0x38] sm:$0xff]
    %v319 = vld [vmem:[#allocation6 + $0x40] sm:$0xff]
    %v320 = vld [vmem:[#allocation6 + $0x48] sm:$0xff]
    %v321 = vld [vmem:[#allocation6 + $0x50] sm:$0xff]
    %v322 = vld [vmem:[#allocation6 + $0x58] sm:$0xff]
    %v323 = vld [vmem:[#allocation6 + $0x60] sm:$0xff]
    %v324 = vld [vmem:[#allocation6 + $0x68] sm:$0xff]
    %v325 = vld [vmem:[#allocation6 + $0x70] sm:$0xff]
    %v326 = vld [vmem:[#allocation6 + $0x78] sm:$0xff]
    %v327 = vld [vmem:[#allocation6 + $0x80] sm:$0xff]
    %v328 = vld [vmem:[#allocation6 + $0x88] sm:$0xff]
    %v329 = vld [vmem:[#allocation6 + $0x90] sm:$0xff]
    %v330 = vld [vmem:[#allocation6 + $0x98] sm:$0xff]
    %v331 = vld [vmem:[#allocation6 + $0xa0] sm:$0xff]
    %v332 = vld [vmem:[#allocation6 + $0xa8] sm:$0xff]
    %v333 = vld [vmem:[#allocation6 + $0xb0] sm:$0xff]
    %v334 = vld [vmem:[#allocation6 + $0xb8] sm:$0xff]
    %v335 = vld [vmem:[#allocation6 + $0xc0] sm:$0xff]
    %v336 = vld [vmem:[#allocation6 + $0xc8] sm:$0xff]
    %v337 = vld [vmem:[#allocation6 + $0xd0] sm:$0xff]
    %v338 = vld [vmem:[#allocation6 + $0xd8] sm:$0xff]
    %v339 = vld [vmem:[#allocation6 + $0xe0] sm:$0xff]
    %v340 = vld [vmem:[#allocation6 + $0xe8] sm:$0xff]
    %v341 = vld [vmem:[#allocation6 + $0xf0] sm:$0xff]
    %v342 = vld [vmem:[#allocation6 + $0xf8] sm:$0xff]
    %v343 = vld [vmem:[#allocation6 + $0x100] sm:$0xff]
    %v344 = vld [vmem:[#allocation6 + $0x108] sm:$0xff]
    %v345 = vld [vmem:[#allocation6 + $0x110] sm:$0xff]
    %v346 = vld [vmem:[#allocation6 + $0x118] sm:$0xff]
    %v347 = vld [vmem:[#allocation6 + $0x120] sm:$0xff]
    %v348 = vld [vmem:[#allocation6 + $0x128] sm:$0xff]
    %v349 = vld [vmem:[#allocation6 + $0x130] sm:$0xff]
    %v350 = vld [vmem:[#allocation6 + $0x138] sm:$0xff]
    %v351 = vld [vmem:[#allocation6 + $0x140] sm:$0xff]
    %v352 = vld [vmem:[#allocation6 + $0x148] sm:$0xff]
    %v353 = vld [vmem:[#allocation6 + $0x150] sm:$0xff]
    %v354 = vld [vmem:[#allocation6 + $0x158] sm:$0xff]
    %v355 = vld [vmem:[#allocation6 + $0x160] sm:$0xff]
    %v356 = vld [vmem:[#allocation6 + $0x168] sm:$0xff]
    %v357 = vld [vmem:[#allocation6 + $0x170] sm:$0xff]
    %v358 = vld [vmem:[#allocation6 + $0x178] sm:$0xff]
    %v359 = vld [vmem:[#allocation6 + $0x180] sm:$0xff]
    %v360 = vld [vmem:[#allocation6 + $0x188] sm:$0xff]
    %v361 = vld [vmem:[#allocation6 + $0x190] sm:$0xff]
    %v362 = vld [vmem:[#allocation6 + $0x198] sm:$0xff]
    %v363 = vld [vmem:[#allocation6 + $0x1a0] sm:$0xff]
    %v364 = vld [vmem:[#allocation6 + $0x1a8] sm:$0xff]
    %v365 = vld [vmem:[#allocation6 + $0x1b0] sm:$0xff]
    %v366 = vld [vmem:[#allocation6 + $0x1b8] sm:$0xff]
    %v367 = vld [vmem:[#allocation6 + $0x1c0] sm:$0xff]
    %v368 = vld [vmem:[#allocation6 + $0x1c8] sm:$0xff]
    %v369 = vld [vmem:[#allocation6 + $0x1d0] sm:$0xff]
    %v370 = vld [vmem:[#allocation6 + $0x1d8] sm:$0xff]
    %v371 = vld [vmem:[#allocation6 + $0x1e0] sm:$0xff]
    %v372 = vld [vmem:[#allocation6 + $0x1e8] sm:$0xff]
    %v373 = vld [vmem:[#allocation6 + $0x1f0] sm:$0xff]
    %v374 = vld [vmem:[#allocation6 + $0x1f8] sm:$0xff]
    %v375 = vld [vmem:[#allocation6 + $0x200] sm:$0xff]
    %v376 = vld [vmem:[#allocation6 + $0x208] sm:$0xff]
    %v377 = vld [vmem:[#allocation6 + $0x210] sm:$0xff]
    %v378 = vld [vmem:[#allocation6 + $0x218] sm:$0xff]
    %v379 = vld [vmem:[#allocation6 + $0x220] sm:$0xff]
    %v380 = vld [vmem:[#allocation6 + $0x228] sm:$0xff]
    %v381 = vld [vmem:[#allocation6 + $0x230] sm:$0xff]
    %v382 = vld [vmem:[#allocation6 + $0x238] sm:$0xff]
    %v383 = vld [vmem:[#allocation6 + $0x240] sm:$0xff]
    %v384 = vld [vmem:[#allocation6 + $0x248] sm:$0xff]
    %v385 = vld [vmem:[#allocation6 + $0x250] sm:$0xff]
    %v386 = vld [vmem:[#allocation6 + $0x258] sm:$0xff]
    %v387 = vld [vmem:[#allocation6 + $0x260] sm:$0xff]
    %v388 = vld [vmem:[#allocation6 + $0x268] sm:$0xff]
    %v389 = vld [vmem:[#allocation6 + $0x270] sm:$0xff]
    %v390 = vld [vmem:[#allocation6 + $0x278] sm:$0xff]
    %v391 = vld [vmem:[#allocation6 + $0x280] sm:$0xff]
    %v392 = vld [vmem:[#allocation6 + $0x288] sm:$0xff]
    %v393 = vld [vmem:[#allocation6 + $0x290] sm:$0xff]
    %v394 = vld [vmem:[#allocation6 + $0x298] sm:$0xff]
    %v395 = vld [vmem:[#allocation6 + $0x2a0] sm:$0xff]
    %v396 = vld [vmem:[#allocation6 + $0x2a8] sm:$0xff]
    %v397 = vld [vmem:[#allocation6 + $0x2b0] sm:$0xff]
    %v398 = vld [vmem:[#allocation6 + $0x2b8] sm:$0xff]
    %v399 = vld [vmem:[#allocation6 + $0x2c0] sm:$0xff]
    %v400 = vld [vmem:[#allocation6 + $0x2c8] sm:$0xff]
    %v401 = vld [vmem:[#allocation6 + $0x2d0] sm:$0xff]
    %v402 = vld [vmem:[#allocation6 + $0x2d8] sm:$0xff]
    %v403 = vld [vmem:[#allocation6 + $0x2e0] sm:$0xff]
    %v404 = vld [vmem:[#allocation6 + $0x2e8] sm:$0xff]
    %v405 = vld [vmem:[#allocation6 + $0x2f0] sm:$0xff]
    %v406 = vld [vmem:[#allocation6 + $0x2f8] sm:$0xff]
    %v407 = vld [vmem:[#allocation6 + $0x300] sm:$0xff]
    %v408 = vld [vmem:[#allocation6 + $0x308] sm:$0xff]
    %v409 = vld [vmem:[#allocation6 + $0x310] sm:$0xff]
    %v410 = vld [vmem:[#allocation6 + $0x318] sm:$0xff]
    %v411 = vld [vmem:[#allocation6 + $0x320] sm:$0xff]
    %v412 = vld [vmem:[#allocation6 + $0x328] sm:$0xff]
    %v413 = vld [vmem:[#allocation6 + $0x330] sm:$0xff]
    %v414 = vld [vmem:[#allocation6 + $0x338] sm:$0xff]
    %v415 = vld [vmem:[#allocation6 + $0x340] sm:$0xff]
    %v416 = vld [vmem:[#allocation6 + $0x348] sm:$0xff]
    %v417 = vld [vmem:[#allocation6 + $0x350] sm:$0xff]
    %v418 = vld [vmem:[#allocation6 + $0x358] sm:$0xff]
    %v419 = vld [vmem:[#allocation6 + $0x360] sm:$0xff]
    %v420 = vld [vmem:[#allocation6 + $0x368] sm:$0xff]
    %v421 = vld [vmem:[#allocation6 + $0x370] sm:$0xff]
    %v422 = vld [vmem:[#allocation6 + $0x378] sm:$0xff]
    %v423 = vld [vmem:[#allocation6 + $0x380] sm:$0xff]
    %v424 = vld [vmem:[#allocation6 + $0x388] sm:$0xff]
    %v425 = vld [vmem:[#allocation6 + $0x390] sm:$0xff]
    %v426 = vld [vmem:[#allocation6 + $0x398] sm:$0xff]
    %v427 = vld [vmem:[#allocation6 + $0x3a0] sm:$0xff]
    %v428 = vld [vmem:[#allocation6 + $0x3a8] sm:$0xff]
    %v429 = vld [vmem:[#allocation6 + $0x3b0] sm:$0xff]
    %v430 = vld [vmem:[#allocation6 + $0x3b8] sm:$0xff]
    %v431 = vld [vmem:[#allocation6 + $0x3c0] sm:$0xff]
    %v432 = vld [vmem:[#allocation6 + $0x3c8] sm:$0xff]
    %v433 = vld [vmem:[#allocation6 + $0x3d0] sm:$0xff]
    %v434 = vld [vmem:[#allocation6 + $0x3d8] sm:$0xff]
    %v435 = vld [vmem:[#allocation6 + $0x3e0] sm:$0xff]
    %v436 = vld [vmem:[#allocation6 + $0x3e8] sm:$0xff]
    %v437 = vld [vmem:[#allocation6 + $0x3f0] sm:$0xff]
    %v438 = vld [vmem:[#allocation6 + $0x3f8] sm:$0xff]
    %v439 = vld [vmem:[#allocation6 + $0x400] sm:$0xff]
    %v440 = vld [vmem:[#allocation6 + $0x408] sm:$0xff]
    %v441 = vld [vmem:[#allocation6 + $0x410] sm:$0xff]
    %v442 = vld [vmem:[#allocation6 + $0x418] sm:$0xff]
    %v443 = vld [vmem:[#allocation6 + $0x420] sm:$0xff]
    %v444 = vld [vmem:[#allocation6 + $0x428] sm:$0xff]
    %v445 = vld [vmem:[#allocation6 + $0x430] sm:$0xff]
    %v446 = vld [vmem:[#allocation6 + $0x438] sm:$0xff]
    %v447 = vld [vmem:[#allocation6 + $0x440] sm:$0xff]
    %v448 = vld [vmem:[#allocation6 + $0x448] sm:$0xff]
    %v449 = vld [vmem:[#allocation6 + $0x450] sm:$0xff]
    %v450 = vld [vmem:[#allocation6 + $0x458] sm:$0xff]
    %v451 = vld [vmem:[#allocation6 + $0x460] sm:$0xff]
    %v452 = vld [vmem:[#allocation6 + $0x468] sm:$0xff]
    %v453 = vld [vmem:[#allocation6 + $0x470] sm:$0xff]
    %v454 = vld [vmem:[#allocation6 + $0x478] sm:$0xff]
    %v455 = vld [vmem:[#allocation6 + $0x480] sm:$0xff]
    %v456 = vld [vmem:[#allocation6 + $0x488] sm:$0xff]
    %v457 = vld [vmem:[#allocation6 + $0x490] sm:$0xff]
    %v458 = vld [vmem:[#allocation6 + $0x498] sm:$0xff]
    %v459 = vld [vmem:[#allocation6 + $0x4a0] sm:$0xff]
    %v460 = vld [vmem:[#allocation6 + $0x4a8] sm:$0xff]
    %v461 = vld [vmem:[#allocation6 + $0x4b0] sm:$0xff]
    %v462 = vld [vmem:[#allocation6 + $0x4b8] sm:$0xff]
    %v463 = vld [vmem:[#allocation6 + $0x4c0] sm:$0xff]
    %v464 = vld [vmem:[#allocation6 + $0x4c8] sm:$0xff]
    %v465 = vld [vmem:[#allocation6 + $0x4d0] sm:$0xff]
    %v466 = vld [vmem:[#allocation6 + $0x4d8] sm:$0xff]
    %v467 = vld [vmem:[#allocation6 + $0x4e0] sm:$0xff]
    %v468 = vld [vmem:[#allocation6 + $0x4e8] sm:$0xff]
    %v469 = vld [vmem:[#allocation6 + $0x4f0] sm:$0xff]
    %v470 = vld [vmem:[#allocation6 + $0x4f8] sm:$0xff]
    %v471 = vld [vmem:[#allocation8] sm:$0xff]
    %v472 = vld [vmem:[#allocation8 + $0x8] sm:$0x3]
    %v475 = vlaneseq
    %v476 = vshrl.u32 %v475, 7
    %v477 = vsub.s32 0, %v476
    %v478 = vrot.slane %v471, %v477
    %v479 = vlaneseq
    %v480 = vshrl.u32 %v479, 7
    %v481 = vsub.s32 1, %v480
    %v482 = vrot.slane %v471, %v481
    %v483 = vlaneseq
    %v484 = vshrl.u32 %v483, 7
    %v485 = vsub.s32 2, %v484
    %v486 = vrot.slane %v471, %v485
    %v487 = vlaneseq
    %v488 = vshrl.u32 %v487, 7
    %v489 = vsub.s32 3, %v488
    %v490 = vrot.slane %v471, %v489
    %v491 = vlaneseq
    %v492 = vshrl.u32 %v491, 7
    %v493 = vsub.s32 4, %v492
    %v494 = vrot.slane %v471, %v493
    %v495 = vlaneseq
    %v496 = vshrl.u32 %v495, 7
    %v497 = vsub.s32 5, %v496
    %v498 = vrot.slane %v471, %v497
    %v499 = vlaneseq
    %v500 = vshrl.u32 %v499, 7
    %v501 = vsub.s32 6, %v500
    %v502 = vrot.slane %v471, %v501
    %v503 = vlaneseq
    %v504 = vshrl.u32 %v503, 7
    %v505 = vsub.s32 7, %v504
    %v506 = vrot.slane %v471, %v505
    %v507 = vlaneseq
    %v508 = vshrl.u32 %v507, 7
    %v509 = vsub.s32 0, %v508
    %v510 = vrot.slane %v472, %v509
    %v511 = vlaneseq
    %v512 = vshrl.u32 %v511, 7
    %v513 = vsub.s32 1, %v512
    %v514 = vrot.slane %v472, %v513
    %v685 = vunpack.c.l.b16 %v311
    %v686 = vunpack.c.h.b16 %v311
    %v687 = vunpack.c.l.b16 %v312
    %v688 = vunpack.c.h.b16 %v312
    %v689 = vunpack.c.l.b16 %v313
    %v690 = vunpack.c.h.b16 %v313
    %v691 = vunpack.c.l.b16 %v314
    %v692 = vunpack.c.h.b16 %v314
    %v693 = vunpack.c.l.b16 %v315
    %v694 = vunpack.c.h.b16 %v315
    %v695 = vunpack.c.l.b16 %v316
    %v696 = vunpack.c.h.b16 %v316
    %v697 = vunpack.c.l.b16 %v317
    %v698 = vunpack.c.h.b16 %v317
    %v699 = vunpack.c.l.b16 %v318
    %v700 = vunpack.c.h.b16 %v318
    %v701 = vunpack.c.l.b16 %v319
    %v702 = vunpack.c.h.b16 %v319
    %v703 = vunpack.c.l.b16 %v320
    %v704 = vunpack.c.h.b16 %v320
    %v705 = vunpack.c.l.b16 %v321
    %v706 = vunpack.c.h.b16 %v321
    %v707 = vunpack.c.l.b16 %v322
    %v708 = vunpack.c.h.b16 %v322
    %v709 = vunpack.c.l.b16 %v323
    %v710 = vunpack.c.h.b16 %v323
    %v711 = vunpack.c.l.b16 %v324
    %v712 = vunpack.c.h.b16 %v324
    %v713 = vunpack.c.l.b16 %v325
    %v714 = vunpack.c.h.b16 %v325
    %v715 = vunpack.c.l.b16 %v326
    %v716 = vunpack.c.h.b16 %v326
    %v717 = vunpack.c.l.b16 %v327
    %v718 = vunpack.c.h.b16 %v327
    %v719 = vunpack.c.l.b16 %v328
    %v720 = vunpack.c.h.b16 %v328
    %v721 = vunpack.c.l.b16 %v329
    %v722 = vunpack.c.h.b16 %v329
    %v723 = vunpack.c.l.b16 %v330
    %v724 = vunpack.c.h.b16 %v330
    %v725 = vunpack.c.l.b16 %v331
    %v726 = vunpack.c.h.b16 %v331
    %v727 = vunpack.c.l.b16 %v332
    %v728 = vunpack.c.h.b16 %v332
    %v729 = vunpack.c.l.b16 %v333
    %v730 = vunpack.c.h.b16 %v333
    %v731 = vunpack.c.l.b16 %v334
    %v732 = vunpack.c.h.b16 %v334
    %v733 = vunpack.c.l.b16 %v335
    %v734 = vunpack.c.h.b16 %v335
    %v735 = vunpack.c.l.b16 %v336
    %v736 = vunpack.c.h.b16 %v336
    %v737 = vunpack.c.l.b16 %v337
    %v738 = vunpack.c.h.b16 %v337
    %v739 = vunpack.c.l.b16 %v338
    %v740 = vunpack.c.h.b16 %v338
    %v741 = vunpack.c.l.b16 %v339
    %v742 = vunpack.c.h.b16 %v339
    %v743 = vunpack.c.l.b16 %v340
    %v744 = vunpack.c.h.b16 %v340
    %v745 = vunpack.c.l.b16 %v341
    %v746 = vunpack.c.h.b16 %v341
    %v747 = vunpack.c.l.b16 %v342
    %v748 = vunpack.c.h.b16 %v342
    %v749 = vunpack.c.l.b16 %v343
    %v750 = vunpack.c.h.b16 %v343
    %v751 = vunpack.c.l.b16 %v344
    %v752 = vunpack.c.h.b16 %v344
    %v753 = vunpack.c.l.b16 %v345
    %v754 = vunpack.c.h.b16 %v345
    %v755 = vunpack.c.l.b16 %v346
    %v756 = vunpack.c.h.b16 %v346
    %v757 = vunpack.c.l.b16 %v347
    %v758 = vunpack.c.h.b16 %v347
    %v759 = vunpack.c.l.b16 %v348
    %v760 = vunpack.c.h.b16 %v348
    %v761 = vunpack.c.l.b16 %v349
    %v762 = vunpack.c.h.b16 %v349
    %v763 = vunpack.c.l.b16 %v350
    %v764 = vunpack.c.h.b16 %v350
    %v765 = vunpack.c.l.b16 %v351
    %v766 = vunpack.c.h.b16 %v351
    %v767 = vunpack.c.l.b16 %v352
    %v768 = vunpack.c.h.b16 %v352
    %v769 = vunpack.c.l.b16 %v353
    %v770 = vunpack.c.h.b16 %v353
    %v771 = vunpack.c.l.b16 %v354
    %v772 = vunpack.c.h.b16 %v354
    %v773 = vunpack.c.l.b16 %v355
    %v774 = vunpack.c.h.b16 %v355
    %v775 = vunpack.c.l.b16 %v356
    %v776 = vunpack.c.h.b16 %v356
    %v777 = vunpack.c.l.b16 %v357
    %v778 = vunpack.c.h.b16 %v357
    %v779 = vunpack.c.l.b16 %v358
    %v780 = vunpack.c.h.b16 %v358
    %v781 = vunpack.c.l.b16 %v359
    %v782 = vunpack.c.h.b16 %v359
    %v783 = vunpack.c.l.b16 %v360
    %v784 = vunpack.c.h.b16 %v360
    %v785 = vunpack.c.l.b16 %v361
    %v786 = vunpack.c.h.b16 %v361
    %v787 = vunpack.c.l.b16 %v362
    %v788 = vunpack.c.h.b16 %v362
    %v789 = vunpack.c.l.b16 %v363
    %v790 = vunpack.c.h.b16 %v363
    %v791 = vunpack.c.l.b16 %v364
    %v792 = vunpack.c.h.b16 %v364
    %v793 = vunpack.c.l.b16 %v365
    %v794 = vunpack.c.h.b16 %v365
    %v795 = vunpack.c.l.b16 %v366
    %v796 = vunpack.c.h.b16 %v366
    %v797 = vunpack.c.l.b16 %v367
    %v798 = vunpack.c.h.b16 %v367
    %v799 = vunpack.c.l.b16 %v368
    %v800 = vunpack.c.h.b16 %v368
    %v801 = vunpack.c.l.b16 %v369
    %v802 = vunpack.c.h.b16 %v369
    %v803 = vunpack.c.l.b16 %v370
    %v804 = vunpack.c.h.b16 %v370
    %v805 = vunpack.c.l.b16 %v371
    %v806 = vunpack.c.h.b16 %v371
    %v807 = vunpack.c.l.b16 %v372
    %v808 = vunpack.c.h.b16 %v372
    %v809 = vunpack.c.l.b16 %v373
    %v810 = vunpack.c.h.b16 %v373
    %v811 = vunpack.c.l.b16 %v374
    %v812 = vunpack.c.h.b16 %v374
    %v813 = vunpack.c.l.b16 %v375
    %v814 = vunpack.c.h.b16 %v375
    %v815 = vunpack.c.l.b16 %v376
    %v816 = vunpack.c.h.b16 %v376
    %v817 = vunpack.c.l.b16 %v377
    %v818 = vunpack.c.h.b16 %v377
    %v819 = vunpack.c.l.b16 %v378
    %v820 = vunpack.c.h.b16 %v378
    %v821 = vunpack.c.l.b16 %v379
    %v822 = vunpack.c.h.b16 %v379
    %v823 = vunpack.c.l.b16 %v380
    %v824 = vunpack.c.h.b16 %v380
    %v825 = vunpack.c.l.b16 %v381
    %v826 = vunpack.c.h.b16 %v381
    %v827 = vunpack.c.l.b16 %v382
    %v828 = vunpack.c.h.b16 %v382
    %v829 = vunpack.c.l.b16 %v383
    %v830 = vunpack.c.h.b16 %v383
    %v831 = vunpack.c.l.b16 %v384
    %v832 = vunpack.c.h.b16 %v384
    %v833 = vunpack.c.l.b16 %v385
    %v834 = vunpack.c.h.b16 %v385
    %v835 = vunpack.c.l.b16 %v386
    %v836 = vunpack.c.h.b16 %v386
    %v837 = vunpack.c.l.b16 %v387
    %v838 = vunpack.c.h.b16 %v387
    %v839 = vunpack.c.l.b16 %v388
    %v840 = vunpack.c.h.b16 %v388
    %v841 = vunpack.c.l.b16 %v389
    %v842 = vunpack.c.h.b16 %v389
    %v843 = vunpack.c.l.b16 %v390
    %v844 = vunpack.c.h.b16 %v390
    %v845 = vunpack.c.l.b16 %v391
    %v846 = vunpack.c.h.b16 %v391
    %v847 = vunpack.c.l.b16 %v392
    %v848 = vunpack.c.h.b16 %v392
    %v849 = vunpack.c.l.b16 %v393
    %v850 = vunpack.c.h.b16 %v393
    %v851 = vunpack.c.l.b16 %v394
    %v852 = vunpack.c.h.b16 %v394
    %v853 = vunpack.c.l.b16 %v395
    %v854 = vunpack.c.h.b16 %v395
    %v855 = vunpack.c.l.b16 %v396
    %v856 = vunpack.c.h.b16 %v396
    %v857 = vunpack.c.l.b16 %v397
    %v858 = vunpack.c.h.b16 %v397
    %v859 = vunpack.c.l.b16 %v398
    %v860 = vunpack.c.h.b16 %v398
    %v861 = vunpack.c.l.b16 %v399
    %v862 = vunpack.c.h.b16 %v399
    %v863 = vunpack.c.l.b16 %v400
    %v864 = vunpack.c.h.b16 %v400
    %v865 = vunpack.c.l.b16 %v401
    %v866 = vunpack.c.h.b16 %v401
    %v867 = vunpack.c.l.b16 %v402
    %v868 = vunpack.c.h.b16 %v402
    %v869 = vunpack.c.l.b16 %v403
    %v870 = vunpack.c.h.b16 %v403
    %v871 = vunpack.c.l.b16 %v404
    %v872 = vunpack.c.h.b16 %v404
    %v873 = vunpack.c.l.b16 %v405
    %v874 = vunpack.c.h.b16 %v405
    %v875 = vunpack.c.l.b16 %v406
    %v876 = vunpack.c.h.b16 %v406
    %v877 = vunpack.c.l.b16 %v407
    %v878 = vunpack.c.h.b16 %v407
    %v879 = vunpack.c.l.b16 %v408
    %v880 = vunpack.c.h.b16 %v408
    %v881 = vunpack.c.l.b16 %v409
    %v882 = vunpack.c.h.b16 %v409
    %v883 = vunpack.c.l.b16 %v410
    %v884 = vunpack.c.h.b16 %v410
    %v885 = vunpack.c.l.b16 %v411
    %v886 = vunpack.c.h.b16 %v411
    %v887 = vunpack.c.l.b16 %v412
    %v888 = vunpack.c.h.b16 %v412
    %v889 = vunpack.c.l.b16 %v413
    %v890 = vunpack.c.h.b16 %v413
    %v891 = vunpack.c.l.b16 %v414
    %v892 = vunpack.c.h.b16 %v414
    %v893 = vunpack.c.l.b16 %v415
    %v894 = vunpack.c.h.b16 %v415
    %v895 = vunpack.c.l.b16 %v416
    %v896 = vunpack.c.h.b16 %v416
    %v897 = vunpack.c.l.b16 %v417
    %v898 = vunpack.c.h.b16 %v417
    %v899 = vunpack.c.l.b16 %v418
    %v900 = vunpack.c.h.b16 %v418
    %v901 = vunpack.c.l.b16 %v419
    %v902 = vunpack.c.h.b16 %v419
    %v903 = vunpack.c.l.b16 %v420
    %v904 = vunpack.c.h.b16 %v420
    %v905 = vunpack.c.l.b16 %v421
    %v906 = vunpack.c.h.b16 %v421
    %v907 = vunpack.c.l.b16 %v422
    %v908 = vunpack.c.h.b16 %v422
    %v909 = vunpack.c.l.b16 %v423
    %v910 = vunpack.c.h.b16 %v423
    %v911 = vunpack.c.l.b16 %v424
    %v912 = vunpack.c.h.b16 %v424
    %v913 = vunpack.c.l.b16 %v425
    %v914 = vunpack.c.h.b16 %v425
    %v915 = vunpack.c.l.b16 %v426
    %v916 = vunpack.c.h.b16 %v426
    %v917 = vunpack.c.l.b16 %v427
    %v918 = vunpack.c.h.b16 %v427
    %v919 = vunpack.c.l.b16 %v428
    %v920 = vunpack.c.h.b16 %v428
    %v921 = vunpack.c.l.b16 %v429
    %v922 = vunpack.c.h.b16 %v429
    %v923 = vunpack.c.l.b16 %v430
    %v924 = vunpack.c.h.b16 %v430
    %v925 = vunpack.c.l.b16 %v431
    %v926 = vunpack.c.h.b16 %v431
    %v927 = vunpack.c.l.b16 %v432
    %v928 = vunpack.c.h.b16 %v432
    %v929 = vunpack.c.l.b16 %v433
    %v930 = vunpack.c.h.b16 %v433
    %v931 = vunpack.c.l.b16 %v434
    %v932 = vunpack.c.h.b16 %v434
    %v933 = vunpack.c.l.b16 %v435
    %v934 = vunpack.c.h.b16 %v435
    %v935 = vunpack.c.l.b16 %v436
    %v936 = vunpack.c.h.b16 %v436
    %v937 = vunpack.c.l.b16 %v437
    %v938 = vunpack.c.h.b16 %v437
    %v939 = vunpack.c.l.b16 %v438
    %v940 = vunpack.c.h.b16 %v438
    %v941 = vunpack.c.l.b16 %v439
    %v942 = vunpack.c.h.b16 %v439
    %v943 = vunpack.c.l.b16 %v440
    %v944 = vunpack.c.h.b16 %v440
    %v945 = vunpack.c.l.b16 %v441
    %v946 = vunpack.c.h.b16 %v441
    %v947 = vunpack.c.l.b16 %v442
    %v948 = vunpack.c.h.b16 %v442
    %v949 = vunpack.c.l.b16 %v443
    %v950 = vunpack.c.h.b16 %v443
    %v951 = vunpack.c.l.b16 %v444
    %v952 = vunpack.c.h.b16 %v444
    %v953 = vunpack.c.l.b16 %v445
    %v954 = vunpack.c.h.b16 %v445
    %v955 = vunpack.c.l.b16 %v446
    %v956 = vunpack.c.h.b16 %v446
    %v957 = vunpack.c.l.b16 %v447
    %v958 = vunpack.c.h.b16 %v447
    %v959 = vunpack.c.l.b16 %v448
    %v960 = vunpack.c.h.b16 %v448
    %v961 = vunpack.c.l.b16 %v449
    %v962 = vunpack.c.h.b16 %v449
    %v963 = vunpack.c.l.b16 %v450
    %v964 = vunpack.c.h.b16 %v450
    %v965 = vunpack.c.l.b16 %v451
    %v966 = vunpack.c.h.b16 %v451
    %v967 = vunpack.c.l.b16 %v452
    %v968 = vunpack.c.h.b16 %v452
    %v969 = vunpack.c.l.b16 %v453
    %v970 = vunpack.c.h.b16 %v453
    %v971 = vunpack.c.l.b16 %v454
    %v972 = vunpack.c.h.b16 %v454
    %v973 = vunpack.c.l.b16 %v455
    %v974 = vunpack.c.h.b16 %v455
    %v975 = vunpack.c.l.b16 %v456
    %v976 = vunpack.c.h.b16 %v456
    %v977 = vunpack.c.l.b16 %v457
    %v978 = vunpack.c.h.b16 %v457
    %v979 = vunpack.c.l.b16 %v458
    %v980 = vunpack.c.h.b16 %v458
    %v981 = vunpack.c.l.b16 %v459
    %v982 = vunpack.c.h.b16 %v459
    %v983 = vunpack.c.l.b16 %v460
    %v984 = vunpack.c.h.b16 %v460
    %v985 = vunpack.c.l.b16 %v461
    %v986 = vunpack.c.h.b16 %v461
    %v987 = vunpack.c.l.b16 %v462
    %v988 = vunpack.c.h.b16 %v462
    %v989 = vunpack.c.l.b16 %v463
    %v990 = vunpack.c.h.b16 %v463
    %v991 = vunpack.c.l.b16 %v464
    %v992 = vunpack.c.h.b16 %v464
    %v993 = vunpack.c.l.b16 %v465
    %v994 = vunpack.c.h.b16 %v465
    %v995 = vunpack.c.l.b16 %v466
    %v996 = vunpack.c.h.b16 %v466
    %v997 = vunpack.c.l.b16 %v467
    %v998 = vunpack.c.h.b16 %v467
    %v999 = vunpack.c.l.b16 %v468
    %v1000 = vunpack.c.h.b16 %v468
    %v1001 = vunpack.c.l.b16 %v469
    %v1002 = vunpack.c.h.b16 %v469
    %v1003 = vunpack.c.l.b16 %v470
    %v1004 = vunpack.c.h.b16 %v470
    %v1005 = vpack.c.b16 %v695, %v685
    %v1006 = vpack.c.b16 %v696, %v686
    %v1007 = vpack.c.b16 %v697, %v687
    %v1008 = vpack.c.b16 %v698, %v688
    %v1009 = vpack.c.b16 %v699, %v689
    %v1010 = vpack.c.b16 %v700, %v690
    %v1011 = vpack.c.b16 %v701, %v691
    %v1012 = vpack.c.b16 %v702, %v692
    %v1013 = vpack.c.b16 %v703, %v693
    %v1014 = vpack.c.b16 %v704, %v694
    %v1015 = vpack.c.b16 %v715, %v705
    %v1016 = vpack.c.b16 %v716, %v706
    %v1017 = vpack.c.b16 %v717, %v707
    %v1018 = vpack.c.b16 %v718, %v708
    %v1019 = vpack.c.b16 %v719, %v709
    %v1020 = vpack.c.b16 %v720, %v710
    %v1021 = vpack.c.b16 %v721, %v711
    %v1022 = vpack.c.b16 %v722, %v712
    %v1023 = vpack.c.b16 %v723, %v713
    %v1024 = vpack.c.b16 %v724, %v714
    %v1025 = vpack.c.b16 %v735, %v725
    %v1026 = vpack.c.b16 %v736, %v726
    %v1027 = vpack.c.b16 %v737, %v727
    %v1028 = vpack.c.b16 %v738, %v728
    %v1029 = vpack.c.b16 %v739, %v729
    %v1030 = vpack.c.b16 %v740, %v730
    %v1031 = vpack.c.b16 %v741, %v731
    %v1032 = vpack.c.b16 %v742, %v732
    %v1033 = vpack.c.b16 %v743, %v733
    %v1034 = vpack.c.b16 %v744, %v734
    %v1035 = vpack.c.b16 %v755, %v745
    %v1036 = vpack.c.b16 %v756, %v746
    %v1037 = vpack.c.b16 %v757, %v747
    %v1038 = vpack.c.b16 %v758, %v748
    %v1039 = vpack.c.b16 %v759, %v749
    %v1040 = vpack.c.b16 %v760, %v750
    %v1041 = vpack.c.b16 %v761, %v751
    %v1042 = vpack.c.b16 %v762, %v752
    %v1043 = vpack.c.b16 %v763, %v753
    %v1044 = vpack.c.b16 %v764, %v754
    %v1045 = vpack.c.b16 %v775, %v765
    %v1046 = vpack.c.b16 %v776, %v766
    %v1047 = vpack.c.b16 %v777, %v767
    %v1048 = vpack.c.b16 %v778, %v768
    %v1049 = vpack.c.b16 %v779, %v769
    %v1050 = vpack.c.b16 %v780, %v770
    %v1051 = vpack.c.b16 %v781, %v771
    %v1052 = vpack.c.b16 %v782, %v772
    %v1053 = vpack.c.b16 %v783, %v773
    %v1054 = vpack.c.b16 %v784, %v774
    %v1055 = vpack.c.b16 %v795, %v785
    %v1056 = vpack.c.b16 %v796, %v786
    %v1057 = vpack.c.b16 %v797, %v787
    %v1058 = vpack.c.b16 %v798, %v788
    %v1059 = vpack.c.b16 %v799, %v789
    %v1060 = vpack.c.b16 %v800, %v790
    %v1061 = vpack.c.b16 %v801, %v791
    %v1062 = vpack.c.b16 %v802, %v792
    %v1063 = vpack.c.b16 %v803, %v793
    %v1064 = vpack.c.b16 %v804, %v794
    %v1065 = vpack.c.b16 %v815, %v805
    %v1066 = vpack.c.b16 %v816, %v806
    %v1067 = vpack.c.b16 %v817, %v807
    %v1068 = vpack.c.b16 %v818, %v808
    %v1069 = vpack.c.b16 %v819, %v809
    %v1070 = vpack.c.b16 %v820, %v810
    %v1071 = vpack.c.b16 %v821, %v811
    %v1072 = vpack.c.b16 %v822, %v812
    %v1073 = vpack.c.b16 %v823, %v813
    %v1074 = vpack.c.b16 %v824, %v814
    %v1075 = vpack.c.b16 %v835, %v825
    %v1076 = vpack.c.b16 %v836, %v826
    %v1077 = vpack.c.b16 %v837, %v827
    %v1078 = vpack.c.b16 %v838, %v828
    %v1079 = vpack.c.b16 %v839, %v829
    %v1080 = vpack.c.b16 %v840, %v830
    %v1081 = vpack.c.b16 %v841, %v831
    %v1082 = vpack.c.b16 %v842, %v832
    %v1083 = vpack.c.b16 %v843, %v833
    %v1084 = vpack.c.b16 %v844, %v834
    %v1085 = vpack.c.b16 %v855, %v845
    %v1086 = vpack.c.b16 %v856, %v846
    %v1087 = vpack.c.b16 %v857, %v847
    %v1088 = vpack.c.b16 %v858, %v848
    %v1089 = vpack.c.b16 %v859, %v849
    %v1090 = vpack.c.b16 %v860, %v850
    %v1091 = vpack.c.b16 %v861, %v851
    %v1092 = vpack.c.b16 %v862, %v852
    %v1093 = vpack.c.b16 %v863, %v853
    %v1094 = vpack.c.b16 %v864, %v854
    %v1095 = vpack.c.b16 %v875, %v865
    %v1096 = vpack.c.b16 %v876, %v866
    %v1097 = vpack.c.b16 %v877, %v867
    %v1098 = vpack.c.b16 %v878, %v868
    %v1099 = vpack.c.b16 %v879, %v869
    %v1100 = vpack.c.b16 %v880, %v870
    %v1101 = vpack.c.b16 %v881, %v871
    %v1102 = vpack.c.b16 %v882, %v872
    %v1103 = vpack.c.b16 %v883, %v873
    %v1104 = vpack.c.b16 %v884, %v874
    %v1105 = vpack.c.b16 %v895, %v885
    %v1106 = vpack.c.b16 %v896, %v886
    %v1107 = vpack.c.b16 %v897, %v887
    %v1108 = vpack.c.b16 %v898, %v888
    %v1109 = vpack.c.b16 %v899, %v889
    %v1110 = vpack.c.b16 %v900, %v890
    %v1111 = vpack.c.b16 %v901, %v891
    %v1112 = vpack.c.b16 %v902, %v892
    %v1113 = vpack.c.b16 %v903, %v893
    %v1114 = vpack.c.b16 %v904, %v894
    %v1115 = vpack.c.b16 %v915, %v905
    %v1116 = vpack.c.b16 %v916, %v906
    %v1117 = vpack.c.b16 %v917, %v907
    %v1118 = vpack.c.b16 %v918, %v908
    %v1119 = vpack.c.b16 %v919, %v909
    %v1120 = vpack.c.b16 %v920, %v910
    %v1121 = vpack.c.b16 %v921, %v911
    %v1122 = vpack.c.b16 %v922, %v912
    %v1123 = vpack.c.b16 %v923, %v913
    %v1124 = vpack.c.b16 %v924, %v914
    %v1125 = vpack.c.b16 %v935, %v925
    %v1126 = vpack.c.b16 %v936, %v926
    %v1127 = vpack.c.b16 %v937, %v927
    %v1128 = vpack.c.b16 %v938, %v928
    %v1129 = vpack.c.b16 %v939, %v929
    %v1130 = vpack.c.b16 %v940, %v930
    %v1131 = vpack.c.b16 %v941, %v931
    %v1132 = vpack.c.b16 %v942, %v932
    %v1133 = vpack.c.b16 %v943, %v933
    %v1134 = vpack.c.b16 %v944, %v934
    %v1135 = vpack.c.b16 %v955, %v945
    %v1136 = vpack.c.b16 %v956, %v946
    %v1137 = vpack.c.b16 %v957, %v947
    %v1138 = vpack.c.b16 %v958, %v948
    %v1139 = vpack.c.b16 %v959, %v949
    %v1140 = vpack.c.b16 %v960, %v950
    %v1141 = vpack.c.b16 %v961, %v951
    %v1142 = vpack.c.b16 %v962, %v952
    %v1143 = vpack.c.b16 %v963, %v953
    %v1144 = vpack.c.b16 %v964, %v954
    %v1145 = vpack.c.b16 %v975, %v965
    %v1146 = vpack.c.b16 %v976, %v966
    %v1147 = vpack.c.b16 %v977, %v967
    %v1148 = vpack.c.b16 %v978, %v968
    %v1149 = vpack.c.b16 %v979, %v969
    %v1150 = vpack.c.b16 %v980, %v970
    %v1151 = vpack.c.b16 %v981, %v971
    %v1152 = vpack.c.b16 %v982, %v972
    %v1153 = vpack.c.b16 %v983, %v973
    %v1154 = vpack.c.b16 %v984, %v974
    %v1155 = vpack.c.b16 %v995, %v985
    %v1156 = vpack.c.b16 %v996, %v986
    %v1157 = vpack.c.b16 %v997, %v987
    %v1158 = vpack.c.b16 %v998, %v988
    %v1159 = vpack.c.b16 %v999, %v989
    %v1160 = vpack.c.b16 %v1000, %v990
    %v1161 = vpack.c.b16 %v1001, %v991
    %v1162 = vpack.c.b16 %v1002, %v992
    %v1163 = vpack.c.b16 %v1003, %v993
    %v1164 = vpack.c.b16 %v1004, %v994
    %1325 = vmatprep.subr.bf16.mxu0 %v1006
    %1326 = vmatpush1.bf16.msra.mxu0 %v1005
    %1327 = vmatprep.subr.bf16.mxu0 %v1016
    %1328 = vmatpush1.bf16.msra.mxu0 %v1015
    %1329 = vmatprep.subr.bf16.mxu0 %v1026
    %1330 = vmatpush1.bf16.msra.mxu0 %v1025
    %1331 = vmatprep.subr.bf16.mxu0 %v1036
    %1332 = vmatpush1.bf16.msra.mxu0 %v1035
    %1333 = vmatprep.subr.bf16.mxu0 %v1046
    %1334 = vmatpush1.bf16.msra.mxu0 %v1045
    %1335 = vmatprep.subr.bf16.mxu0 %v1056
    %1336 = vmatpush1.bf16.msra.mxu0 %v1055
    %1337 = vmatprep.subr.bf16.mxu0 %v1066
    %1338 = vmatpush1.bf16.msra.mxu0 %v1065
    %1339 = vmatprep.subr.bf16.mxu0 %v1076
    %1340 = vmatpush1.bf16.msra.mxu0 %v1075
    %1341 = vmatprep.subr.bf16.mxu0 %v1086
    %1342 = vmatpush1.bf16.msra.mxu0 %v1085
    %1343 = vmatprep.subr.bf16.mxu0 %v1096
    %1344 = vmatpush1.bf16.msra.mxu0 %v1095
    %1345 = vmatprep.subr.bf16.mxu0 %v1106
    %1346 = vmatpush1.bf16.msra.mxu0 %v1105
    %1347 = vmatprep.subr.bf16.mxu0 %v1116
    %1348 = vmatpush1.bf16.msra.mxu0 %v1115
    %1349 = vmatprep.subr.bf16.mxu0 %v1126
    %1350 = vmatpush1.bf16.msra.mxu0 %v1125
    %1351 = vmatprep.subr.bf16.mxu0 %v1136
    %1352 = vmatpush1.bf16.msra.mxu0 %v1135
    %1353 = vmatprep.subr.bf16.mxu0 %v1146
    %1354 = vmatpush1.bf16.msra.mxu0 %v1145
    %1355 = vmatprep.subr.bf16.mxu0 %v1156
    %1356 = vmatpush1.bf16.msra.mxu0 %v1155
    %1357 = vmatprep.mubr.bf16.mxu0 %v310
    %1358 = vmatmul.mubr.bf16.gmra.mrb[0].mxu0 %v309
    %v1359 = vpop.f32.mrb[0].mxu0
    %v1360 = vadd.f32 %v478, %v1359
    %v1361 = vpop.f32.mrb[0].mxu0
    %v1362 = vadd.f32 %v482, %v1361
    %v1363 = vpop.f32.mrb[0].mxu0
    %v1364 = vpop.f32.mrb[0].mxu0
    %1365 = vdwg.mxu0
    %1366 = vmatprep.subr.bf16.mxu0 %v1008
    %1367 = vmatpush1.bf16.msra.mxu0 %v1007
    %1368 = vmatprep.subr.bf16.mxu0 %v1018
    %1369 = vmatpush1.bf16.msra.mxu0 %v1017
    %1370 = vmatprep.subr.bf16.mxu0 %v1028
    %1371 = vmatpush1.bf16.msra.mxu0 %v1027
    %1372 = vmatprep.subr.bf16.mxu0 %v1038
    %1373 = vmatpush1.bf16.msra.mxu0 %v1037
    %1374 = vmatprep.subr.bf16.mxu0 %v1048
    %1375 = vmatpush1.bf16.msra.mxu0 %v1047
    %1376 = vmatprep.subr.bf16.mxu0 %v1058
    %1377 = vmatpush1.bf16.msra.mxu0 %v1057
    %1378 = vmatprep.subr.bf16.mxu0 %v1068
    %1379 = vmatpush1.bf16.msra.mxu0 %v1067
    %1380 = vmatprep.subr.bf16.mxu0 %v1078
    %1381 = vmatpush1.bf16.msra.mxu0 %v1077
    %1382 = vmatprep.subr.bf16.mxu0 %v1088
    %1383 = vmatpush1.bf16.msra.mxu0 %v1087
    %1384 = vmatprep.subr.bf16.mxu0 %v1098
    %1385 = vmatpush1.bf16.msra.mxu0 %v1097
    %1386 = vmatprep.subr.bf16.mxu0 %v1108
    %1387 = vmatpush1.bf16.msra.mxu0 %v1107
    %1388 = vmatprep.subr.bf16.mxu0 %v1118
    %1389 = vmatpush1.bf16.msra.mxu0 %v1117
    %1390 = vmatprep.subr.bf16.mxu0 %v1128
    %1391 = vmatpush1.bf16.msra.mxu0 %v1127
    %1392 = vmatprep.subr.bf16.mxu0 %v1138
    %1393 = vmatpush1.bf16.msra.mxu0 %v1137
    %1394 = vmatprep.subr.bf16.mxu0 %v1148
    %1395 = vmatpush1.bf16.msra.mxu0 %v1147
    %1396 = vmatprep.subr.bf16.mxu0 %v1158
    %1397 = vmatpush1.bf16.msra.mxu0 %v1157
    %1398 = vmatprep.mubr.bf16.mxu0 %v310
    %1399 = vmatmul.mubr.bf16.gmra.mrb[0].mxu0 %v309
    %v1400 = vpop.f32.mrb[0].mxu0
    %v1401 = vadd.f32 %v486, %v1400
    %v1402 = vpop.f32.mrb[0].mxu0
    %v1403 = vadd.f32 %v490, %v1402
    %v1404 = vpop.f32.mrb[0].mxu0
    %v1405 = vpop.f32.mrb[0].mxu0
    %1406 = vdwg.mxu0
    %1407 = vmatprep.subr.bf16.mxu0 %v1010
    %1408 = vmatpush1.bf16.msra.mxu0 %v1009
    %1409 = vmatprep.subr.bf16.mxu0 %v1020
    %1410 = vmatpush1.bf16.msra.mxu0 %v1019
    %1411 = vmatprep.subr.bf16.mxu0 %v1030
    %1412 = vmatpush1.bf16.msra.mxu0 %v1029
    %1413 = vmatprep.subr.bf16.mxu0 %v1040
    %1414 = vmatpush1.bf16.msra.mxu0 %v1039
    %1415 = vmatprep.subr.bf16.mxu0 %v1050
    %1416 = vmatpush1.bf16.msra.mxu0 %v1049
    %1417 = vmatprep.subr.bf16.mxu0 %v1060
    %1418 = vmatpush1.bf16.msra.mxu0 %v1059
    %1419 = vmatprep.subr.bf16.mxu0 %v1070
    %1420 = vmatpush1.bf16.msra.mxu0 %v1069
    %1421 = vmatprep.subr.bf16.mxu0 %v1080
    %1422 = vmatpush1.bf16.msra.mxu0 %v1079
    %1423 = vmatprep.subr.bf16.mxu0 %v1090
    %1424 = vmatpush1.bf16.msra.mxu0 %v1089
    %1425 = vmatprep.subr.bf16.mxu0 %v1100
    %1426 = vmatpush1.bf16.msra.mxu0 %v1099
    %1427 = vmatprep.subr.bf16.mxu0 %v1110
    %1428 = vmatpush1.bf16.msra.mxu0 %v1109
    %1429 = vmatprep.subr.bf16.mxu0 %v1120
    %1430 = vmatpush1.bf16.msra.mxu0 %v1119
    %1431 = vmatprep.subr.bf16.mxu0 %v1130
    %1432 = vmatpush1.bf16.msra.mxu0 %v1129
    %1433 = vmatprep.subr.bf16.mxu0 %v1140
    %1434 = vmatpush1.bf16.msra.mxu0 %v1139
    %1435 = vmatprep.subr.bf16.mxu0 %v1150
    %1436 = vmatpush1.bf16.msra.mxu0 %v1149
    %1437 = vmatprep.subr.bf16.mxu0 %v1160
    %1438 = vmatpush1.bf16.msra.mxu0 %v1159
    %1439 = vmatprep.mubr.bf16.mxu0 %v310
    %1440 = vmatmul.mubr.bf16.gmra.mrb[0].mxu0 %v309
    %v1441 = vpop.f32.mrb[0].mxu0
    %v1442 = vadd.f32 %v494, %v1441
    %v1443 = vpop.f32.mrb[0].mxu0
    %v1444 = vadd.f32 %v498, %v1443
    %v1445 = vpop.f32.mrb[0].mxu0
    %v1446 = vpop.f32.mrb[0].mxu0
    %1447 = vdwg.mxu0
    %1448 = vmatprep.subr.bf16.mxu0 %v1012
    %1449 = vmatpush1.bf16.msra.mxu0 %v1011
    %1450 = vmatprep.subr.bf16.mxu0 %v1022
    %1451 = vmatpush1.bf16.msra.mxu0 %v1021
    %1452 = vmatprep.subr.bf16.mxu0 %v1032
    %1453 = vmatpush1.bf16.msra.mxu0 %v1031
    %1454 = vmatprep.subr.bf16.mxu0 %v1042
    %1455 = vmatpush1.bf16.msra.mxu0 %v1041
    %1456 = vmatprep.subr.bf16.mxu0 %v1052
    %1457 = vmatpush1.bf16.msra.mxu0 %v1051
    %1458 = vmatprep.subr.bf16.mxu0 %v1062
    %1459 = vmatpush1.bf16.msra.mxu0 %v1061
    %1460 = vmatprep.subr.bf16.mxu0 %v1072
    %1461 = vmatpush1.bf16.msra.mxu0 %v1071
    %1462 = vmatprep.subr.bf16.mxu0 %v1082
    %1463 = vmatpush1.bf16.msra.mxu0 %v1081
    %1464 = vmatprep.subr.bf16.mxu0 %v1092
    %1465 = vmatpush1.bf16.msra.mxu0 %v1091
    %1466 = vmatprep.subr.bf16.mxu0 %v1102
    %1467 = vmatpush1.bf16.msra.mxu0 %v1101
    %1468 = vmatprep.subr.bf16.mxu0 %v1112
    %1469 = vmatpush1.bf16.msra.mxu0 %v1111
    %1470 = vmatprep.subr.bf16.mxu0 %v1122
    %1471 = vmatpush1.bf16.msra.mxu0 %v1121
    %1472 = vmatprep.subr.bf16.mxu0 %v1132
    %1473 = vmatpush1.bf16.msra.mxu0 %v1131
    %1474 = vmatprep.subr.bf16.mxu0 %v1142
    %1475 = vmatpush1.bf16.msra.mxu0 %v1141
    %1476 = vmatprep.subr.bf16.mxu0 %v1152
    %1477 = vmatpush1.bf16.msra.mxu0 %v1151
    %1478 = vmatprep.subr.bf16.mxu0 %v1162
    %1479 = vmatpush1.bf16.msra.mxu0 %v1161
    %1480 = vmatprep.mubr.bf16.mxu0 %v310
    %1481 = vmatmul.mubr.bf16.gmra.mrb[0].mxu0 %v309
    %v1482 = vpop.f32.mrb[0].mxu0
    %v1483 = vadd.f32 %v502, %v1482
    %v1484 = vpop.f32.mrb[0].mxu0
    %v1485 = vadd.f32 %v506, %v1484
    %v1486 = vpop.f32.mrb[0].mxu0
    %v1487 = vpop.f32.mrb[0].mxu0
    %1488 = vdwg.mxu0
    %1489 = vmatprep.subr.bf16.mxu0 %v1014
    %1490 = vmatpush1.bf16.msra.mxu0 %v1013
    %1491 = vmatprep.subr.bf16.mxu0 %v1024
    %1492 = vmatpush1.bf16.msra.mxu0 %v1023
    %1493 = vmatprep.subr.bf16.mxu0 %v1034
    %1494 = vmatpush1.bf16.msra.mxu0 %v1033
    %1495 = vmatprep.subr.bf16.mxu0 %v1044
    %1496 = vmatpush1.bf16.msra.mxu0 %v1043
    %1497 = vmatprep.subr.bf16.mxu0 %v1054
    %1498 = vmatpush1.bf16.msra.mxu0 %v1053
    %1499 = vmatprep.subr.bf16.mxu0 %v1064
    %1500 = vmatpush1.bf16.msra.mxu0 %v1063
    %1501 = vmatprep.subr.bf16.mxu0 %v1074
    %1502 = vmatpush1.bf16.msra.mxu0 %v1073
    %1503 = vmatprep.subr.bf16.mxu0 %v1084
    %1504 = vmatpush1.bf16.msra.mxu0 %v1083
    %1505 = vmatprep.subr.bf16.mxu0 %v1094
    %1506 = vmatpush1.bf16.msra.mxu0 %v1093
    %1507 = vmatprep.subr.bf16.mxu0 %v1104
    %1508 = vmatpush1.bf16.msra.mxu0 %v1103
    %1509 = vmatprep.subr.bf16.mxu0 %v1114
    %1510 = vmatpush1.bf16.msra.mxu0 %v1113
    %1511 = vmatprep.subr.bf16.mxu0 %v1124
    %1512 = vmatpush1.bf16.msra.mxu0 %v1123
    %1513 = vmatprep.subr.bf16.mxu0 %v1134
    %1514 = vmatpush1.bf16.msra.mxu0 %v1133
    %1515 = vmatprep.subr.bf16.mxu0 %v1144
    %1516 = vmatpush1.bf16.msra.mxu0 %v1143
    %1517 = vmatprep.subr.bf16.mxu0 %v1154
    %1518 = vmatpush1.bf16.msra.mxu0 %v1153
    %1519 = vmatprep.subr.bf16.mxu0 %v1164
    %1520 = vmatpush1.bf16.msra.mxu0 %v1163
    %1521 = vmatprep.mubr.bf16.mxu0 %v310
    %1522 = vmatmul.mubr.bf16.gmra.mrb[0].mxu0 %v309
    %v1523 = vpop.f32.mrb[0].mxu0
    %v1524 = vadd.f32 %v510, %v1523
    %v1525 = vpop.f32.mrb[0].mxu0
    %v1526 = vadd.f32 %v514, %v1525
    %v1527 = vpop.f32.mrb[0].mxu0
    %v1528 = vpop.f32.mrb[0].mxu0
    %1529 = vdwg.mxu0
    %1530 = vst [vmem:[#allocation2] sm:$0x3] %v1360
    %1531 = vst [vmem:[#allocation2 + $0x2] sm:$0x3] %v1401
    %1532 = vst [vmem:[#allocation2 + $0x4] sm:$0x3] %v1442
    %1533 = vst [vmem:[#allocation2 + $0x6] sm:$0x3] %v1483
    %1534 = vst [vmem:[#allocation2 + $0x8] sm:$0x3] %v1524
    %1535 = vst [vmem:[#allocation2 + $0xa] sm:$0x3] %v1362
    %1536 = vst [vmem:[#allocation2 + $0xc] sm:$0x3] %v1403
    %1537 = vst [vmem:[#allocation2 + $0xe] sm:$0x3] %v1444
    %1538 = vst [vmem:[#allocation2 + $0x10] sm:$0x3] %v1485
    %1539 = vst [vmem:[#allocation2 + $0x12] sm:$0x3] %v1526
    %v1540 = vld [vmem:[#allocation2] sm:$0xff]
    %v1541 = vld [vmem:[#allocation2 + $0x8] sm:$0xff]
    %v1542 = vld [vmem:[#allocation2 + $0x10] sm:$0xf]
    %v1543 = vadd.f32 %v1540, %v1541
    %vm1544 = vcmask 1043456
    %v1545 = vsel %vm1544, %v1542, 0.0
    %v1546 = vadd.f32 %v1543, %v1545
    %v1547 = vrot.slane %v1546, 4
    %v1548 = vadd.f32 %v1546, %v1547
    %v1549 = vrot.slane %v1548, 2
    %v1550 = vadd.f32 %v1548, %v1549
    %v1551 = vrot.slane %v1550, 1
    %v1552 = vadd.f32 %v1550, %v1551
    %v1553 = vmul.f32 %v1540, %v1540
    %v1554 = vmul.f32 %v1541, %v1541
    %v1555 = vmul.f32 %v1542, %v1542
    %v1556 = vadd.f32 %v1553, %v1554
    %v1557 = vsel %vm1544, %v1555, 0.0
    %v1558 = vadd.f32 %v1556, %v1557
    %v1559 = vrot.slane %v1558, 4
    %v1560 = vadd.f32 %v1558, %v1559
    %v1561 = vrot.slane %v1560, 2
    %v1562 = vadd.f32 %v1560, %v1561
    %v1563 = vrot.slane %v1562, 1
    %v1564 = vadd.f32 %v1562, %v1563
    %v1565 = vrcp.pop 20.0
    %v1566 = vmul.f32 %v1552, %v1565
    %v1567 = vmul.f32 %v1564, %v1565
    %v1568 = vmul.f32 %v1566, %v1566
    %v1569 = vsub.f32 %v1567, %v1568
    %v1570 = vmax.f32 %v1569, 0.0
    %v1571 = vld [vmem:[#allocation9] sm:$0x1]
    %v1572 = vadd.f32 %v1570, 1e-05
    %v1573 = vrsqrt.pop %v1572
    %v1574 = vmul.f32 %v1571, %v1573
    %v1575 = vld [vmem:[#allocation11] sm:$0x1]
    %v1576 = vmul.f32 %v1566, %v1574
    %v1577 = vsub.f32 %v1575, %v1576
    %v1579 = vlaneseq
    %v1580 = vshrl.u32 %v1579, 7
    %v1581 = vsub.s32 0, %v1580
    %v1582 = vrot.slane %v1574, %v1581
    %v1584 = vmul.f32 %v1540, %v1582
    %v1585 = vmul.f32 %v1541, %v1582
    %v1586 = vmul.f32 %v1542, %v1582
    %v1588 = vlaneseq
    %v1589 = vshrl.u32 %v1588, 7
    %v1590 = vsub.s32 0, %v1589
    %v1591 = vrot.slane %v1577, %v1590
    %v1593 = vadd.f32 %v1584, %v1591
    %v1594 = vadd.f32 %v1585, %v1591
    %v1595 = vadd.f32 %v1586, %v1591
    %v1596 = vmax.f32 %v1593, 0.0
    %v1597 = vmax.f32 %v1594, 0.0
    %v1598 = vmax.f32 %v1595, 0.0
    %v1599 = vpack.c.bf16 %v1597, %v1596
    %v1600 = vpack.c.bf16 %v1598, %v1598
    %v1601 = vld [vmem:[#allocation12] sm:$0xff]
    %v1602 = vld [vmem:[#allocation12 + $0x8] sm:$0xff]
    %v1603 = vld [vmem:[#allocation12 + $0x10] sm:$0xff]
    %v1604 = vld [vmem:[#allocation12 + $0x18] sm:$0xff]
    %v1605 = vld [vmem:[#allocation12 + $0x20] sm:$0xff]
    %v1606 = vld [vmem:[#allocation12 + $0x28] sm:$0xff]
    %v1607 = vld [vmem:[#allocation12 + $0x30] sm:$0xff]
    %v1608 = vld [vmem:[#allocation12 + $0x38] sm:$0xff]
    %v1609 = vld [vmem:[#allocation12 + $0x40] sm:$0xff]
    %v1610 = vld [vmem:[#allocation12 + $0x48] sm:$0xff]
    %v1611 = vld [vmem:[#allocation12 + $0x50] sm:$0xff]
    %v1612 = vld [vmem:[#allocation12 + $0x58] sm:$0xff]
    %v1613 = vld [vmem:[#allocation12 + $0x60] sm:$0xff]
    %v1614 = vld [vmem:[#allocation12 + $0x68] sm:$0xff]
    %v1615 = vld [vmem:[#allocation12 + $0x70] sm:$0xff]
    %v1616 = vld [vmem:[#allocation12 + $0x78] sm:$0xff]
    %v1617 = vld [vmem:[#allocation12 + $0x80] sm:$0xff]
    %v1618 = vld [vmem:[#allocation12 + $0x88] sm:$0xff]
    %v1619 = vld [vmem:[#allocation12 + $0x90] sm:$0xff]
    %v1620 = vld [vmem:[#allocation12 + $0x98] sm:$0xff]
    %v1621 = vld [vmem:[#allocation12 + $0xa0] sm:$0xff]
    %v1622 = vld [vmem:[#allocation12 + $0xa8] sm:$0xff]
    %v1623 = vld [vmem:[#allocation12 + $0xb0] sm:$0xff]
    %v1624 = vld [vmem:[#allocation12 + $0xb8] sm:$0xff]
    %v1625 = vld [vmem:[#allocation12 + $0xc0] sm:$0xff]
    %v1626 = vld [vmem:[#allocation12 + $0xc8] sm:$0xff]
    %v1627 = vld [vmem:[#allocation12 + $0xd0] sm:$0xff]
    %v1628 = vld [vmem:[#allocation12 + $0xd8] sm:$0xff]
    %v1629 = vld [vmem:[#allocation12 + $0xe0] sm:$0xff]
    %v1630 = vld [vmem:[#allocation12 + $0xe8] sm:$0xff]
    %v1631 = vld [vmem:[#allocation12 + $0xf0] sm:$0xff]
    %v1632 = vld [vmem:[#allocation12 + $0xf8] sm:$0xff]
    %v1633 = vld [vmem:[#allocation12 + $0x100] sm:$0xff]
    %v1634 = vld [vmem:[#allocation12 + $0x108] sm:$0xff]
    %v1635 = vld [vmem:[#allocation12 + $0x110] sm:$0xff]
    %v1636 = vld [vmem:[#allocation12 + $0x118] sm:$0xff]
    %v1637 = vld [vmem:[#allocation12 + $0x120] sm:$0xff]
    %v1638 = vld [vmem:[#allocation12 + $0x128] sm:$0xff]
    %v1639 = vld [vmem:[#allocation12 + $0x130] sm:$0xff]
    %v1640 = vld [vmem:[#allocation12 + $0x138] sm:$0xff]
    %v1641 = vld [vmem:[#allocation12 + $0x140] sm:$0xff]
    %v1642 = vld [vmem:[#allocation12 + $0x148] sm:$0xff]
    %v1643 = vld [vmem:[#allocation12 + $0x150] sm:$0xff]
    %v1644 = vld [vmem:[#allocation12 + $0x158] sm:$0xff]
    %v1645 = vld [vmem:[#allocation12 + $0x160] sm:$0xff]
    %v1646 = vld [vmem:[#allocation12 + $0x168] sm:$0xff]
    %v1647 = vld [vmem:[#allocation12 + $0x170] sm:$0xff]
    %v1648 = vld [vmem:[#allocation12 + $0x178] sm:$0xff]
    %v1649 = vld [vmem:[#allocation12 + $0x180] sm:$0xff]
    %v1650 = vld [vmem:[#allocation12 + $0x188] sm:$0xff]
    %v1651 = vld [vmem:[#allocation12 + $0x190] sm:$0xff]
    %v1652 = vld [vmem:[#allocation12 + $0x198] sm:$0xff]
    %v1653 = vld [vmem:[#allocation12 + $0x1a0] sm:$0xff]
    %v1654 = vld [vmem:[#allocation12 + $0x1a8] sm:$0xff]
    %v1655 = vld [vmem:[#allocation12 + $0x1b0] sm:$0xff]
    %v1656 = vld [vmem:[#allocation12 + $0x1b8] sm:$0xff]
    %v1657 = vld [vmem:[#allocation12 + $0x1c0] sm:$0xff]
    %v1658 = vld [vmem:[#allocation12 + $0x1c8] sm:$0xff]
    %v1659 = vld [vmem:[#allocation12 + $0x1d0] sm:$0xff]
    %v1660 = vld [vmem:[#allocation12 + $0x1d8] sm:$0xff]
    %v1661 = vld [vmem:[#allocation12 + $0x1e0] sm:$0xff]
    %v1662 = vld [vmem:[#allocation12 + $0x1e8] sm:$0xff]
    %v1663 = vld [vmem:[#allocation12 + $0x1f0] sm:$0xff]
    %v1664 = vld [vmem:[#allocation12 + $0x1f8] sm:$0xff]
    %v1665 = vld [vmem:[#allocation14] sm:$0xff]
    %v1667 = vlaneseq
    %v1668 = vshrl.u32 %v1667, 7
    %v1669 = vsub.s32 0, %v1668
    %v1670 = vrot.slane %v1665, %v1669
    %v1671 = vlaneseq
    %v1672 = vshrl.u32 %v1671, 7
    %v1673 = vsub.s32 1, %v1672
    %v1674 = vrot.slane %v1665, %v1673
    %v1675 = vlaneseq
    %v1676 = vshrl.u32 %v1675, 7
    %v1677 = vsub.s32 2, %v1676
    %v1678 = vrot.slane %v1665, %v1677
    %v1679 = vlaneseq
    %v1680 = vshrl.u32 %v1679, 7
    %v1681 = vsub.s32 3, %v1680
    %v1682 = vrot.slane %v1665, %v1681
    %v1683 = vlaneseq
    %v1684 = vshrl.u32 %v1683, 7
    %v1685 = vsub.s32 4, %v1684
    %v1686 = vrot.slane %v1665, %v1685
    %v1687 = vlaneseq
    %v1688 = vshrl.u32 %v1687, 7
    %v1689 = vsub.s32 5, %v1688
    %v1690 = vrot.slane %v1665, %v1689
    %v1691 = vlaneseq
    %v1692 = vshrl.u32 %v1691, 7
    %v1693 = vsub.s32 6, %v1692
    %v1694 = vrot.slane %v1665, %v1693
    %v1695 = vlaneseq
    %v1696 = vshrl.u32 %v1695, 7
    %v1697 = vsub.s32 7, %v1696
    %v1698 = vrot.slane %v1665, %v1697
    %v1771 = vunpack.c.l.b16 %v1601
    %v1772 = vunpack.c.h.b16 %v1601
    %v1773 = vunpack.c.l.b16 %v1602
    %v1774 = vunpack.c.h.b16 %v1602
    %v1775 = vunpack.c.l.b16 %v1603
    %v1776 = vunpack.c.h.b16 %v1603
    %v1777 = vunpack.c.l.b16 %v1604
    %v1778 = vunpack.c.h.b16 %v1604
    %v1779 = vunpack.c.l.b16 %v1605
    %v1780 = vunpack.c.h.b16 %v1605
    %v1781 = vunpack.c.l.b16 %v1606
    %v1782 = vunpack.c.h.b16 %v1606
    %v1783 = vunpack.c.l.b16 %v1607
    %v1784 = vunpack.c.h.b16 %v1607
    %v1785 = vunpack.c.l.b16 %v1608
    %v1786 = vunpack.c.h.b16 %v1608
    %v1787 = vunpack.c.l.b16 %v1609
    %v1788 = vunpack.c.h.b16 %v1609
    %v1789 = vunpack.c.l.b16 %v1610
    %v1790 = vunpack.c.h.b16 %v1610
    %v1791 = vunpack.c.l.b16 %v1611
    %v1792 = vunpack.c.h.b16 %v1611
    %v1793 = vunpack.c.l.b16 %v1612
    %v1794 = vunpack.c.h.b16 %v1612
    %v1795 = vunpack.c.l.b16 %v1613
    %v1796 = vunpack.c.h.b16 %v1613
    %v1797 = vunpack.c.l.b16 %v1614
    %v1798 = vunpack.c.h.b16 %v1614
    %v1799 = vunpack.c.l.b16 %v1615
    %v1800 = vunpack.c.h.b16 %v1615
    %v1801 = vunpack.c.l.b16 %v1616
    %v1802 = vunpack.c.h.b16 %v1616
    %v1803 = vunpack.c.l.b16 %v1617
    %v1804 = vunpack.c.h.b16 %v1617
    %v1805 = vunpack.c.l.b16 %v1618
    %v1806 = vunpack.c.h.b16 %v1618
    %v1807 = vunpack.c.l.b16 %v1619
    %v1808 = vunpack.c.h.b16 %v1619
    %v1809 = vunpack.c.l.b16 %v1620
    %v1810 = vunpack.c.h.b16 %v1620
    %v1811 = vunpack.c.l.b16 %v1621
    %v1812 = vunpack.c.h.b16 %v1621
    %v1813 = vunpack.c.l.b16 %v1622
    %v1814 = vunpack.c.h.b16 %v1622
    %v1815 = vunpack.c.l.b16 %v1623
    %v1816 = vunpack.c.h.b16 %v1623
    %v1817 = vunpack.c.l.b16 %v1624
    %v1818 = vunpack.c.h.b16 %v1624
    %v1819 = vunpack.c.l.b16 %v1625
    %v1820 = vunpack.c.h.b16 %v1625
    %v1821 = vunpack.c.l.b16 %v1626
    %v1822 = vunpack.c.h.b16 %v1626
    %v1823 = vunpack.c.l.b16 %v1627
    %v1824 = vunpack.c.h.b16 %v1627
    %v1825 = vunpack.c.l.b16 %v1628
    %v1826 = vunpack.c.h.b16 %v1628
    %v1827 = vunpack.c.l.b16 %v1629
    %v1828 = vunpack.c.h.b16 %v1629
    %v1829 = vunpack.c.l.b16 %v1630
    %v1830 = vunpack.c.h.b16 %v1630
    %v1831 = vunpack.c.l.b16 %v1631
    %v1832 = vunpack.c.h.b16 %v1631
    %v1833 = vunpack.c.l.b16 %v1632
    %v1834 = vunpack.c.h.b16 %v1632
    %v1835 = vunpack.c.l.b16 %v1633
    %v1836 = vunpack.c.h.b16 %v1633
    %v1837 = vunpack.c.l.b16 %v1634
    %v1838 = vunpack.c.h.b16 %v1634
    %v1839 = vunpack.c.l.b16 %v1635
    %v1840 = vunpack.c.h.b16 %v1635
    %v1841 = vunpack.c.l.b16 %v1636
    %v1842 = vunpack.c.h.b16 %v1636
    %v1843 = vunpack.c.l.b16 %v1637
    %v1844 = vunpack.c.h.b16 %v1637
    %v1845 = vunpack.c.l.b16 %v1638
    %v1846 = vunpack.c.h.b16 %v1638
    %v1847 = vunpack.c.l.b16 %v1639
    %v1848 = vunpack.c.h.b16 %v1639
    %v1849 = vunpack.c.l.b16 %v1640
    %v1850 = vunpack.c.h.b16 %v1640
    %v1851 = vunpack.c.l.b16 %v1641
    %v1852 = vunpack.c.h.b16 %v1641
    %v1853 = vunpack.c.l.b16 %v1642
    %v1854 = vunpack.c.h.b16 %v1642
    %v1855 = vunpack.c.l.b16 %v1643
    %v1856 = vunpack.c.h.b16 %v1643
    %v1857 = vunpack.c.l.b16 %v1644
    %v1858 = vunpack.c.h.b16 %v1644
    %v1859 = vunpack.c.l.b16 %v1645
    %v1860 = vunpack.c.h.b16 %v1645
    %v1861 = vunpack.c.l.b16 %v1646
    %v1862 = vunpack.c.h.b16 %v1646
    %v1863 = vunpack.c.l.b16 %v1647
    %v1864 = vunpack.c.h.b16 %v1647
    %v1865 = vunpack.c.l.b16 %v1648
    %v1866 = vunpack.c.h.b16 %v1648
    %v1867 = vunpack.c.l.b16 %v1649
    %v1868 = vunpack.c.h.b16 %v1649
    %v1869 = vunpack.c.l.b16 %v1650
    %v1870 = vunpack.c.h.b16 %v1650
    %v1871 = vunpack.c.l.b16 %v1651
    %v1872 = vunpack.c.h.b16 %v1651
    %v1873 = vunpack.c.l.b16 %v1652
    %v1874 = vunpack.c.h.b16 %v1652
    %v1875 = vunpack.c.l.b16 %v1653
    %v1876 = vunpack.c.h.b16 %v1653
    %v1877 = vunpack.c.l.b16 %v1654
    %v1878 = vunpack.c.h.b16 %v1654
    %v1879 = vunpack.c.l.b16 %v1655
    %v1880 = vunpack.c.h.b16 %v1655
    %v1881 = vunpack.c.l.b16 %v1656
    %v1882 = vunpack.c.h.b16 %v1656
    %v1883 = vunpack.c.l.b16 %v1657
    %v1884 = vunpack.c.h.b16 %v1657
    %v1885 = vunpack.c.l.b16 %v1658
    %v1886 = vunpack.c.h.b16 %v1658
    %v1887 = vunpack.c.l.b16 %v1659
    %v1888 = vunpack.c.h.b16 %v1659
    %v1889 = vunpack.c.l.b16 %v1660
    %v1890 = vunpack.c.h.b16 %v1660
    %v1891 = vunpack.c.l.b16 %v1661
    %v1892 = vunpack.c.h.b16 %v1661
    %v1893 = vunpack.c.l.b16 %v1662
    %v1894 = vunpack.c.h.b16 %v1662
    %v1895 = vunpack.c.l.b16 %v1663
    %v1896 = vunpack.c.h.b16 %v1663
    %v1897 = vunpack.c.l.b16 %v1664
    %v1898 = vunpack.c.h.b16 %v1664
    %v1899 = vpack.c.b16 %v1779, %v1771
    %v1900 = vpack.c.b16 %v1780, %v1772
    %v1901 = vpack.c.b16 %v1781, %v1773
    %v1902 = vpack.c.b16 %v1782, %v1774
    %v1903 = vpack.c.b16 %v1783, %v1775
    %v1904 = vpack.c.b16 %v1784, %v1776
    %v1905 = vpack.c.b16 %v1785, %v1777
    %v1906 = vpack.c.b16 %v1786, %v1778
    %v1907 = vpack.c.b16 %v1795, %v1787
    %v1908 = vpack.c.b16 %v1796, %v1788
    %v1909 = vpack.c.b16 %v1797, %v1789
    %v1910 = vpack.c.b16 %v1798, %v1790
    %v1911 = vpack.c.b16 %v1799, %v1791
    %v1912 = vpack.c.b16 %v1800, %v1792
    %v1913 = vpack.c.b16 %v1801, %v1793
    %v1914 = vpack.c.b16 %v1802, %v1794
    %v1915 = vpack.c.b16 %v1811, %v1803
    %v1916 = vpack.c.b16 %v1812, %v1804
    %v1917 = vpack.c.b16 %v1813, %v1805
    %v1918 = vpack.c.b16 %v1814, %v1806
    %v1919 = vpack.c.b16 %v1815, %v1807
    %v1920 = vpack.c.b16 %v1816, %v1808
    %v1921 = vpack.c.b16 %v1817, %v1809
    %v1922 = vpack.c.b16 %v1818, %v1810
    %v1923 = vpack.c.b16 %v1827, %v1819
    %v1924 = vpack.c.b16 %v1828, %v1820
    %v1925 = vpack.c.b16 %v1829, %v1821
    %v1926 = vpack.c.b16 %v1830, %v1822
    %v1927 = vpack.c.b16 %v1831, %v1823
    %v1928 = vpack.c.b16 %v1832, %v1824
    %v1929 = vpack.c.b16 %v1833, %v1825
    %v1930 = vpack.c.b16 %v1834, %v1826
    %v1931 = vpack.c.b16 %v1843, %v1835
    %v1932 = vpack.c.b16 %v1844, %v1836
    %v1933 = vpack.c.b16 %v1845, %v1837
    %v1934 = vpack.c.b16 %v1846, %v1838
    %v1935 = vpack.c.b16 %v1847, %v1839
    %v1936 = vpack.c.b16 %v1848, %v1840
    %v1937 = vpack.c.b16 %v1849, %v1841
    %v1938 = vpack.c.b16 %v1850, %v1842
    %v1939 = vpack.c.b16 %v1859, %v1851
    %v1940 = vpack.c.b16 %v1860, %v1852
    %v1941 = vpack.c.b16 %v1861, %v1853
    %v1942 = vpack.c.b16 %v1862, %v1854
    %v1943 = vpack.c.b16 %v1863, %v1855
    %v1944 = vpack.c.b16 %v1864, %v1856
    %v1945 = vpack.c.b16 %v1865, %v1857
    %v1946 = vpack.c.b16 %v1866, %v1858
    %v1947 = vpack.c.b16 %v1875, %v1867
    %v1948 = vpack.c.b16 %v1876, %v1868
    %v1949 = vpack.c.b16 %v1877, %v1869
    %v1950 = vpack.c.b16 %v1878, %v1870
    %v1951 = vpack.c.b16 %v1879, %v1871
    %v1952 = vpack.c.b16 %v1880, %v1872
    %v1953 = vpack.c.b16 %v1881, %v1873
    %v1954 = vpack.c.b16 %v1882, %v1874
    %v1955 = vpack.c.b16 %v1891, %v1883
    %v1956 = vpack.c.b16 %v1892, %v1884
    %v1957 = vpack.c.b16 %v1893, %v1885
    %v1958 = vpack.c.b16 %v1894, %v1886
    %v1959 = vpack.c.b16 %v1895, %v1887
    %v1960 = vpack.c.b16 %v1896, %v1888
    %v1961 = vpack.c.b16 %v1897, %v1889
    %v1962 = vpack.c.b16 %v1898, %v1890
    %2027 = vmatprep.subr.bf16.mxu0 %v1900
    %2028 = vmatpush1.bf16.msra.mxu0 %v1899
    %2029 = vmatprep.subr.bf16.mxu0 %v1908
    %2030 = vmatpush1.bf16.msra.mxu0 %v1907
    %2031 = vmatprep.subr.bf16.mxu0 %v1916
    %2032 = vmatpush1.bf16.msra.mxu0 %v1915
    %2033 = vmatprep.subr.bf16.mxu0 %v1924
    %2034 = vmatpush1.bf16.msra.mxu0 %v1923
    %2035 = vmatprep.subr.bf16.mxu0 %v1932
    %2036 = vmatpush1.bf16.msra.mxu0 %v1931
    %2037 = vmatprep.subr.bf16.mxu0 %v1940
    %2038 = vmatpush1.bf16.msra.mxu0 %v1939
    %2039 = vmatprep.subr.bf16.mxu0 %v1948
    %2040 = vmatpush1.bf16.msra.mxu0 %v1947
    %2041 = vmatprep.subr.bf16.mxu0 %v1956
    %2042 = vmatpush1.bf16.msra.mxu0 %v1955
    %2043 = vmatprep.subr.bf16.mxu0 0
    %2044 = vmatpush1.bf16.msra.mxu0 0
    %2045 = vmatprep.subr.bf16.mxu0 0
    %2046 = vmatpush1.bf16.msra.mxu0 0
    %2047 = vmatprep.subr.bf16.mxu0 0
    %2048 = vmatpush1.bf16.msra.mxu0 0
    %2049 = vmatprep.subr.bf16.mxu0 0
    %2050 = vmatpush1.bf16.msra.mxu0 0
    %2051 = vmatprep.subr.bf16.mxu0 0
    %2052 = vmatpush1.bf16.msra.mxu0 0
    %2053 = vmatprep.subr.bf16.mxu0 0
    %2054 = vmatpush1.bf16.msra.mxu0 0
    %2055 = vmatprep.subr.bf16.mxu0 0
    %2056 = vmatpush1.bf16.msra.mxu0 0
    %2057 = vmatprep.subr.bf16.mxu0 0
    %2058 = vmatpush1.bf16.msra.mxu0 0
    %2059 = vmatprep.mubr.bf16.mxu0 0
    %2060 = vmatmul.mubr.bf16.gmra.mrb[0].mxu0 %v1599
    %v2061 = vpop.f32.mrb[0].mxu0
    %v2062 = vadd.f32 %v1670, %v2061
    %v2063 = vpop.f32.mrb[0].mxu0
    %v2064 = vadd.f32 %v1674, %v2063
    %v2065 = vpop.f32.mrb[0].mxu0
    %v2066 = vadd.f32 %v1670, %v2065
    %v2067 = vpop.f32.mrb[0].mxu0
    %v2068 = vadd.f32 %v1674, %v2067
    %2069 = vmatprep.mubr.bf16.mxu0 0
    %2070 = vmatmul.mubr.bf16.gmra.mrb[0].mxu0 %v1600
    %v2071 = vpop.f32.mrb[0].mxu0
    %v2072 = vadd.f32 %v1670, %v2071
    %v2073 = vpop.f32.mrb[0].mxu0
    %v2074 = vadd.f32 %v1674, %v2073
    %v2075 = vpop.f32.mrb[0].mxu0
    %v2076 = vpop.f32.mrb[0].mxu0
    %2077 = vdwg.mxu0
    %2078 = vmatprep.subr.bf16.mxu0 %v1902
    %2079 = vmatpush1.bf16.msra.mxu0 %v1901
    %2080 = vmatprep.subr.bf16.mxu0 %v1910
    %2081 = vmatpush1.bf16.msra.mxu0 %v1909
    %2082 = vmatprep.subr.bf16.mxu0 %v1918
    %2083 = vmatpush1.bf16.msra.mxu0 %v1917
    %2084 = vmatprep.subr.bf16.mxu0 %v1926
    %2085 = vmatpush1.bf16.msra.mxu0 %v1925
    %2086 = vmatprep.subr.bf16.mxu0 %v1934
    %2087 = vmatpush1.bf16.msra.mxu0 %v1933
    %2088 = vmatprep.subr.bf16.mxu0 %v1942
    %2089 = vmatpush1.bf16.msra.mxu0 %v1941
    %2090 = vmatprep.subr.bf16.mxu0 %v1950
    %2091 = vmatpush1.bf16.msra.mxu0 %v1949
    %2092 = vmatprep.subr.bf16.mxu0 %v1958
    %2093 = vmatpush1.bf16.msra.mxu0 %v1957
    %2094 = vmatprep.subr.bf16.mxu0 0
    %2095 = vmatpush1.bf16.msra.mxu0 0
    %2096 = vmatprep.subr.bf16.mxu0 0
    %2097 = vmatpush1.bf16.msra.mxu0 0
    %2098 = vmatprep.subr.bf16.mxu0 0
    %2099 = vmatpush1.bf16.msra.mxu0 0
    %2100 = vmatprep.subr.bf16.mxu0 0
    %2101 = vmatpush1.bf16.msra.mxu0 0
    %2102 = vmatprep.subr.bf16.mxu0 0
    %2103 = vmatpush1.bf16.msra.mxu0 0
    %2104 = vmatprep.subr.bf16.mxu0 0
    %2105 = vmatpush1.bf16.msra.mxu0 0
    %2106 = vmatprep.subr.bf16.mxu0 0
    %2107 = vmatpush1.bf16.msra.mxu0 0
    %2108 = vmatprep.subr.bf16.mxu0 0
    %2109 = vmatpush1.bf16.msra.mxu0 0
    %2110 = vmatprep.mubr.bf16.mxu0 0
    %2111 = vmatmul.mubr.bf16.gmra.mrb[0].mxu0 %v1599
    %v2112 = vpop.f32.mrb[0].mxu0
    %v2113 = vadd.f32 %v1678, %v2112
    %v2114 = vpop.f32.mrb[0].mxu0
    %v2115 = vadd.f32 %v1682, %v2114
    %v2116 = vpop.f32.mrb[0].mxu0
    %v2117 = vadd.f32 %v1678, %v2116
    %v2118 = vpop.f32.mrb[0].mxu0
    %v2119 = vadd.f32 %v1682, %v2118
    %2120 = vmatprep.mubr.bf16.mxu0 0
    %2121 = vmatmul.mubr.bf16.gmra.mrb[0].mxu0 %v1600
    %v2122 = vpop.f32.mrb[0].mxu0
    %v2123 = vadd.f32 %v1678, %v2122
    %v2124 = vpop.f32.mrb[0].mxu0
    %v2125 = vadd.f32 %v1682, %v2124
    %v2126 = vpop.f32.mrb[0].mxu0
    %v2127 = vpop.f32.mrb[0].mxu0
    %2128 = vdwg.mxu0
    %2129 = vmatprep.subr.bf16.mxu0 %v1904
    %2130 = vmatpush1.bf16.msra.mxu0 %v1903
    %2131 = vmatprep.subr.bf16.mxu0 %v1912
    %2132 = vmatpush1.bf16.msra.mxu0 %v1911
    %2133 = vmatprep.subr.bf16.mxu0 %v1920
    %2134 = vmatpush1.bf16.msra.mxu0 %v1919
    %2135 = vmatprep.subr.bf16.mxu0 %v1928
    %2136 = vmatpush1.bf16.msra.mxu0 %v1927
    %2137 = vmatprep.subr.bf16.mxu0 %v1936
    %2138 = vmatpush1.bf16.msra.mxu0 %v1935
    %2139 = vmatprep.subr.bf16.mxu0 %v1944
    %2140 = vmatpush1.bf16.msra.mxu0 %v1943
    %2141 = vmatprep.subr.bf16.mxu0 %v1952
    %2142 = vmatpush1.bf16.msra.mxu0 %v1951
    %2143 = vmatprep.subr.bf16.mxu0 %v1960
    %2144 = vmatpush1.bf16.msra.mxu0 %v1959
    %2145 = vmatprep.subr.bf16.mxu0 0
    %2146 = vmatpush1.bf16.msra.mxu0 0
    %2147 = vmatprep.subr.bf16.mxu0 0
    %2148 = vmatpush1.bf16.msra.mxu0 0
    %2149 = vmatprep.subr.bf16.mxu0 0
    %2150 = vmatpush1.bf16.msra.mxu0 0
    %2151 = vmatprep.subr.bf16.mxu0 0
    %2152 = vmatpush1.bf16.msra.mxu0 0
    %2153 = vmatprep.subr.bf16.mxu0 0
    %2154 = vmatpush1.bf16.msra.mxu0 0
    %2155 = vmatprep.subr.bf16.mxu0 0
    %2156 = vmatpush1.bf16.msra.mxu0 0
    %2157 = vmatprep.subr.bf16.mxu0 0
    %2158 = vmatpush1.bf16.msra.mxu0 0
    %2159 = vmatprep.subr.bf16.mxu0 0
    %2160 = vmatpush1.bf16.msra.mxu0 0
    %2161 = vmatprep.mubr.bf16.mxu0 0
    %2162 = vmatmul.mubr.bf16.gmra.mrb[0].mxu0 %v1599
    %v2163 = vpop.f32.mrb[0].mxu0
    %v2164 = vadd.f32 %v1686, %v2163
    %v2165 = vpop.f32.mrb[0].mxu0
    %v2166 = vadd.f32 %v1690, %v2165
    %v2167 = vpop.f32.mrb[0].mxu0
    %v2168 = vadd.f32 %v1686, %v2167
    %v2169 = vpop.f32.mrb[0].mxu0
    %v2170 = vadd.f32 %v1690, %v2169
    %2171 = vmatprep.mubr.bf16.mxu0 0
    %2172 = vmatmul.mubr.bf16.gmra.mrb[0].mxu0 %v1600
    %v2173 = vpop.f32.mrb[0].mxu0
    %v2174 = vadd.f32 %v1686, %v2173
    %v2175 = vpop.f32.mrb[0].mxu0
    %v2176 = vadd.f32 %v1690, %v2175
    %v2177 = vpop.f32.mrb[0].mxu0
    %v2178 = vpop.f32.mrb[0].mxu0
    %2179 = vdwg.mxu0
    %2180 = vmatprep.subr.bf16.mxu0 %v1906
    %2181 = vmatpush1.bf16.msra.mxu0 %v1905
    %2182 = vmatprep.subr.bf16.mxu0 %v1914
    %2183 = vmatpush1.bf16.msra.mxu0 %v1913
    %2184 = vmatprep.subr.bf16.mxu0 %v1922
    %2185 = vmatpush1.bf16.msra.mxu0 %v1921
    %2186 = vmatprep.subr.bf16.mxu0 %v1930
    %2187 = vmatpush1.bf16.msra.mxu0 %v1929
    %2188 = vmatprep.subr.bf16.mxu0 %v1938
    %2189 = vmatpush1.bf16.msra.mxu0 %v1937
    %2190 = vmatprep.subr.bf16.mxu0 %v1946
    %2191 = vmatpush1.bf16.msra.mxu0 %v1945
    %2192 = vmatprep.subr.bf16.mxu0 %v1954
    %2193 = vmatpush1.bf16.msra.mxu0 %v1953
    %2194 = vmatprep.subr.bf16.mxu0 %v1962
    %2195 = vmatpush1.bf16.msra.mxu0 %v1961
    %2196 = vmatprep.subr.bf16.mxu0 0
    %2197 = vmatpush1.bf16.msra.mxu0 0
    %2198 = vmatprep.subr.bf16.mxu0 0
    %2199 = vmatpush1.bf16.msra.mxu0 0
    %2200 = vmatprep.subr.bf16.mxu0 0
    %2201 = vmatpush1.bf16.msra.mxu0 0
    %2202 = vmatprep.subr.bf16.mxu0 0
    %2203 = vmatpush1.bf16.msra.mxu0 0
    %2204 = vmatprep.subr.bf16.mxu0 0
    %2205 = vmatpush1.bf16.msra.mxu0 0
    %2206 = vmatprep.subr.bf16.mxu0 0
    %2207 = vmatpush1.bf16.msra.mxu0 0
    %2208 = vmatprep.subr.bf16.mxu0 0
    %2209 = vmatpush1.bf16.msra.mxu0 0
    %2210 = vmatprep.subr.bf16.mxu0 0
    %2211 = vmatpush1.bf16.msra.mxu0 0
    %2212 = vmatprep.mubr.bf16.mxu0 0
    %2213 = vmatmul.mubr.bf16.gmra.mrb[0].mxu0 %v1599
    %v2214 = vpop.f32.mrb[0].mxu0
    %v2215 = vadd.f32 %v1694, %v2214
    %v2216 = vpop.f32.mrb[0].mxu0
    %v2217 = vadd.f32 %v1698, %v2216
    %v2218 = vpop.f32.mrb[0].mxu0
    %v2219 = vadd.f32 %v1694, %v2218
    %v2220 = vpop.f32.mrb[0].mxu0
    %v2221 = vadd.f32 %v1698, %v2220
    %2222 = vmatprep.mubr.bf16.mxu0 0
    %2223 = vmatmul.mubr.bf16.gmra.mrb[0].mxu0 %v1600
    %v2224 = vpop.f32.mrb[0].mxu0
    %v2225 = vadd.f32 %v1694, %v2224
    %v2226 = vpop.f32.mrb[0].mxu0
    %v2227 = vadd.f32 %v1698, %v2226
    %v2228 = vpop.f32.mrb[0].mxu0
    %v2229 = vpop.f32.mrb[0].mxu0
    %2230 = vdwg.mxu0
    %v2233 = vrot.slane %v2066, 2
    %v2234 = vrot.slane %v2068, 2
    %v2239 = vrot.slane %v2117, 2
    %v2240 = vrot.slane %v2119, 2
    %v2243 = vrot.slane %v2168, 2
    %v2244 = vrot.slane %v2170, 2
    %v2247 = vrot.slane %v2219, 2
    %v2248 = vrot.slane %v2221, 2
    %v2251 = vrot.slane %v2113, 7
    %v2252 = vrot.slane %v2115, 7
    %v2253 = vrot.slane %v2239, 7
    %v2254 = vrot.slane %v2240, 7
    %v2261 = vrot.slane %v2164, 6
    %v2262 = vrot.slane %v2166, 6
    %v2263 = vrot.slane %v2243, 6
    %v2264 = vrot.slane %v2244, 6
    %v2271 = vrot.slane %v2215, 5
    %v2272 = vrot.slane %v2217, 5
    %v2273 = vrot.slane %v2247, 5
    %v2274 = vrot.slane %v2248, 5
    %vm2279 = vcmask 1040384
    %v2280 = vsel %vm2279, %v2062, %v2251
    %v2281 = vsel %vm2279, %v2064, %v2252
    %v2282 = vsel %vm2279, %v2233, %v2253
    %v2283 = vsel %vm2279, %v2234, %v2254
    %v2284 = vsel %vm237, %v2280, %v2261
    %v2285 = vsel %vm237, %v2281, %v2262
    %v2286 = vsel %vm237, %v2282, %v2263
    %v2287 = vsel %vm237, %v2283, %v2264
    %vm2288 = vcmask 1042432
    %v2289 = vsel %vm2288, %v2284, %v2271
    %v2290 = vsel %vm2288, %v2285, %v2272
    %v2291 = vsel %vm2288, %v2286, %v2273
    %v2292 = vsel %vm2288, %v2287, %v2274
    %2293 = vst [vmem:[#allocation3] sm:$0xf] %v2289
    %2294 = vst [vmem:[#allocation3 + $0x8] sm:$0xf] %v2290
    %2295 = vst [vmem:[#allocation3 + $0x10] sm:$0xf] %v2291
    %2296 = vst [vmem:[#allocation3 + $0x18] sm:$0xf] %v2292
    %v2301 = vrot.slane %v2062, 2
    %v2302 = vrot.slane %v2064, 2
    %v2303 = vrot.slane %v2233, 2
    %v2304 = vrot.slane %v2234, 2
    %v2309 = vrot.slane %v2113, 1
    %v2310 = vrot.slane %v2115, 1
    %v2311 = vrot.slane %v2239, 1
    %v2312 = vrot.slane %v2240, 1
    %v2317 = vrot.slane %v2215, 7
    %v2318 = vrot.slane %v2217, 7
    %v2319 = vrot.slane %v2247, 7
    %v2320 = vrot.slane %v2248, 7
    %v2325 = vsel %vm2279, %v2301, %v2309
    %v2326 = vsel %vm2279, %v2302, %v2310
    %v2327 = vsel %vm2279, %v2303, %v2311
    %v2328 = vsel %vm2279, %v2304, %v2312
    %v2329 = vsel %vm237, %v2325, %v2164
    %v2330 = vsel %vm237, %v2326, %v2166
    %v2331 = vsel %vm237, %v2327, %v2243
    %v2332 = vsel %vm237, %v2328, %v2244
    %v2333 = vsel %vm2288, %v2329, %v2317
    %v2334 = vsel %vm2288, %v2330, %v2318
    %v2335 = vsel %vm2288, %v2331, %v2319
    %v2336 = vsel %vm2288, %v2332, %v2320
    %v2341 = vrot.slane %v2333, 4
    %v2342 = vrot.slane %v2334, 4
    %v2343 = vrot.slane %v2335, 4
    %v2344 = vrot.slane %v2336, 4
    %2349 = vst [vmem:[#allocation3] sm:$0xf0] %v2341
    %2350 = vst [vmem:[#allocation3 + $0x8] sm:$0xf0] %v2342
    %2351 = vst [vmem:[#allocation3 + $0x10] sm:$0xf0] %v2343
    %2352 = vst [vmem:[#allocation3 + $0x18] sm:$0xf0] %v2344
    %v2353 = vrot.slane %v2062, 4
    %v2354 = vrot.slane %v2064, 4
    %v2355 = vrot.slane %v2233, 4
    %v2356 = vrot.slane %v2234, 4
    %v2361 = vrot.slane %v2113, 3
    %v2362 = vrot.slane %v2115, 3
    %v2363 = vrot.slane %v2239, 3
    %v2364 = vrot.slane %v2240, 3
    %v2369 = vrot.slane %v2164, 2
    %v2370 = vrot.slane %v2166, 2
    %v2371 = vrot.slane %v2243, 2
    %v2372 = vrot.slane %v2244, 2
    %v2377 = vrot.slane %v2215, 1
    %v2378 = vrot.slane %v2217, 1
    %v2379 = vrot.slane %v2247, 1
    %v2380 = vrot.slane %v2248, 1
    %v2385 = vsel %vm2279, %v2353, %v2361
    %v2386 = vsel %vm2279, %v2354, %v2362
    %v2387 = vsel %vm2279, %v2355, %v2363
    %v2388 = vsel %vm2279, %v2356, %v2364
    %v2389 = vsel %vm237, %v2385, %v2369
    %v2390 = vsel %vm237, %v2386, %v2370
    %v2391 = vsel %vm237, %v2387, %v2371
    %v2392 = vsel %vm237, %v2388, %v2372
    %v2393 = vsel %vm2288, %v2389, %v2377
    %v2394 = vsel %vm2288, %v2390, %v2378
    %v2395 = vsel %vm2288, %v2391, %v2379
    %v2396 = vsel %vm2288, %v2392, %v2380
    %2397 = vst [vmem:[#allocation3 + $0x20] sm:$0xf] %v2393
    %2398 = vst [vmem:[#allocation3 + $0x28] sm:$0xf] %v2394
    %2399 = vst [vmem:[#allocation3 + $0x30] sm:$0xf] %v2395
    %2400 = vst [vmem:[#allocation3 + $0x38] sm:$0xf] %v2396
    %v2403 = vrot.slane %v2072, 2
    %v2404 = vrot.slane %v2074, 2
    %v2407 = vrot.slane %v2123, 2
    %v2408 = vrot.slane %v2125, 2
    %v2411 = vrot.slane %v2174, 2
    %v2412 = vrot.slane %v2176, 2
    %v2415 = vrot.slane %v2225, 2
    %v2416 = vrot.slane %v2227, 2
    %v2417 = vrot.slane %v2062, 6
    %v2418 = vrot.slane %v2064, 6
    %v2419 = vrot.slane %v2403, 6
    %v2420 = vrot.slane %v2404, 6
    %v2425 = vrot.slane %v2113, 5
    %v2426 = vrot.slane %v2115, 5
    %v2427 = vrot.slane %v2407, 5
    %v2428 = vrot.slane %v2408, 5
    %v2433 = vrot.slane %v2164, 4
    %v2434 = vrot.slane %v2166, 4
    %v2435 = vrot.slane %v2411, 4
    %v2436 = vrot.slane %v2412, 4
    %v2441 = vrot.slane %v2215, 3
    %v2442 = vrot.slane %v2217, 3
    %v2443 = vrot.slane %v2415, 3
    %v2444 = vrot.slane %v2416, 3
    %v2449 = vsel %vm2279, %v2417, %v2425
    %v2450 = vsel %vm2279, %v2418, %v2426
    %v2451 = vsel %vm2279, %v2419, %v2427
    %v2452 = vsel %vm2279, %v2420, %v2428
    %v2453 = vsel %vm237, %v2449, %v2433
    %v2454 = vsel %vm237, %v2450, %v2434
    %v2455 = vsel %vm237, %v2451, %v2435
    %v2456 = vsel %vm237, %v2452, %v2436
    %v2457 = vsel %vm2288, %v2453, %v2441
    %v2458 = vsel %vm2288, %v2454, %v2442
    %v2459 = vsel %vm2288, %v2455, %v2443
    %v2460 = vsel %vm2288, %v2456, %v2444
    %v2465 = vrot.slane %v2457, 4
    %v2466 = vrot.slane %v2458, 4
    %v2467 = vrot.slane %v2459, 4
    %v2468 = vrot.slane %v2460, 4
    %2473 = vst [vmem:[#allocation3 + $0x20] sm:$0xf0] %v2465
    %2474 = vst [vmem:[#allocation3 + $0x28] sm:$0xf0] %v2466
    %2475 = vst [vmem:[#allocation3 + $0x30] sm:$0xf0] %v2467
    %2476 = vst [vmem:[#allocation3 + $0x38] sm:$0xf0] %v2468
    %v2479 = vrot.slane %v2117, 7
    %v2480 = vrot.slane %v2119, 7
    %v2481 = vrot.slane %v2407, 7
    %v2482 = vrot.slane %v2408, 7
    %v2487 = vrot.slane %v2168, 6
    %v2488 = vrot.slane %v2170, 6
    %v2489 = vrot.slane %v2411, 6
    %v2490 = vrot.slane %v2412, 6
    %v2495 = vrot.slane %v2219, 5
    %v2496 = vrot.slane %v2221, 5
    %v2497 = vrot.slane %v2415, 5
    %v2498 = vrot.slane %v2416, 5
    %v2503 = vsel %vm2279, %v2066, %v2479
    %v2504 = vsel %vm2279, %v2068, %v2480
    %v2505 = vsel %vm2279, %v2403, %v2481
    %v2506 = vsel %vm2279, %v2404, %v2482
    %v2507 = vsel %vm237, %v2503, %v2487
    %v2508 = vsel %vm237, %v2504, %v2488
    %v2509 = vsel %vm237, %v2505, %v2489
    %v2510 = vsel %vm237, %v2506, %v2490
    %v2511 = vsel %vm2288, %v2507, %v2495
    %v2512 = vsel %vm2288, %v2508, %v2496
    %v2513 = vsel %vm2288, %v2509, %v2497
    %v2514 = vsel %vm2288, %v2510, %v2498
    %2515 = vst [vmem:[#allocation3 + $0x40] sm:$0xf] %v2511
    %2516 = vst [vmem:[#allocation3 + $0x48] sm:$0xf] %v2512
    %2517 = vst [vmem:[#allocation3 + $0x50] sm:$0xf] %v2513
    %2518 = vst [vmem:[#allocation3 + $0x58] sm:$0xf] %v2514
    %v2519 = vld [vmem:[%s11] sm:$0xf]
    %v2520 = vlaneseq
    %vm2521 = vcmp.ge.s32.totalorder %v2520, 0
    %vm2522 = vcmp.lt.s32.totalorder %v2520, 512
    %vm2523 = vmand %vm2521, %vm2522
    %s2524 = scalar_lea.vmem [#allocation3], 68
    %2525 = vst.msk [vmem:[%s2524] ss:$8 sm:$0xf] %vm2523, %v2519
    %2526 = vst.msk [vmem:[%s2524] ss:$8 sm:$0x0] %vm2523, %v2519
    %2527 = vst [vmem:[#allocation3 + $0x40] sm:$0xe0] 0.0
    %2528 = vst [vmem:[#allocation3 + $0x48] sm:$0xe0] 0.0
    %2529 = vst [vmem:[#allocation3 + $0x50] sm:$0xe0] 0.0
    %2530 = vst [vmem:[#allocation3 + $0x58] sm:$0xe0] 0.0
    %v2533 = vrot.slane %v2062, 1
    %v2534 = vrot.slane %v2064, 1
    %v2535 = vrot.slane %v2233, 1
    %v2536 = vrot.slane %v2234, 1
    %v2541 = vrot.slane %v2164, 7
    %v2542 = vrot.slane %v2166, 7
    %v2543 = vrot.slane %v2243, 7
    %v2544 = vrot.slane %v2244, 7
    %v2549 = vrot.slane %v2215, 6
    %v2550 = vrot.slane %v2217, 6
    %v2551 = vrot.slane %v2247, 6
    %v2552 = vrot.slane %v2248, 6
    %v2557 = vsel %vm2279, %v2533, %v2113
    %v2558 = vsel %vm2279, %v2534, %v2115
    %v2559 = vsel %vm2279, %v2535, %v2239
    %v2560 = vsel %vm2279, %v2536, %v2240
    %v2561 = vsel %vm237, %v2557, %v2541
    %v2562 = vsel %vm237, %v2558, %v2542
    %v2563 = vsel %vm237, %v2559, %v2543
    %v2564 = vsel %vm237, %v2560, %v2544
    %v2565 = vsel %vm2288, %v2561, %v2549
    %v2566 = vsel %vm2288, %v2562, %v2550
    %v2567 = vsel %vm2288, %v2563, %v2551
    %v2568 = vsel %vm2288, %v2564, %v2552
    %2569 = vst [vmem:[#allocation3 + $0x60] sm:$0xf] %v2565
    %2570 = vst [vmem:[#allocation3 + $0x68] sm:$0xf] %v2566
    %2571 = vst [vmem:[#allocation3 + $0x70] sm:$0xf] %v2567
    %2572 = vst [vmem:[#allocation3 + $0x78] sm:$0xf] %v2568
    %v2575 = vrot.slane %v2062, 3
    %v2576 = vrot.slane %v2064, 3
    %v2577 = vrot.slane %v2233, 3
    %v2578 = vrot.slane %v2234, 3
    %v2583 = vrot.slane %v2113, 2
    %v2584 = vrot.slane %v2115, 2
    %v2585 = vrot.slane %v2239, 2
    %v2586 = vrot.slane %v2240, 2
    %v2591 = vrot.slane %v2164, 1
    %v2592 = vrot.slane %v2166, 1
    %v2593 = vrot.slane %v2243, 1
    %v2594 = vrot.slane %v2244, 1
    %v2599 = vsel %vm2279, %v2575, %v2583
    %v2600 = vsel %vm2279, %v2576, %v2584
    %v2601 = vsel %vm2279, %v2577, %v2585
    %v2602 = vsel %vm2279, %v2578, %v2586
    %v2603 = vsel %vm237, %v2599, %v2591
    %v2604 = vsel %vm237, %v2600, %v2592
    %v2605 = vsel %vm237, %v2601, %v2593
    %v2606 = vsel %vm237, %v2602, %v2594
    %v2607 = vsel %vm2288, %v2603, %v2215
    %v2608 = vsel %vm2288, %v2604, %v2217
    %v2609 = vsel %vm2288, %v2605, %v2247
    %v2610 = vsel %vm2288, %v2606, %v2248
    %v2615 = vrot.slane %v2607, 4
    %v2616 = vrot.slane %v2608, 4
    %v2617 = vrot.slane %v2609, 4
    %v2618 = vrot.slane %v2610, 4
    %2623 = vst [vmem:[#allocation3 + $0x60] sm:$0xf0] %v2615
    %2624 = vst [vmem:[#allocation3 + $0x68] sm:$0xf0] %v2616
    %2625 = vst [vmem:[#allocation3 + $0x70] sm:$0xf0] %v2617
    %2626 = vst [vmem:[#allocation3 + $0x78] sm:$0xf0] %v2618
    %v2627 = vrot.slane %v2062, 5
    %v2628 = vrot.slane %v2064, 5
    %v2629 = vrot.slane %v2233, 5
    %v2630 = vrot.slane %v2234, 5
    %v2635 = vrot.slane %v2113, 4
    %v2636 = vrot.slane %v2115, 4
    %v2637 = vrot.slane %v2239, 4
    %v2638 = vrot.slane %v2240, 4
    %v2643 = vrot.slane %v2164, 3
    %v2644 = vrot.slane %v2166, 3
    %v2645 = vrot.slane %v2243, 3
    %v2646 = vrot.slane %v2244, 3
    %v2651 = vrot.slane %v2215, 2
    %v2652 = vrot.slane %v2217, 2
    %v2653 = vrot.slane %v2247, 2
    %v2654 = vrot.slane %v2248, 2
    %v2659 = vsel %vm2279, %v2627, %v2635
    %v2660 = vsel %vm2279, %v2628, %v2636
    %v2661 = vsel %vm2279, %v2629, %v2637
    %v2662 = vsel %vm2279, %v2630, %v2638
    %v2663 = vsel %vm237, %v2659, %v2643
    %v2664 = vsel %vm237, %v2660, %v2644
    %v2665 = vsel %vm237, %v2661, %v2645
    %v2666 = vsel %vm237, %v2662, %v2646
    %v2667 = vsel %vm2288, %v2663, %v2651
    %v2668 = vsel %vm2288, %v2664, %v2652
    %v2669 = vsel %vm2288, %v2665, %v2653
    %v2670 = vsel %vm2288, %v2666, %v2654
    %2671 = vst [vmem:[#allocation3 + $0x80] sm:$0xf] %v2667
    %2672 = vst [vmem:[#allocation3 + $0x88] sm:$0xf] %v2668
    %2673 = vst [vmem:[#allocation3 + $0x90] sm:$0xf] %v2669
    %2674 = vst [vmem:[#allocation3 + $0x98] sm:$0xf] %v2670
    %v2675 = vrot.slane %v2062, 7
    %v2676 = vrot.slane %v2064, 7
    %v2677 = vrot.slane %v2403, 7
    %v2678 = vrot.slane %v2404, 7
    %v2683 = vrot.slane %v2113, 6
    %v2684 = vrot.slane %v2115, 6
    %v2685 = vrot.slane %v2407, 6
    %v2686 = vrot.slane %v2408, 6
    %v2691 = vrot.slane %v2164, 5
    %v2692 = vrot.slane %v2166, 5
    %v2693 = vrot.slane %v2411, 5
    %v2694 = vrot.slane %v2412, 5
    %v2699 = vrot.slane %v2215, 4
    %v2700 = vrot.slane %v2217, 4
    %v2701 = vrot.slane %v2415, 4
    %v2702 = vrot.slane %v2416, 4
    %v2707 = vsel %vm2279, %v2675, %v2683
    %v2708 = vsel %vm2279, %v2676, %v2684
    %v2709 = vsel %vm2279, %v2677, %v2685
    %v2710 = vsel %vm2279, %v2678, %v2686
    %v2711 = vsel %vm237, %v2707, %v2691
    %v2712 = vsel %vm237, %v2708, %v2692
    %v2713 = vsel %vm237, %v2709, %v2693
    %v2714 = vsel %vm237, %v2710, %v2694
    %v2715 = vsel %vm2288, %v2711, %v2699
    %v2716 = vsel %vm2288, %v2712, %v2700
    %v2717 = vsel %vm2288, %v2713, %v2701
    %v2718 = vsel %vm2288, %v2714, %v2702
    %v2723 = vrot.slane %v2715, 4
    %v2724 = vrot.slane %v2716, 4
    %v2725 = vrot.slane %v2717, 4
    %v2726 = vrot.slane %v2718, 4
    %2731 = vst [vmem:[#allocation3 + $0x80] sm:$0xf0] %v2723
    %2732 = vst [vmem:[#allocation3 + $0x88] sm:$0xf0] %v2724
    %2733 = vst [vmem:[#allocation3 + $0x90] sm:$0xf0] %v2725
    %2734 = vst [vmem:[#allocation3 + $0x98] sm:$0xf0] %v2726
    %v2737 = vrot.slane %v2066, 1
    %v2738 = vrot.slane %v2068, 1
    %v2739 = vrot.slane %v2403, 1
    %v2740 = vrot.slane %v2404, 1
    %v2745 = vrot.slane %v2168, 7
    %v2746 = vrot.slane %v2170, 7
    %v2747 = vrot.slane %v2411, 7
    %v2748 = vrot.slane %v2412, 7
    %v2753 = vrot.slane %v2219, 6
    %v2754 = vrot.slane %v2221, 6
    %v2755 = vrot.slane %v2415, 6
    %v2756 = vrot.slane %v2416, 6
    %v2761 = vsel %vm2279, %v2737, %v2117
    %v2762 = vsel %vm2279, %v2738, %v2119
    %v2763 = vsel %vm2279, %v2739, %v2407
    %v2764 = vsel %vm2279, %v2740, %v2408
    %v2765 = vsel %vm237, %v2761, %v2745
    %v2766 = vsel %vm237, %v2762, %v2746
    %v2767 = vsel %vm237, %v2763, %v2747
    %v2768 = vsel %vm237, %v2764, %v2748
    %v2769 = vsel %vm2288, %v2765, %v2753
    %v2770 = vsel %vm2288, %v2766, %v2754
    %v2771 = vsel %vm2288, %v2767, %v2755
    %v2772 = vsel %vm2288, %v2768, %v2756
    %2773 = vst [vmem:[#allocation3 + $0xa0] sm:$0xf] %v2769
    %2774 = vst [vmem:[#allocation3 + $0xa8] sm:$0xf] %v2770
    %2775 = vst [vmem:[#allocation3 + $0xb0] sm:$0xf] %v2771
    %2776 = vst [vmem:[#allocation3 + $0xb8] sm:$0xf] %v2772
    %v2777 = vld [vmem:[%s11] sm:$0xf]
    %s2778 = scalar_lea.vmem [#allocation3], 164
    %2779 = vst.msk [vmem:[%s2778] ss:$8 sm:$0xf] %vm2523, %v2777
    %2780 = vst.msk [vmem:[%s2778] ss:$8 sm:$0x0] %vm2523, %v2777
    %2781 = vst [vmem:[#allocation3 + $0xa0] sm:$0xe0] 0.0
    %2782 = vst [vmem:[#allocation3 + $0xa8] sm:$0xe0] 0.0
    %2783 = vst [vmem:[#allocation3 + $0xb0] sm:$0xe0] 0.0
    %2784 = vst [vmem:[#allocation3 + $0xb8] sm:$0xe0] 0.0
    %v2785 = vld [vmem:[#allocation3] sm:$0xff]
    %v2786 = vld [vmem:[#allocation3 + $0x8] sm:$0xff]
    %v2787 = vld [vmem:[#allocation3 + $0x10] sm:$0xff]
    %v2788 = vld [vmem:[#allocation3 + $0x18] sm:$0xff]
    %v2789 = vld [vmem:[#allocation3 + $0x20] sm:$0xff]
    %v2790 = vld [vmem:[#allocation3 + $0x28] sm:$0xff]
    %v2791 = vld [vmem:[#allocation3 + $0x30] sm:$0xff]
    %v2792 = vld [vmem:[#allocation3 + $0x38] sm:$0xff]
    %v2793 = vld [vmem:[#allocation3 + $0x40] sm:$0xff]
    %v2794 = vld [vmem:[#allocation3 + $0x48] sm:$0xff]
    %v2795 = vld [vmem:[#allocation3 + $0x50] sm:$0xff]
    %v2796 = vld [vmem:[#allocation3 + $0x58] sm:$0xff]
    %v2797 = vld [vmem:[#allocation3 + $0x60] sm:$0xff]
    %v2798 = vld [vmem:[#allocation3 + $0x68] sm:$0xff]
    %v2799 = vld [vmem:[#allocation3 + $0x70] sm:$0xff]
    %v2800 = vld [vmem:[#allocation3 + $0x78] sm:$0xff]
    %v2801 = vld [vmem:[#allocation3 + $0x80] sm:$0xff]
    %v2802 = vld [vmem:[#allocation3 + $0x88] sm:$0xff]
    %v2803 = vld [vmem:[#allocation3 + $0x90] sm:$0xff]
    %v2804 = vld [vmem:[#allocation3 + $0x98] sm:$0xff]
    %v2805 = vld [vmem:[#allocation3 + $0xa0] sm:$0xff]
    %v2806 = vld [vmem:[#allocation3 + $0xa8] sm:$0xff]
    %v2807 = vld [vmem:[#allocation3 + $0xb0] sm:$0xff]
    %v2808 = vld [vmem:[#allocation3 + $0xb8] sm:$0xff]
    %v2809 = vadd.f32 %v2785, %v2789
    %v2810 = vadd.f32 %v2809, %v2793
    %v2811 = vadd.f32 %v2810, %v2797
    %v2812 = vadd.f32 %v2811, %v2801
    %v2813 = vadd.f32 %v2812, %v2805
    %v2814 = vrot.slane %v2813, 4
    %v2815 = vadd.f32 %v2813, %v2814
    %v2816 = vrot.slane %v2815, 2
    %v2817 = vadd.f32 %v2815, %v2816
    %v2818 = vrot.slane %v2817, 1
    %v2819 = vadd.f32 %v2817, %v2818
    %v2820 = vadd.f32 %v2786, %v2790
    %v2821 = vadd.f32 %v2820, %v2794
    %v2822 = vadd.f32 %v2821, %v2798
    %v2823 = vadd.f32 %v2822, %v2802
    %v2824 = vadd.f32 %v2823, %v2806
    %v2825 = vrot.slane %v2824, 4
    %v2826 = vadd.f32 %v2824, %v2825
    %v2827 = vrot.slane %v2826, 2
    %v2828 = vadd.f32 %v2826, %v2827
    %v2829 = vrot.slane %v2828, 1
    %v2830 = vadd.f32 %v2828, %v2829
    %v2831 = vadd.f32 %v2787, %v2791
    %v2832 = vadd.f32 %v2831, %v2795
    %v2833 = vadd.f32 %v2832, %v2799
    %v2834 = vadd.f32 %v2833, %v2803
    %v2835 = vadd.f32 %v2834, %v2807
    %v2836 = vrot.slane %v2835, 4
    %v2837 = vadd.f32 %v2835, %v2836
    %v2838 = vrot.slane %v2837, 2
    %v2839 = vadd.f32 %v2837, %v2838
    %v2840 = vrot.slane %v2839, 1
    %v2841 = vadd.f32 %v2839, %v2840
    %v2842 = vadd.f32 %v2788, %v2792
    %v2843 = vadd.f32 %v2842, %v2796
    %v2844 = vadd.f32 %v2843, %v2800
    %v2845 = vadd.f32 %v2844, %v2804
    %v2846 = vadd.f32 %v2845, %v2808
    %v2847 = vrot.slane %v2846, 4
    %v2848 = vadd.f32 %v2846, %v2847
    %v2849 = vrot.slane %v2848, 2
    %v2850 = vadd.f32 %v2848, %v2849
    %v2851 = vrot.slane %v2850, 1
    %v2852 = vadd.f32 %v2850, %v2851
    %v2853 = vmul.f32 %v2785, %v2785
    %v2854 = vmul.f32 %v2786, %v2786
    %v2855 = vmul.f32 %v2787, %v2787
    %v2856 = vmul.f32 %v2788, %v2788
    %v2857 = vmul.f32 %v2789, %v2789
    %v2858 = vmul.f32 %v2790, %v2790
    %v2859 = vmul.f32 %v2791, %v2791
    %v2860 = vmul.f32 %v2792, %v2792
    %v2861 = vmul.f32 %v2793, %v2793
    %v2862 = vmul.f32 %v2794, %v2794
    %v2863 = vmul.f32 %v2795, %v2795
    %v2864 = vmul.f32 %v2796, %v2796
    %v2865 = vmul.f32 %v2797, %v2797
    %v2866 = vmul.f32 %v2798, %v2798
    %v2867 = vmul.f32 %v2799, %v2799
    %v2868 = vmul.f32 %v2800, %v2800
    %v2869 = vmul.f32 %v2801, %v2801
    %v2870 = vmul.f32 %v2802, %v2802
    %v2871 = vmul.f32 %v2803, %v2803
    %v2872 = vmul.f32 %v2804, %v2804
    %v2873 = vmul.f32 %v2805, %v2805
    %v2874 = vmul.f32 %v2806, %v2806
    %v2875 = vmul.f32 %v2807, %v2807
    %v2876 = vmul.f32 %v2808, %v2808
    %v2877 = vadd.f32 %v2853, %v2857
    %v2878 = vadd.f32 %v2877, %v2861
    %v2879 = vadd.f32 %v2878, %v2865
    %v2880 = vadd.f32 %v2879, %v2869
    %v2881 = vadd.f32 %v2880, %v2873
    %v2882 = vrot.slane %v2881, 4
    %v2883 = vadd.f32 %v2881, %v2882
    %v2884 = vrot.slane %v2883, 2
    %v2885 = vadd.f32 %v2883, %v2884
    %v2886 = vrot.slane %v2885, 1
    %v2887 = vadd.f32 %v2885, %v2886
    %v2888 = vadd.f32 %v2854, %v2858
    %v2889 = vadd.f32 %v2888, %v2862
    %v2890 = vadd.f32 %v2889, %v2866
    %v2891 = vadd.f32 %v2890, %v2870
    %v2892 = vadd.f32 %v2891, %v2874
    %v2893 = vrot.slane %v2892, 4
    %v2894 = vadd.f32 %v2892, %v2893
    %v2895 = vrot.slane %v2894, 2
    %v2896 = vadd.f32 %v2894, %v2895
    %v2897 = vrot.slane %v2896, 1
    %v2898 = vadd.f32 %v2896, %v2897
    %v2899 = vadd.f32 %v2855, %v2859
    %v2900 = vadd.f32 %v2899, %v2863
    %v2901 = vadd.f32 %v2900, %v2867
    %v2902 = vadd.f32 %v2901, %v2871
    %v2903 = vadd.f32 %v2902, %v2875
    %v2904 = vrot.slane %v2903, 4
    %v2905 = vadd.f32 %v2903, %v2904
    %v2906 = vrot.slane %v2905, 2
    %v2907 = vadd.f32 %v2905, %v2906
    %v2908 = vrot.slane %v2907, 1
    %v2909 = vadd.f32 %v2907, %v2908
    %v2910 = vadd.f32 %v2856, %v2860
    %v2911 = vadd.f32 %v2910, %v2864
    %v2912 = vadd.f32 %v2911, %v2868
    %v2913 = vadd.f32 %v2912, %v2872
    %v2914 = vadd.f32 %v2913, %v2876
    %v2915 = vrot.slane %v2914, 4
    %v2916 = vadd.f32 %v2914, %v2915
    %v2917 = vrot.slane %v2916, 2
    %v2918 = vadd.f32 %v2916, %v2917
    %v2919 = vrot.slane %v2918, 1
    %v2920 = vadd.f32 %v2918, %v2919
    %v2921 = vadd.f32 %v2819, %v2841
    %v2922 = vadd.f32 %v2830, %v2852
    %v2923 = vadd.f32 %v2921, %v2922
    %2925 = vrot.lane.b32.xlu0 %v2923, 64
    %v2926 = vpop.permute.xlu0 %2925
    %v2928 = vadd.f32 %v2923, %v2926
    %v2929 = vrcp.pop 336.0
    %v2930 = vmul.f32 %v2928, %v2929
    %v2931 = vadd.f32 %v2887, %v2909
    %v2932 = vadd.f32 %v2898, %v2920
    %v2933 = vadd.f32 %v2931, %v2932
    %2935 = vrot.lane.b32.xlu0 %v2933, 64
    %v2936 = vpop.permute.xlu0 %2935
    %v2938 = vadd.f32 %v2933, %v2936
    %v2939 = vmul.f32 %v2938, %v2929
    %v2940 = vmul.f32 %v2930, %v2930
    %v2941 = vsub.f32 %v2939, %v2940
    %v2942 = vmax.f32 %v2941, 0.0
    %v2943 = vld [vmem:[%s12] sm:$0x1]
    %v2944 = vadd.f32 %v2942, 1e-05
    %v2945 = vrsqrt.pop %v2944
    %v2946 = vmul.f32 %v2943, %v2945
    %v2947 = vld [vmem:[#allocation15] sm:$0x1]
    %v2948 = vmul.f32 %v2930, %v2946
    %v2949 = vsub.f32 %v2947, %v2948
    %v2951 = vlaneseq
    %v2952 = vshrl.u32 %v2951, 7
    %v2953 = vsub.s32 0, %v2952
    %v2954 = vrot.slane %v2946, %v2953
    %2955 = vrot.lane.b32.xlu0 %v2954, 64
    %v2956 = vpop.permute.xlu0 %2955
    %vm2958 = vcmask 523264
    %v2959 = vsel %vm2958, %v2946, %v2956
    %v2961 = vlaneseq
    %v2962 = vshrl.u32 %v2961, 7
    %v2963 = vsub.s32 0, %v2962
    %v2964 = vrot.slane %v2949, %v2963
    %2965 = vrot.lane.b32.xlu0 %v2964, 64
    %v2966 = vpop.permute.xlu0 %2965
    %v2968 = vsel %vm2958, %v2949, %v2966
    %v2969 = vlaneseq
    %v2970 = vshrl.u32 %v2969, 7
    %v2971 = vsub.s32 0, %v2970
    %v2972 = vrot.slane %v2959, %v2971
    %v2973 = vmul.f32 %v2785, %v2972
    %v2974 = vmul.f32 %v2786, %v2972
    %v2975 = vmul.f32 %v2787, %v2972
    %v2976 = vmul.f32 %v2788, %v2972
    %v2977 = vmul.f32 %v2789, %v2972
    %v2978 = vmul.f32 %v2790, %v2972
    %v2979 = vmul.f32 %v2791, %v2972
    %v2980 = vmul.f32 %v2792, %v2972
    %v2981 = vmul.f32 %v2793, %v2972
    %v2982 = vmul.f32 %v2794, %v2972
    %v2983 = vmul.f32 %v2795, %v2972
    %v2984 = vmul.f32 %v2796, %v2972
    %v2985 = vmul.f32 %v2797, %v2972
    %v2986 = vmul.f32 %v2798, %v2972
    %v2987 = vmul.f32 %v2799, %v2972
    %v2988 = vmul.f32 %v2800, %v2972
    %v2989 = vmul.f32 %v2801, %v2972
    %v2990 = vmul.f32 %v2802, %v2972
    %v2991 = vmul.f32 %v2803, %v2972
    %v2992 = vmul.f32 %v2804, %v2972
    %v2993 = vmul.f32 %v2805, %v2972
    %v2994 = vmul.f32 %v2806, %v2972
    %v2995 = vmul.f32 %v2807, %v2972
    %v2996 = vmul.f32 %v2808, %v2972
    %v2997 = vlaneseq
    %v2998 = vshrl.u32 %v2997, 7
    %v2999 = vsub.s32 0, %v2998
    %v3000 = vrot.slane %v2968, %v2999
    %v3001 = vadd.f32 %v2973, %v3000
    %v3002 = vadd.f32 %v2974, %v3000
    %v3003 = vadd.f32 %v2975, %v3000
    %v3004 = vadd.f32 %v2976, %v3000
    %v3005 = vadd.f32 %v2977, %v3000
    %v3006 = vadd.f32 %v2978, %v3000
    %v3007 = vadd.f32 %v2979, %v3000
    %v3008 = vadd.f32 %v2980, %v3000
    %v3009 = vadd.f32 %v2981, %v3000
    %v3010 = vadd.f32 %v2982, %v3000
    %v3011 = vadd.f32 %v2983, %v3000
    %v3012 = vadd.f32 %v2984, %v3000
    %v3013 = vadd.f32 %v2985, %v3000
    %v3014 = vadd.f32 %v2986, %v3000
    %v3015 = vadd.f32 %v2987, %v3000
    %v3016 = vadd.f32 %v2988, %v3000
    %v3017 = vadd.f32 %v2989, %v3000
    %v3018 = vadd.f32 %v2990, %v3000
    %v3019 = vadd.f32 %v2991, %v3000
    %v3020 = vadd.f32 %v2992, %v3000
    %v3021 = vadd.f32 %v2993, %v3000
    %v3022 = vadd.f32 %v2994, %v3000
    %v3023 = vadd.f32 %v2995, %v3000
    %v3024 = vadd.f32 %v2996, %v3000
    %v3025 = vmax.f32 %v3001, 0.0
    %v3026 = vmax.f32 %v3002, 0.0
    %v3027 = vmax.f32 %v3003, 0.0
    %v3028 = vmax.f32 %v3004, 0.0
    %v3029 = vmax.f32 %v3005, 0.0
    %v3030 = vmax.f32 %v3006, 0.0
    %v3031 = vmax.f32 %v3007, 0.0
    %v3032 = vmax.f32 %v3008, 0.0
    %v3033 = vmax.f32 %v3009, 0.0
    %v3034 = vmax.f32 %v3010, 0.0
    %v3035 = vmax.f32 %v3011, 0.0
    %v3036 = vmax.f32 %v3012, 0.0
    %v3037 = vmax.f32 %v3013, 0.0
    %v3038 = vmax.f32 %v3014, 0.0
    %v3039 = vmax.f32 %v3015, 0.0
    %v3040 = vmax.f32 %v3016, 0.0
    %v3041 = vmax.f32 %v3017, 0.0
    %v3042 = vmax.f32 %v3018, 0.0
    %v3043 = vmax.f32 %v3019, 0.0
    %v3044 = vmax.f32 %v3020, 0.0
    %v3045 = vmax.f32 %v3021, 0.0
    %v3046 = vmax.f32 %v3022, 0.0
    %v3047 = vmax.f32 %v3023, 0.0
    %v3048 = vmax.f32 %v3024, 0.0
    %v3049 = vpack.c.bf16 %v3029, %v3025
    %v3050 = vpack.c.bf16 %v3030, %v3026
    %v3051 = vpack.c.bf16 %v3031, %v3027
    %v3052 = vpack.c.bf16 %v3032, %v3028
    %v3053 = vpack.c.bf16 %v3037, %v3033
    %v3054 = vpack.c.bf16 %v3038, %v3034
    %v3055 = vpack.c.bf16 %v3039, %v3035
    %v3056 = vpack.c.bf16 %v3040, %v3036
    %v3057 = vpack.c.bf16 %v3045, %v3041
    %v3058 = vpack.c.bf16 %v3046, %v3042
    %v3059 = vpack.c.bf16 %v3047, %v3043
    %v3060 = vpack.c.bf16 %v3048, %v3044
    %v3061 = vld [vmem:[#allocation17] sm:$0xff]
    %v3062 = vld [vmem:[#allocation17 + $0x8] sm:$0xff]
    %v3063 = vld [vmem:[#allocation17 + $0x10] sm:$0xff]
    %v3064 = vld [vmem:[#allocation17 + $0x18] sm:$0xff]
    %v3065 = vld [vmem:[#allocation17 + $0x20] sm:$0xff]
    %v3066 = vld [vmem:[#allocation17 + $0x28] sm:$0xff]
    %v3067 = vld [vmem:[#allocation17 + $0x30] sm:$0xff]
    %v3068 = vld [vmem:[#allocation17 + $0x38] sm:$0xff]
    %v3069 = vld [vmem:[#allocation17 + $0x40] sm:$0xff]
    %v3070 = vld [vmem:[#allocation17 + $0x48] sm:$0xff]
    %v3071 = vld [vmem:[#allocation17 + $0x50] sm:$0xff]
    %v3072 = vld [vmem:[#allocation17 + $0x58] sm:$0xff]
    %v3073 = vld [vmem:[#allocation17 + $0x60] sm:$0xff]
    %v3074 = vld [vmem:[#allocation17 + $0x68] sm:$0xff]
    %v3075 = vld [vmem:[#allocation17 + $0x70] sm:$0xff]
    %v3076 = vld [vmem:[#allocation17 + $0x78] sm:$0xff]
    %v3077 = vld [vmem:[#allocation17 + $0x80] sm:$0xff]
    %v3078 = vld [vmem:[#allocation17 + $0x88] sm:$0xff]
    %v3079 = vld [vmem:[#allocation17 + $0x90] sm:$0xff]
    %v3080 = vld [vmem:[#allocation17 + $0x98] sm:$0xff]
    %v3081 = vld [vmem:[#allocation17 + $0xa0] sm:$0xff]
    %v3082 = vld [vmem:[#allocation17 + $0xa8] sm:$0xff]
    %v3083 = vld [vmem:[#allocation17 + $0xb0] sm:$0xff]
    %v3084 = vld [vmem:[#allocation17 + $0xb8] sm:$0xff]
    %v3085 = vld [vmem:[#allocation17 + $0xc0] sm:$0xff]
    %v3086 = vld [vmem:[#allocation17 + $0xc8] sm:$0xff]
    %v3087 = vld [vmem:[#allocation17 + $0xd0] sm:$0xff]
    %v3088 = vld [vmem:[#allocation17 + $0xd8] sm:$0xff]
    %v3089 = vld [vmem:[#allocation17 + $0xe0] sm:$0xff]
    %v3090 = vld [vmem:[#allocation17 + $0xe8] sm:$0xff]
    %v3091 = vld [vmem:[#allocation17 + $0xf0] sm:$0xff]
    %v3092 = vld [vmem:[#allocation17 + $0xf8] sm:$0xff]
    %v3093 = vld [vmem:[#allocation17 + $0x100] sm:$0xff]
    %v3094 = vld [vmem:[#allocation17 + $0x108] sm:$0xff]
    %v3095 = vld [vmem:[#allocation17 + $0x110] sm:$0xff]
    %v3096 = vld [vmem:[#allocation17 + $0x118] sm:$0xff]
    %v3097 = vld [vmem:[#allocation17 + $0x120] sm:$0xff]
    %v3098 = vld [vmem:[#allocation17 + $0x128] sm:$0xff]
    %v3099 = vld [vmem:[#allocation17 + $0x130] sm:$0xff]
    %v3100 = vld [vmem:[#allocation17 + $0x138] sm:$0xff]
    %v3101 = vld [vmem:[#allocation17 + $0x140] sm:$0xff]
    %v3102 = vld [vmem:[#allocation17 + $0x148] sm:$0xff]
    %v3103 = vld [vmem:[#allocation17 + $0x150] sm:$0xff]
    %v3104 = vld [vmem:[#allocation17 + $0x158] sm:$0xff]
    %v3105 = vld [vmem:[#allocation17 + $0x160] sm:$0xff]
    %v3106 = vld [vmem:[#allocation17 + $0x168] sm:$0xff]
    %v3107 = vld [vmem:[#allocation17 + $0x170] sm:$0xff]
    %v3108 = vld [vmem:[#allocation17 + $0x178] sm:$0xff]
    %v3109 = vld [vmem:[#allocation17 + $0x180] sm:$0xff]
    %v3110 = vld [vmem:[#allocation17 + $0x188] sm:$0xff]
    %v3111 = vld [vmem:[#allocation17 + $0x190] sm:$0xff]
    %v3112 = vld [vmem:[#allocation17 + $0x198] sm:$0xff]
    %v3113 = vld [vmem:[#allocation17 + $0x1a0] sm:$0xff]
    %v3114 = vld [vmem:[#allocation17 + $0x1a8] sm:$0xff]
    %v3115 = vld [vmem:[#allocation17 + $0x1b0] sm:$0xff]
    %v3116 = vld [vmem:[#allocation17 + $0x1b8] sm:$0xff]
    %v3117 = vld [vmem:[#allocation17 + $0x1c0] sm:$0xff]
    %v3118 = vld [vmem:[#allocation17 + $0x1c8] sm:$0xff]
    %v3119 = vld [vmem:[#allocation17 + $0x1d0] sm:$0xff]
    %v3120 = vld [vmem:[#allocation17 + $0x1d8] sm:$0xff]
    %v3121 = vld [vmem:[#allocation17 + $0x1e0] sm:$0xff]
    %v3122 = vld [vmem:[#allocation17 + $0x1e8] sm:$0xff]
    %v3123 = vld [vmem:[#allocation17 + $0x1f0] sm:$0xff]
    %v3124 = vld [vmem:[#allocation17 + $0x1f8] sm:$0xff]
    %v3125 = vld [vmem:[#allocation17 + $0x200] sm:$0xff]
    %v3126 = vld [vmem:[#allocation17 + $0x208] sm:$0xff]
    %v3127 = vld [vmem:[#allocation17 + $0x210] sm:$0xff]
    %v3128 = vld [vmem:[#allocation17 + $0x218] sm:$0xff]
    %v3129 = vld [vmem:[#allocation17 + $0x220] sm:$0xff]
    %v3130 = vld [vmem:[#allocation17 + $0x228] sm:$0xff]
    %v3131 = vld [vmem:[#allocation17 + $0x230] sm:$0xff]
    %v3132 = vld [vmem:[#allocation17 + $0x238] sm:$0xff]
    %v3133 = vld [vmem:[#allocation17 + $0x240] sm:$0xff]
    %v3134 = vld [vmem:[#allocation17 + $0x248] sm:$0xff]
    %v3135 = vld [vmem:[#allocation17 + $0x250] sm:$0xff]
    %v3136 = vld [vmem:[#allocation17 + $0x258] sm:$0xff]
    %v3137 = vld [vmem:[#allocation17 + $0x260] sm:$0xff]
    %v3138 = vld [vmem:[#allocation17 + $0x268] sm:$0xff]
    %v3139 = vld [vmem:[#allocation17 + $0x270] sm:$0xff]
    %v3140 = vld [vmem:[#allocation17 + $0x278] sm:$0xff]
    %v3141 = vld [vmem:[#allocation17 + $0x280] sm:$0xff]
    %v3142 = vld [vmem:[#allocation17 + $0x288] sm:$0xff]
    %v3143 = vld [vmem:[#allocation17 + $0x290] sm:$0xff]
    %v3144 = vld [vmem:[#allocation17 + $0x298] sm:$0xff]
    %v3145 = vld [vmem:[#allocation17 + $0x2a0] sm:$0xff]
    %v3146 = vld [vmem:[#allocation17 + $0x2a8] sm:$0xff]
    %v3147 = vld [vmem:[#allocation17 + $0x2b0] sm:$0xff]
    %v3148 = vld [vmem:[#allocation17 + $0x2b8] sm:$0xff]
    %v3149 = vld [vmem:[#allocation17 + $0x2c0] sm:$0xff]
    %v3150 = vld [vmem:[#allocation17 + $0x2c8] sm:$0xff]
    %v3151 = vld [vmem:[#allocation17 + $0x2d0] sm:$0xff]
    %v3152 = vld [vmem:[#allocation17 + $0x2d8] sm:$0xff]
    %v3153 = vld [vmem:[#allocation17 + $0x2e0] sm:$0xff]
    %v3154 = vld [vmem:[#allocation17 + $0x2e8] sm:$0xff]
    %v3155 = vld [vmem:[#allocation17 + $0x2f0] sm:$0xff]
    %v3156 = vld [vmem:[#allocation17 + $0x2f8] sm:$0xff]
    %v3157 = vld [vmem:[#allocation17 + $0x300] sm:$0xff]
    %v3158 = vld [vmem:[#allocation17 + $0x308] sm:$0xff]
    %v3159 = vld [vmem:[#allocation17 + $0x310] sm:$0xff]
    %v3160 = vld [vmem:[#allocation17 + $0x318] sm:$0xff]
    %v3161 = vld [vmem:[#allocation17 + $0x320] sm:$0xff]
    %v3162 = vld [vmem:[#allocation17 + $0x328] sm:$0xff]
    %v3163 = vld [vmem:[#allocation17 + $0x330] sm:$0xff]
    %v3164 = vld [vmem:[#allocation17 + $0x338] sm:$0xff]
    %v3165 = vld [vmem:[#allocation17 + $0x340] sm:$0xff]
    %v3166 = vld [vmem:[#allocation17 + $0x348] sm:$0xff]
    %v3167 = vld [vmem:[#allocation17 + $0x350] sm:$0xff]
    %v3168 = vld [vmem:[#allocation17 + $0x358] sm:$0xff]
    %v3169 = vld [vmem:[#allocation17 + $0x360] sm:$0xff]
    %v3170 = vld [vmem:[#allocation17 + $0x368] sm:$0xff]
    %v3171 = vld [vmem:[#allocation17 + $0x370] sm:$0xff]
    %v3172 = vld [vmem:[#allocation17 + $0x378] sm:$0xff]
    %v3173 = vld [vmem:[#allocation17 + $0x380] sm:$0xff]
    %v3174 = vld [vmem:[#allocation17 + $0x388] sm:$0xff]
    %v3175 = vld [vmem:[#allocation17 + $0x390] sm:$0xff]
    %v3176 = vld [vmem:[#allocation17 + $0x398] sm:$0xff]
    %v3177 = vld [vmem:[#allocation17 + $0x3a0] sm:$0xff]
    %v3178 = vld [vmem:[#allocation17 + $0x3a8] sm:$0xff]
    %v3179 = vld [vmem:[#allocation17 + $0x3b0] sm:$0xff]
    %v3180 = vld [vmem:[#allocation17 + $0x3b8] sm:$0xff]
    %v3181 = vld [vmem:[#allocation17 + $0x3c0] sm:$0xff]
    %v3182 = vld [vmem:[#allocation17 + $0x3c8] sm:$0xff]
    %v3183 = vld [vmem:[#allocation17 + $0x3d0] sm:$0xff]
    %v3184 = vld [vmem:[#allocation17 + $0x3d8] sm:$0xff]
    %v3185 = vld [vmem:[#allocation17 + $0x3e0] sm:$0xff]
    %v3186 = vld [vmem:[#allocation17 + $0x3e8] sm:$0xff]
    %v3187 = vld [vmem:[#allocation17 + $0x3f0] sm:$0xff]
    %v3188 = vld [vmem:[#allocation17 + $0x3f8] sm:$0xff]
    %v3189 = vld [vmem:[%s15] sm:$0xf]
    %v3191 = vlaneseq
    %v3192 = vshrl.u32 %v3191, 7
    %v3193 = vsub.s32 0, %v3192
    %v3194 = vrot.slane %v3189, %v3193
    %v3195 = vlaneseq
    %v3196 = vshrl.u32 %v3195, 7
    %v3197 = vsub.s32 1, %v3196
    %v3198 = vrot.slane %v3189, %v3197
    %v3199 = vlaneseq
    %v3200 = vshrl.u32 %v3199, 7
    %v3201 = vsub.s32 2, %v3200
    %v3202 = vrot.slane %v3189, %v3201
    %v3203 = vlaneseq
    %v3204 = vshrl.u32 %v3203, 7
    %v3205 = vsub.s32 3, %v3204
    %v3206 = vrot.slane %v3189, %v3205
    %v3339 = vunpack.c.l.b16 %v3061
    %v3340 = vunpack.c.h.b16 %v3061
    %v3341 = vunpack.c.l.b16 %v3062
    %v3342 = vunpack.c.h.b16 %v3062
    %v3343 = vunpack.c.l.b16 %v3063
    %v3344 = vunpack.c.h.b16 %v3063
    %v3345 = vunpack.c.l.b16 %v3064
    %v3346 = vunpack.c.h.b16 %v3064
    %v3347 = vunpack.c.l.b16 %v3065
    %v3348 = vunpack.c.h.b16 %v3065
    %v3349 = vunpack.c.l.b16 %v3066
    %v3350 = vunpack.c.h.b16 %v3066
    %v3351 = vunpack.c.l.b16 %v3067
    %v3352 = vunpack.c.h.b16 %v3067
    %v3353 = vunpack.c.l.b16 %v3068
    %v3354 = vunpack.c.h.b16 %v3068
    %v3355 = vunpack.c.l.b16 %v3069
    %v3356 = vunpack.c.h.b16 %v3069
    %v3357 = vunpack.c.l.b16 %v3070
    %v3358 = vunpack.c.h.b16 %v3070
    %v3359 = vunpack.c.l.b16 %v3071
    %v3360 = vunpack.c.h.b16 %v3071
    %v3361 = vunpack.c.l.b16 %v3072
    %v3362 = vunpack.c.h.b16 %v3072
    %v3363 = vunpack.c.l.b16 %v3073
    %v3364 = vunpack.c.h.b16 %v3073
    %v3365 = vunpack.c.l.b16 %v3074
    %v3366 = vunpack.c.h.b16 %v3074
    %v3367 = vunpack.c.l.b16 %v3075
    %v3368 = vunpack.c.h.b16 %v3075
    %v3369 = vunpack.c.l.b16 %v3076
    %v3370 = vunpack.c.h.b16 %v3076
    %v3371 = vunpack.c.l.b16 %v3077
    %v3372 = vunpack.c.h.b16 %v3077
    %v3373 = vunpack.c.l.b16 %v3078
    %v3374 = vunpack.c.h.b16 %v3078
    %v3375 = vunpack.c.l.b16 %v3079
    %v3376 = vunpack.c.h.b16 %v3079
    %v3377 = vunpack.c.l.b16 %v3080
    %v3378 = vunpack.c.h.b16 %v3080
    %v3379 = vunpack.c.l.b16 %v3081
    %v3380 = vunpack.c.h.b16 %v3081
    %v3381 = vunpack.c.l.b16 %v3082
    %v3382 = vunpack.c.h.b16 %v3082
    %v3383 = vunpack.c.l.b16 %v3083
    %v3384 = vunpack.c.h.b16 %v3083
    %v3385 = vunpack.c.l.b16 %v3084
    %v3386 = vunpack.c.h.b16 %v3084
    %v3387 = vunpack.c.l.b16 %v3085
    %v3388 = vunpack.c.h.b16 %v3085
    %v3389 = vunpack.c.l.b16 %v3086
    %v3390 = vunpack.c.h.b16 %v3086
    %v3391 = vunpack.c.l.b16 %v3087
    %v3392 = vunpack.c.h.b16 %v3087
    %v3393 = vunpack.c.l.b16 %v3088
    %v3394 = vunpack.c.h.b16 %v3088
    %v3395 = vunpack.c.l.b16 %v3089
    %v3396 = vunpack.c.h.b16 %v3089
    %v3397 = vunpack.c.l.b16 %v3090
    %v3398 = vunpack.c.h.b16 %v3090
    %v3399 = vunpack.c.l.b16 %v3091
    %v3400 = vunpack.c.h.b16 %v3091
    %v3401 = vunpack.c.l.b16 %v3092
    %v3402 = vunpack.c.h.b16 %v3092
    %v3403 = vunpack.c.l.b16 %v3093
    %v3404 = vunpack.c.h.b16 %v3093
    %v3405 = vunpack.c.l.b16 %v3094
    %v3406 = vunpack.c.h.b16 %v3094
    %v3407 = vunpack.c.l.b16 %v3095
    %v3408 = vunpack.c.h.b16 %v3095
    %v3409 = vunpack.c.l.b16 %v3096
    %v3410 = vunpack.c.h.b16 %v3096
    %v3411 = vunpack.c.l.b16 %v3097
    %v3412 = vunpack.c.h.b16 %v3097
    %v3413 = vunpack.c.l.b16 %v3098
    %v3414 = vunpack.c.h.b16 %v3098
    %v3415 = vunpack.c.l.b16 %v3099
    %v3416 = vunpack.c.h.b16 %v3099
    %v3417 = vunpack.c.l.b16 %v3100
    %v3418 = vunpack.c.h.b16 %v3100
    %v3419 = vunpack.c.l.b16 %v3101
    %v3420 = vunpack.c.h.b16 %v3101
    %v3421 = vunpack.c.l.b16 %v3102
    %v3422 = vunpack.c.h.b16 %v3102
    %v3423 = vunpack.c.l.b16 %v3103
    %v3424 = vunpack.c.h.b16 %v3103
    %v3425 = vunpack.c.l.b16 %v3104
    %v3426 = vunpack.c.h.b16 %v3104
    %v3427 = vunpack.c.l.b16 %v3105
    %v3428 = vunpack.c.h.b16 %v3105
    %v3429 = vunpack.c.l.b16 %v3106
    %v3430 = vunpack.c.h.b16 %v3106
    %v3431 = vunpack.c.l.b16 %v3107
    %v3432 = vunpack.c.h.b16 %v3107
    %v3433 = vunpack.c.l.b16 %v3108
    %v3434 = vunpack.c.h.b16 %v3108
    %v3435 = vunpack.c.l.b16 %v3109
    %v3436 = vunpack.c.h.b16 %v3109
    %v3437 = vunpack.c.l.b16 %v3110
    %v3438 = vunpack.c.h.b16 %v3110
    %v3439 = vunpack.c.l.b16 %v3111
    %v3440 = vunpack.c.h.b16 %v3111
    %v3441 = vunpack.c.l.b16 %v3112
    %v3442 = vunpack.c.h.b16 %v3112
    %v3443 = vunpack.c.l.b16 %v3113
    %v3444 = vunpack.c.h.b16 %v3113
    %v3445 = vunpack.c.l.b16 %v3114
    %v3446 = vunpack.c.h.b16 %v3114
    %v3447 = vunpack.c.l.b16 %v3115
    %v3448 = vunpack.c.h.b16 %v3115
    %v3449 = vunpack.c.l.b16 %v3116
    %v3450 = vunpack.c.h.b16 %v3116
    %v3451 = vunpack.c.l.b16 %v3117
    %v3452 = vunpack.c.h.b16 %v3117
    %v3453 = vunpack.c.l.b16 %v3118
    %v3454 = vunpack.c.h.b16 %v3118
    %v3455 = vunpack.c.l.b16 %v3119
    %v3456 = vunpack.c.h.b16 %v3119
    %v3457 = vunpack.c.l.b16 %v3120
    %v3458 = vunpack.c.h.b16 %v3120
    %v3459 = vunpack.c.l.b16 %v3121
    %v3460 = vunpack.c.h.b16 %v3121
    %v3461 = vunpack.c.l.b16 %v3122
    %v3462 = vunpack.c.h.b16 %v3122
    %v3463 = vunpack.c.l.b16 %v3123
    %v3464 = vunpack.c.h.b16 %v3123
    %v3465 = vunpack.c.l.b16 %v3124
    %v3466 = vunpack.c.h.b16 %v3124
    %v3467 = vunpack.c.l.b16 %v3125
    %v3468 = vunpack.c.h.b16 %v3125
    %v3469 = vunpack.c.l.b16 %v3126
    %v3470 = vunpack.c.h.b16 %v3126
    %v3471 = vunpack.c.l.b16 %v3127
    %v3472 = vunpack.c.h.b16 %v3127
    %v3473 = vunpack.c.l.b16 %v3128
    %v3474 = vunpack.c.h.b16 %v3128
    %v3475 = vunpack.c.l.b16 %v3129
    %v3476 = vunpack.c.h.b16 %v3129
    %v3477 = vunpack.c.l.b16 %v3130
    %v3478 = vunpack.c.h.b16 %v3130
    %v3479 = vunpack.c.l.b16 %v3131
    %v3480 = vunpack.c.h.b16 %v3131
    %v3481 = vunpack.c.l.b16 %v3132
    %v3482 = vunpack.c.h.b16 %v3132
    %v3483 = vunpack.c.l.b16 %v3133
    %v3484 = vunpack.c.h.b16 %v3133
    %v3485 = vunpack.c.l.b16 %v3134
    %v3486 = vunpack.c.h.b16 %v3134
    %v3487 = vunpack.c.l.b16 %v3135
    %v3488 = vunpack.c.h.b16 %v3135
    %v3489 = vunpack.c.l.b16 %v3136
    %v3490 = vunpack.c.h.b16 %v3136
    %v3491 = vunpack.c.l.b16 %v3137
    %v3492 = vunpack.c.h.b16 %v3137
    %v3493 = vunpack.c.l.b16 %v3138
    %v3494 = vunpack.c.h.b16 %v3138
    %v3495 = vunpack.c.l.b16 %v3139
    %v3496 = vunpack.c.h.b16 %v3139
    %v3497 = vunpack.c.l.b16 %v3140
    %v3498 = vunpack.c.h.b16 %v3140
    %v3499 = vunpack.c.l.b16 %v3141
    %v3500 = vunpack.c.h.b16 %v3141
    %v3501 = vunpack.c.l.b16 %v3142
    %v3502 = vunpack.c.h.b16 %v3142
    %v3503 = vunpack.c.l.b16 %v3143
    %v3504 = vunpack.c.h.b16 %v3143
    %v3505 = vunpack.c.l.b16 %v3144
    %v3506 = vunpack.c.h.b16 %v3144
    %v3507 = vunpack.c.l.b16 %v3145
    %v3508 = vunpack.c.h.b16 %v3145
    %v3509 = vunpack.c.l.b16 %v3146
    %v3510 = vunpack.c.h.b16 %v3146
    %v3511 = vunpack.c.l.b16 %v3147
    %v3512 = vunpack.c.h.b16 %v3147
    %v3513 = vunpack.c.l.b16 %v3148
    %v3514 = vunpack.c.h.b16 %v3148
    %v3515 = vunpack.c.l.b16 %v3149
    %v3516 = vunpack.c.h.b16 %v3149
    %v3517 = vunpack.c.l.b16 %v3150
    %v3518 = vunpack.c.h.b16 %v3150
    %v3519 = vunpack.c.l.b16 %v3151
    %v3520 = vunpack.c.h.b16 %v3151
    %v3521 = vunpack.c.l.b16 %v3152
    %v3522 = vunpack.c.h.b16 %v3152
    %v3523 = vunpack.c.l.b16 %v3153
    %v3524 = vunpack.c.h.b16 %v3153
    %v3525 = vunpack.c.l.b16 %v3154
    %v3526 = vunpack.c.h.b16 %v3154
    %v3527 = vunpack.c.l.b16 %v3155
    %v3528 = vunpack.c.h.b16 %v3155
    %v3529 = vunpack.c.l.b16 %v3156
    %v3530 = vunpack.c.h.b16 %v3156
    %v3531 = vunpack.c.l.b16 %v3157
    %v3532 = vunpack.c.h.b16 %v3157
    %v3533 = vunpack.c.l.b16 %v3158
    %v3534 = vunpack.c.h.b16 %v3158
    %v3535 = vunpack.c.l.b16 %v3159
    %v3536 = vunpack.c.h.b16 %v3159
    %v3537 = vunpack.c.l.b16 %v3160
    %v3538 = vunpack.c.h.b16 %v3160
    %v3539 = vunpack.c.l.b16 %v3161
    %v3540 = vunpack.c.h.b16 %v3161
    %v3541 = vunpack.c.l.b16 %v3162
    %v3542 = vunpack.c.h.b16 %v3162
    %v3543 = vunpack.c.l.b16 %v3163
    %v3544 = vunpack.c.h.b16 %v3163
    %v3545 = vunpack.c.l.b16 %v3164
    %v3546 = vunpack.c.h.b16 %v3164
    %v3547 = vunpack.c.l.b16 %v3165
    %v3548 = vunpack.c.h.b16 %v3165
    %v3549 = vunpack.c.l.b16 %v3166
    %v3550 = vunpack.c.h.b16 %v3166
    %v3551 = vunpack.c.l.b16 %v3167
    %v3552 = vunpack.c.h.b16 %v3167
    %v3553 = vunpack.c.l.b16 %v3168
    %v3554 = vunpack.c.h.b16 %v3168
    %v3555 = vunpack.c.l.b16 %v3169
    %v3556 = vunpack.c.h.b16 %v3169
    %v3557 = vunpack.c.l.b16 %v3170
    %v3558 = vunpack.c.h.b16 %v3170
    %v3559 = vunpack.c.l.b16 %v3171
    %v3560 = vunpack.c.h.b16 %v3171
    %v3561 = vunpack.c.l.b16 %v3172
    %v3562 = vunpack.c.h.b16 %v3172
    %v3563 = vunpack.c.l.b16 %v3173
    %v3564 = vunpack.c.h.b16 %v3173
    %v3565 = vunpack.c.l.b16 %v3174
    %v3566 = vunpack.c.h.b16 %v3174
    %v3567 = vunpack.c.l.b16 %v3175
    %v3568 = vunpack.c.h.b16 %v3175
    %v3569 = vunpack.c.l.b16 %v3176
    %v3570 = vunpack.c.h.b16 %v3176
    %v3571 = vunpack.c.l.b16 %v3177
    %v3572 = vunpack.c.h.b16 %v3177
    %v3573 = vunpack.c.l.b16 %v3178
    %v3574 = vunpack.c.h.b16 %v3178
    %v3575 = vunpack.c.l.b16 %v3179
    %v3576 = vunpack.c.h.b16 %v3179
    %v3577 = vunpack.c.l.b16 %v3180
    %v3578 = vunpack.c.h.b16 %v3180
    %v3579 = vunpack.c.l.b16 %v3181
    %v3580 = vunpack.c.h.b16 %v3181
    %v3581 = vunpack.c.l.b16 %v3182
    %v3582 = vunpack.c.h.b16 %v3182
    %v3583 = vunpack.c.l.b16 %v3183
    %v3584 = vunpack.c.h.b16 %v3183
    %v3585 = vunpack.c.l.b16 %v3184
    %v3586 = vunpack.c.h.b16 %v3184
    %v3587 = vunpack.c.l.b16 %v3185
    %v3588 = vunpack.c.h.b16 %v3185
    %v3589 = vunpack.c.l.b16 %v3186
    %v3590 = vunpack.c.h.b16 %v3186
    %v3591 = vunpack.c.l.b16 %v3187
    %v3592 = vunpack.c.h.b16 %v3187
    %v3593 = vunpack.c.l.b16 %v3188
    %v3594 = vunpack.c.h.b16 %v3188
    %v3595 = vpack.c.b16 %v3343, %v3339
    %v3596 = vpack.c.b16 %v3344, %v3340
    %v3597 = vpack.c.b16 %v3345, %v3341
    %v3598 = vpack.c.b16 %v3346, %v3342
    %v3599 = vpack.c.b16 %v3351, %v3347
    %v3600 = vpack.c.b16 %v3352, %v3348
    %v3601 = vpack.c.b16 %v3353, %v3349
    %v3602 = vpack.c.b16 %v3354, %v3350
    %v3603 = vpack.c.b16 %v3359, %v3355
    %v3604 = vpack.c.b16 %v3360, %v3356
    %v3605 = vpack.c.b16 %v3361, %v3357
    %v3606 = vpack.c.b16 %v3362, %v3358
    %v3607 = vpack.c.b16 %v3367, %v3363
    %v3608 = vpack.c.b16 %v3368, %v3364
    %v3609 = vpack.c.b16 %v3369, %v3365
    %v3610 = vpack.c.b16 %v3370, %v3366
    %v3611 = vpack.c.b16 %v3375, %v3371
    %v3612 = vpack.c.b16 %v3376, %v3372
    %v3613 = vpack.c.b16 %v3377, %v3373
    %v3614 = vpack.c.b16 %v3378, %v3374
    %v3615 = vpack.c.b16 %v3383, %v3379
    %v3616 = vpack.c.b16 %v3384, %v3380
    %v3617 = vpack.c.b16 %v3385, %v3381
    %v3618 = vpack.c.b16 %v3386, %v3382
    %v3619 = vpack.c.b16 %v3391, %v3387
    %v3620 = vpack.c.b16 %v3392, %v3388
    %v3621 = vpack.c.b16 %v3393, %v3389
    %v3622 = vpack.c.b16 %v3394, %v3390
    %v3623 = vpack.c.b16 %v3399, %v3395
    %v3624 = vpack.c.b16 %v3400, %v3396
    %v3625 = vpack.c.b16 %v3401, %v3397
    %v3626 = vpack.c.b16 %v3402, %v3398
    %v3627 = vpack.c.b16 %v3407, %v3403
    %v3628 = vpack.c.b16 %v3408, %v3404
    %v3629 = vpack.c.b16 %v3409, %v3405
    %v3630 = vpack.c.b16 %v3410, %v3406
    %v3631 = vpack.c.b16 %v3415, %v3411
    %v3632 = vpack.c.b16 %v3416, %v3412
    %v3633 = vpack.c.b16 %v3417, %v3413
    %v3634 = vpack.c.b16 %v3418, %v3414
    %v3635 = vpack.c.b16 %v3423, %v3419
    %v3636 = vpack.c.b16 %v3424, %v3420
    %v3637 = vpack.c.b16 %v3425, %v3421
    %v3638 = vpack.c.b16 %v3426, %v3422
    %v3639 = vpack.c.b16 %v3431, %v3427
    %v3640 = vpack.c.b16 %v3432, %v3428
    %v3641 = vpack.c.b16 %v3433, %v3429
    %v3642 = vpack.c.b16 %v3434, %v3430
    %v3643 = vpack.c.b16 %v3439, %v3435
    %v3644 = vpack.c.b16 %v3440, %v3436
    %v3645 = vpack.c.b16 %v3441, %v3437
    %v3646 = vpack.c.b16 %v3442, %v3438
    %v3647 = vpack.c.b16 %v3447, %v3443
    %v3648 = vpack.c.b16 %v3448, %v3444
    %v3649 = vpack.c.b16 %v3449, %v3445
    %v3650 = vpack.c.b16 %v3450, %v3446
    %v3651 = vpack.c.b16 %v3455, %v3451
    %v3652 = vpack.c.b16 %v3456, %v3452
    %v3653 = vpack.c.b16 %v3457, %v3453
    %v3654 = vpack.c.b16 %v3458, %v3454
    %v3655 = vpack.c.b16 %v3463, %v3459
    %v3656 = vpack.c.b16 %v3464, %v3460
    %v3657 = vpack.c.b16 %v3465, %v3461
    %v3658 = vpack.c.b16 %v3466, %v3462
    %v3659 = vpack.c.b16 %v3471, %v3467
    %v3660 = vpack.c.b16 %v3472, %v3468
    %v3661 = vpack.c.b16 %v3473, %v3469
    %v3662 = vpack.c.b16 %v3474, %v3470
    %v3663 = vpack.c.b16 %v3479, %v3475
    %v3664 = vpack.c.b16 %v3480, %v3476
    %v3665 = vpack.c.b16 %v3481, %v3477
    %v3666 = vpack.c.b16 %v3482, %v3478
    %v3667 = vpack.c.b16 %v3487, %v3483
    %v3668 = vpack.c.b16 %v3488, %v3484
    %v3669 = vpack.c.b16 %v3489, %v3485
    %v3670 = vpack.c.b16 %v3490, %v3486
    %v3671 = vpack.c.b16 %v3495, %v3491
    %v3672 = vpack.c.b16 %v3496, %v3492
    %v3673 = vpack.c.b16 %v3497, %v3493
    %v3674 = vpack.c.b16 %v3498, %v3494
    %v3675 = vpack.c.b16 %v3503, %v3499
    %v3676 = vpack.c.b16 %v3504, %v3500
    %v3677 = vpack.c.b16 %v3505, %v3501
    %v3678 = vpack.c.b16 %v3506, %v3502
    %v3679 = vpack.c.b16 %v3511, %v3507
    %v3680 = vpack.c.b16 %v3512, %v3508
    %v3681 = vpack.c.b16 %v3513, %v3509
    %v3682 = vpack.c.b16 %v3514, %v3510
    %v3683 = vpack.c.b16 %v3519, %v3515
    %v3684 = vpack.c.b16 %v3520, %v3516
    %v3685 = vpack.c.b16 %v3521, %v3517
    %v3686 = vpack.c.b16 %v3522, %v3518
    %v3687 = vpack.c.b16 %v3527, %v3523
    %v3688 = vpack.c.b16 %v3528, %v3524
    %v3689 = vpack.c.b16 %v3529, %v3525
    %v3690 = vpack.c.b16 %v3530, %v3526
    %v3691 = vpack.c.b16 %v3535, %v3531
    %v3692 = vpack.c.b16 %v3536, %v3532
    %v3693 = vpack.c.b16 %v3537, %v3533
    %v3694 = vpack.c.b16 %v3538, %v3534
    %v3695 = vpack.c.b16 %v3543, %v3539
    %v3696 = vpack.c.b16 %v3544, %v3540
    %v3697 = vpack.c.b16 %v3545, %v3541
    %v3698 = vpack.c.b16 %v3546, %v3542
    %v3699 = vpack.c.b16 %v3551, %v3547
    %v3700 = vpack.c.b16 %v3552, %v3548
    %v3701 = vpack.c.b16 %v3553, %v3549
    %v3702 = vpack.c.b16 %v3554, %v3550
    %v3703 = vpack.c.b16 %v3559, %v3555
    %v3704 = vpack.c.b16 %v3560, %v3556
    %v3705 = vpack.c.b16 %v3561, %v3557
    %v3706 = vpack.c.b16 %v3562, %v3558
    %v3707 = vpack.c.b16 %v3567, %v3563
    %v3708 = vpack.c.b16 %v3568, %v3564
    %v3709 = vpack.c.b16 %v3569, %v3565
    %v3710 = vpack.c.b16 %v3570, %v3566
    %v3711 = vpack.c.b16 %v3575, %v3571
    %v3712 = vpack.c.b16 %v3576, %v3572
    %v3713 = vpack.c.b16 %v3577, %v3573
    %v3714 = vpack.c.b16 %v3578, %v3574
    %v3715 = vpack.c.b16 %v3583, %v3579
    %v3716 = vpack.c.b16 %v3584, %v3580
    %v3717 = vpack.c.b16 %v3585, %v3581
    %v3718 = vpack.c.b16 %v3586, %v3582
    %v3719 = vpack.c.b16 %v3591, %v3587
    %v3720 = vpack.c.b16 %v3592, %v3588
    %v3721 = vpack.c.b16 %v3593, %v3589
    %v3722 = vpack.c.b16 %v3594, %v3590
    %3851 = vmatprep.subr.bf16.mxu0 %v3596
    %3852 = vmatpush1.bf16.msra.mxu0 %v3595
    %3853 = vmatprep.subr.bf16.mxu0 %v3600
    %3854 = vmatpush1.bf16.msra.mxu0 %v3599
    %3855 = vmatprep.subr.bf16.mxu0 %v3604
    %3856 = vmatpush1.bf16.msra.mxu0 %v3603
    %3857 = vmatprep.subr.bf16.mxu0 %v3608
    %3858 = vmatpush1.bf16.msra.mxu0 %v3607
    %3859 = vmatprep.subr.bf16.mxu0 %v3612
    %3860 = vmatpush1.bf16.msra.mxu0 %v3611
    %3861 = vmatprep.subr.bf16.mxu0 %v3616
    %3862 = vmatpush1.bf16.msra.mxu0 %v3615
    %3863 = vmatprep.subr.bf16.mxu0 %v3620
    %3864 = vmatpush1.bf16.msra.mxu0 %v3619
    %3865 = vmatprep.subr.bf16.mxu0 %v3624
    %3866 = vmatpush1.bf16.msra.mxu0 %v3623
    %3867 = vmatprep.subr.bf16.mxu0 %v3628
    %3868 = vmatpush1.bf16.msra.mxu0 %v3627
    %3869 = vmatprep.subr.bf16.mxu0 %v3632
    %3870 = vmatpush1.bf16.msra.mxu0 %v3631
    %3871 = vmatprep.subr.bf16.mxu0 %v3636
    %3872 = vmatpush1.bf16.msra.mxu0 %v3635
    %3873 = vmatprep.subr.bf16.mxu0 %v3640
    %3874 = vmatpush1.bf16.msra.mxu0 %v3639
    %3875 = vmatprep.subr.bf16.mxu0 %v3644
    %3876 = vmatpush1.bf16.msra.mxu0 %v3643
    %3877 = vmatprep.subr.bf16.mxu0 %v3648
    %3878 = vmatpush1.bf16.msra.mxu0 %v3647
    %3879 = vmatprep.subr.bf16.mxu0 %v3652
    %3880 = vmatpush1.bf16.msra.mxu0 %v3651
    %3881 = vmatprep.subr.bf16.mxu0 %v3656
    %3882 = vmatpush1.bf16.msra.mxu0 %v3655
    %3883 = vmatprep.mubr.bf16.mxu0 %v3050
    %3884 = vmatmul.mubr.bf16.gmra.mrb[0].mxu0 %v3049
    %v3885 = vpop.f32.mrb[0].mxu0
    %v3886 = vadd.f32 %v3194, %v3885
    %v3887 = vpop.f32.mrb[0].mxu0
    %v3888 = vadd.f32 %v3198, %v3887
    %v3889 = vpop.f32.mrb[0].mxu0
    %v3890 = vadd.f32 %v3194, %v3889
    %v3891 = vpop.f32.mrb[0].mxu0
    %v3892 = vadd.f32 %v3198, %v3891
    %3893 = vmatprep.mubr.bf16.mxu0 %v3054
    %3894 = vmatmul.mubr.bf16.gmra.mrb[0].mxu0 %v3053
    %v3895 = vpop.f32.mrb[0].mxu0
    %v3896 = vadd.f32 %v3194, %v3895
    %v3897 = vpop.f32.mrb[0].mxu0
    %v3898 = vadd.f32 %v3198, %v3897
    %v3899 = vpop.f32.mrb[0].mxu0
    %v3900 = vadd.f32 %v3194, %v3899
    %v3901 = vpop.f32.mrb[0].mxu0
    %v3902 = vadd.f32 %v3198, %v3901
    %3903 = vmatprep.mubr.bf16.mxu0 %v3058
    %3904 = vmatmul.mubr.bf16.gmra.mrb[0].mxu0 %v3057
    %v3905 = vpop.f32.mrb[0].mxu0
    %v3906 = vadd.f32 %v3194, %v3905
    %v3907 = vpop.f32.mrb[0].mxu0
    %v3908 = vadd.f32 %v3198, %v3907
    %v3909 = vpop.f32.mrb[0].mxu0
    %v3910 = vadd.f32 %v3194, %v3909
    %v3911 = vpop.f32.mrb[0].mxu0
    %v3912 = vadd.f32 %v3198, %v3911
    %3913 = vdwg.mxu0
    %3914 = vmatprep.subr.bf16.mxu0 %v3660
    %3915 = vmatpush1.bf16.msra.mxu0 %v3659
    %3916 = vmatprep.subr.bf16.mxu0 %v3664
    %3917 = vmatpush1.bf16.msra.mxu0 %v3663
    %3918 = vmatprep.subr.bf16.mxu0 %v3668
    %3919 = vmatpush1.bf16.msra.mxu0 %v3667
    %3920 = vmatprep.subr.bf16.mxu0 %v3672
    %3921 = vmatpush1.bf16.msra.mxu0 %v3671
    %3922 = vmatprep.subr.bf16.mxu0 %v3676
    %3923 = vmatpush1.bf16.msra.mxu0 %v3675
    %3924 = vmatprep.subr.bf16.mxu0 %v3680
    %3925 = vmatpush1.bf16.msra.mxu0 %v3679
    %3926 = vmatprep.subr.bf16.mxu0 %v3684
    %3927 = vmatpush1.bf16.msra.mxu0 %v3683
    %3928 = vmatprep.subr.bf16.mxu0 %v3688
    %3929 = vmatpush1.bf16.msra.mxu0 %v3687
    %3930 = vmatprep.subr.bf16.mxu0 %v3692
    %3931 = vmatpush1.bf16.msra.mxu0 %v3691
    %3932 = vmatprep.subr.bf16.mxu0 %v3696
    %3933 = vmatpush1.bf16.msra.mxu0 %v3695
    %3934 = vmatprep.subr.bf16.mxu0 %v3700
    %3935 = vmatpush1.bf16.msra.mxu0 %v3699
    %3936 = vmatprep.subr.bf16.mxu0 %v3704
    %3937 = vmatpush1.bf16.msra.mxu0 %v3703
    %3938 = vmatprep.subr.bf16.mxu0 %v3708
    %3939 = vmatpush1.bf16.msra.mxu0 %v3707
    %3940 = vmatprep.subr.bf16.mxu0 %v3712
    %3941 = vmatpush1.bf16.msra.mxu0 %v3711
    %3942 = vmatprep.subr.bf16.mxu0 %v3716
    %3943 = vmatpush1.bf16.msra.mxu0 %v3715
    %3944 = vmatprep.subr.bf16.mxu0 %v3720
    %3945 = vmatpush1.bf16.msra.mxu0 %v3719
    %3946 = vmatprep.mubr.bf16.mxu0 %v3052
    %3947 = vmatmul.mubr.bf16.gmra.mrb[0].mxu0 %v3051
    %v3948 = vpop.f32.mrb[0].mxu0
    %v3949 = vadd.f32 %v3886, %v3948
    %v3950 = vpop.f32.mrb[0].mxu0
    %v3951 = vadd.f32 %v3888, %v3950
    %v3952 = vpop.f32.mrb[0].mxu0
    %v3953 = vadd.f32 %v3890, %v3952
    %v3954 = vpop.f32.mrb[0].mxu0
    %v3955 = vadd.f32 %v3892, %v3954
    %3956 = vmatprep.mubr.bf16.mxu0 %v3056
    %3957 = vmatmul.mubr.bf16.gmra.mrb[0].mxu0 %v3055
    %v3958 = vpop.f32.mrb[0].mxu0
    %v3959 = vadd.f32 %v3896, %v3958
    %v3960 = vpop.f32.mrb[0].mxu0
    %v3961 = vadd.f32 %v3898, %v3960
    %v3962 = vpop.f32.mrb[0].mxu0
    %v3963 = vadd.f32 %v3900, %v3962
    %v3964 = vpop.f32.mrb[0].mxu0
    %v3965 = vadd.f32 %v3902, %v3964
    %3966 = vmatprep.mubr.bf16.mxu0 %v3060
    %3967 = vmatmul.mubr.bf16.gmra.mrb[0].mxu0 %v3059
    %v3968 = vpop.f32.mrb[0].mxu0
    %v3969 = vadd.f32 %v3906, %v3968
    %v3970 = vpop.f32.mrb[0].mxu0
    %v3971 = vadd.f32 %v3908, %v3970
    %v3972 = vpop.f32.mrb[0].mxu0
    %v3973 = vadd.f32 %v3910, %v3972
    %v3974 = vpop.f32.mrb[0].mxu0
    %v3975 = vadd.f32 %v3912, %v3974
    %3976 = vdwg.mxu0
    %3977 = vmatprep.subr.bf16.mxu0 %v3598
    %3978 = vmatpush1.bf16.msra.mxu0 %v3597
    %3979 = vmatprep.subr.bf16.mxu0 %v3602
    %3980 = vmatpush1.bf16.msra.mxu0 %v3601
    %3981 = vmatprep.subr.bf16.mxu0 %v3606
    %3982 = vmatpush1.bf16.msra.mxu0 %v3605
    %3983 = vmatprep.subr.bf16.mxu0 %v3610
    %3984 = vmatpush1.bf16.msra.mxu0 %v3609
    %3985 = vmatprep.subr.bf16.mxu0 %v3614
    %3986 = vmatpush1.bf16.msra.mxu0 %v3613
    %3987 = vmatprep.subr.bf16.mxu0 %v3618
    %3988 = vmatpush1.bf16.msra.mxu0 %v3617
    %3989 = vmatprep.subr.bf16.mxu0 %v3622
    %3990 = vmatpush1.bf16.msra.mxu0 %v3621
    %3991 = vmatprep.subr.bf16.mxu0 %v3626
    %3992 = vmatpush1.bf16.msra.mxu0 %v3625
    %3993 = vmatprep.subr.bf16.mxu0 %v3630
    %3994 = vmatpush1.bf16.msra.mxu0 %v3629
    %3995 = vmatprep.subr.bf16.mxu0 %v3634
    %3996 = vmatpush1.bf16.msra.mxu0 %v3633
    %3997 = vmatprep.subr.bf16.mxu0 %v3638
    %3998 = vmatpush1.bf16.msra.mxu0 %v3637
    %3999 = vmatprep.subr.bf16.mxu0 %v3642
    %4000 = vmatpush1.bf16.msra.mxu0 %v3641
    %4001 = vmatprep.subr.bf16.mxu0 %v3646
    %4002 = vmatpush1.bf16.msra.mxu0 %v3645
    %4003 = vmatprep.subr.bf16.mxu0 %v3650
    %4004 = vmatpush1.bf16.msra.mxu0 %v3649
    %4005 = vmatprep.subr.bf16.mxu0 %v3654
    %4006 = vmatpush1.bf16.msra.mxu0 %v3653
    %4007 = vmatprep.subr.bf16.mxu0 %v3658
    %4008 = vmatpush1.bf16.msra.mxu0 %v3657
    %4009 = vmatprep.mubr.bf16.mxu0 %v3050
    %4010 = vmatmul.mubr.bf16.gmra.mrb[0].mxu0 %v3049
    %v4011 = vpop.f32.mrb[0].mxu0
    %v4012 = vadd.f32 %v3202, %v4011
    %v4013 = vpop.f32.mrb[0].mxu0
    %v4014 = vadd.f32 %v3206, %v4013
    %v4015 = vpop.f32.mrb[0].mxu0
    %v4016 = vadd.f32 %v3202, %v4015
    %v4017 = vpop.f32.mrb[0].mxu0
    %v4018 = vadd.f32 %v3206, %v4017
    %4019 = vmatprep.mubr.bf16.mxu0 %v3054
    %4020 = vmatmul.mubr.bf16.gmra.mrb[0].mxu0 %v3053
    %v4021 = vpop.f32.mrb[0].mxu0
    %v4022 = vadd.f32 %v3202, %v4021
    %v4023 = vpop.f32.mrb[0].mxu0
    %v4024 = vadd.f32 %v3206, %v4023
    %v4025 = vpop.f32.mrb[0].mxu0
    %v4026 = vadd.f32 %v3202, %v4025
    %v4027 = vpop.f32.mrb[0].mxu0
    %v4028 = vadd.f32 %v3206, %v4027
    %4029 = vmatprep.mubr.bf16.mxu0 %v3058
    %4030 = vmatmul.mubr.bf16.gmra.mrb[0].mxu0 %v3057
    %v4031 = vpop.f32.mrb[0].mxu0
    %v4032 = vadd.f32 %v3202, %v4031
    %v4033 = vpop.f32.mrb[0].mxu0
    %v4034 = vadd.f32 %v3206, %v4033
    %v4035 = vpop.f32.mrb[0].mxu0
    %v4036 = vadd.f32 %v3202, %v4035
    %v4037 = vpop.f32.mrb[0].mxu0
    %v4038 = vadd.f32 %v3206, %v4037
    %4039 = vdwg.mxu0
    %4040 = vmatprep.subr.bf16.mxu0 %v3662
    %4041 = vmatpush1.bf16.msra.mxu0 %v3661
    %4042 = vmatprep.subr.bf16.mxu0 %v3666
    %4043 = vmatpush1.bf16.msra.mxu0 %v3665
    %4044 = vmatprep.subr.bf16.mxu0 %v3670
    %4045 = vmatpush1.bf16.msra.mxu0 %v3669
    %4046 = vmatprep.subr.bf16.mxu0 %v3674
    %4047 = vmatpush1.bf16.msra.mxu0 %v3673
    %4048 = vmatprep.subr.bf16.mxu0 %v3678
    %4049 = vmatpush1.bf16.msra.mxu0 %v3677
    %4050 = vmatprep.subr.bf16.mxu0 %v3682
    %4051 = vmatpush1.bf16.msra.mxu0 %v3681
    %4052 = vmatprep.subr.bf16.mxu0 %v3686
    %4053 = vmatpush1.bf16.msra.mxu0 %v3685
    %4054 = vmatprep.subr.bf16.mxu0 %v3690
    %4055 = vmatpush1.bf16.msra.mxu0 %v3689
    %4056 = vmatprep.subr.bf16.mxu0 %v3694
    %4057 = vmatpush1.bf16.msra.mxu0 %v3693
    %4058 = vmatprep.subr.bf16.mxu0 %v3698
    %4059 = vmatpush1.bf16.msra.mxu0 %v3697
    %4060 = vmatprep.subr.bf16.mxu0 %v3702
    %4061 = vmatpush1.bf16.msra.mxu0 %v3701
    %4062 = vmatprep.subr.bf16.mxu0 %v3706
    %4063 = vmatpush1.bf16.msra.mxu0 %v3705
    %4064 = vmatprep.subr.bf16.mxu0 %v3710
    %4065 = vmatpush1.bf16.msra.mxu0 %v3709
    %4066 = vmatprep.subr.bf16.mxu0 %v3714
    %4067 = vmatpush1.bf16.msra.mxu0 %v3713
    %4068 = vmatprep.subr.bf16.mxu0 %v3718
    %4069 = vmatpush1.bf16.msra.mxu0 %v3717
    %4070 = vmatprep.subr.bf16.mxu0 %v3722
    %4071 = vmatpush1.bf16.msra.mxu0 %v3721
    %4072 = vmatprep.mubr.bf16.mxu0 %v3052
    %4073 = vmatmul.mubr.bf16.gmra.mrb[0].mxu0 %v3051
    %v4074 = vpop.f32.mrb[0].mxu0
    %v4075 = vadd.f32 %v4012, %v4074
    %v4076 = vpop.f32.mrb[0].mxu0
    %v4077 = vadd.f32 %v4014, %v4076
    %v4078 = vpop.f32.mrb[0].mxu0
    %v4079 = vadd.f32 %v4016, %v4078
    %v4080 = vpop.f32.mrb[0].mxu0
    %v4081 = vadd.f32 %v4018, %v4080
    %4082 = vmatprep.mubr.bf16.mxu0 %v3056
    %4083 = vmatmul.mubr.bf16.gmra.mrb[0].mxu0 %v3055
    %v4084 = vpop.f32.mrb[0].mxu0
    %v4085 = vadd.f32 %v4022, %v4084
    %v4086 = vpop.f32.mrb[0].mxu0
    %v4087 = vadd.f32 %v4024, %v4086
    %v4088 = vpop.f32.mrb[0].mxu0
    %v4089 = vadd.f32 %v4026, %v4088
    %v4090 = vpop.f32.mrb[0].mxu0
    %v4091 = vadd.f32 %v4028, %v4090
    %4092 = vmatprep.mubr.bf16.mxu0 %v3060
    %4093 = vmatmul.mubr.bf16.gmra.mrb[0].mxu0 %v3059
    %v4094 = vpop.f32.mrb[0].mxu0
    %v4095 = vadd.f32 %v4032, %v4094
    %v4096 = vpop.f32.mrb[0].mxu0
    %v4097 = vadd.f32 %v4034, %v4096
    %v4098 = vpop.f32.mrb[0].mxu0
    %v4099 = vadd.f32 %v4036, %v4098
    %v4100 = vpop.f32.mrb[0].mxu0
    %v4101 = vadd.f32 %v4038, %v4100
    %4102 = vdwg.mxu0
    %v4103 = vmax.f32 %v3949, 0.0
    %v4104 = vmax.f32 %v3951, 0.0
    %v4105 = vmax.f32 %v4075, 0.0
    %v4106 = vmax.f32 %v4077, 0.0
    %v4107 = vmax.f32 %v3953, 0.0
    %v4108 = vmax.f32 %v3955, 0.0
    %v4109 = vmax.f32 %v4079, 0.0
    %v4110 = vmax.f32 %v4081, 0.0
    %v4111 = vmax.f32 %v3959, 0.0
    %v4112 = vmax.f32 %v3961, 0.0
    %v4113 = vmax.f32 %v4085, 0.0
    %v4114 = vmax.f32 %v4087, 0.0
    %v4115 = vmax.f32 %v3963, 0.0
    %v4116 = vmax.f32 %v3965, 0.0
    %v4117 = vmax.f32 %v4089, 0.0
    %v4118 = vmax.f32 %v4091, 0.0
    %v4119 = vmax.f32 %v3969, 0.0
    %v4120 = vmax.f32 %v3971, 0.0
    %v4121 = vmax.f32 %v4095, 0.0
    %v4122 = vmax.f32 %v4097, 0.0
    %v4123 = vmax.f32 %v3973, 0.0
    %v4124 = vmax.f32 %v3975, 0.0
    %v4125 = vmax.f32 %v4099, 0.0
    %v4126 = vmax.f32 %v4101, 0.0
    %4127 = vst [vmem:[%s16] sm:$0xff] %v4103
    %4128 = vst [vmem:[%s16 + $0x8] sm:$0xff] %v4107
    %4129 = vst [vmem:[%s16 + $0x10] sm:$0x1f] %v4111
    %s4130 = scalar_lea.vmem %s16, 24
    %4131 = vst [vmem:[%s4130] sm:$0xff] %v4104
    %4132 = vst [vmem:[%s4130 + $0x8] sm:$0xff] %v4108
    %4133 = vst [vmem:[%s4130 + $0x10] sm:$0x1f] %v4112
    %s4134 = scalar_lea.vmem %s16, 48
    %4135 = vst [vmem:[%s4134] sm:$0xff] %v4105
    %4136 = vst [vmem:[%s4134 + $0x8] sm:$0xff] %v4109
    %4137 = vst [vmem:[%s4134 + $0x10] sm:$0x1f] %v4113
    %s4138 = scalar_lea.vmem %s16, 72
    %4139 = vst [vmem:[%s4138] sm:$0xff] %v4106
    %4140 = vst [vmem:[%s4138 + $0x8] sm:$0xff] %v4110
    %4141 = vst [vmem:[%s4138 + $0x10] sm:$0x1f] %v4114
    %s4142 = scalar_lea.vmem %s16, 96
    %4143 = vst [vmem:[%s4142] sm:$0xff] %v4115
    %4144 = vst [vmem:[%s4142 + $0x8] sm:$0xff] %v4119
    %4145 = vst [vmem:[%s4142 + $0x10] sm:$0x1f] %v4123
    %s4146 = scalar_lea.vmem %s16, 120
    %4147 = vst [vmem:[%s4146] sm:$0xff] %v4116
    %4148 = vst [vmem:[%s4146 + $0x8] sm:$0xff] %v4120
    %4149 = vst [vmem:[%s4146 + $0x10] sm:$0x1f] %v4124
    %s4150 = scalar_lea.vmem %s16, 144
    %4151 = vst [vmem:[%s4150] sm:$0xff] %v4117
    %4152 = vst [vmem:[%s4150 + $0x8] sm:$0xff] %v4121
    %4153 = vst [vmem:[%s4150 + $0x10] sm:$0x1f] %v4125
    %s4154 = scalar_lea.vmem %s16, 168
    %4155 = vst [vmem:[%s4154] sm:$0xff] %v4118
    %4156 = vst [vmem:[%s4154 + $0x8] sm:$0xff] %v4122
    %4157 = vst [vmem:[%s4154 + $0x10] sm:$0x1f] %v4126
    // Predicated region
    $region102: #{decoder_forward.1} parent=1 // pred_check
      _
    $region103: #{decoder_forward.1} parent=1 // pred_check_branch
      %4159 = sbr.rel (0) target = $region105
    $region104: #{decoder_forward.1} parent=1 // pred_region
      _
    $region105: #{decoder_forward.1} parent=1 // pred_fallthru
      _
    // Predicated region
    $region106: #{decoder_forward.1} parent=1 // pred_check
      _
    $region107: #{decoder_forward.1} parent=1 // pred_check_branch
      %4161 = sbr.rel (0) target = $region109
    $region108: #{decoder_forward.1} parent=1 // pred_region
      _
    $region109: #{decoder_forward.1} parent=1 // pred_fallthru
      _
    %4162 = vsyncpa [#allocation5], 1
    %4163 = vsyncpa [#allocation7], 1
    %4164 = vsyncpa [#allocation10], 1
    %4165 = vsyncpa [#allocation13], 1
    %4166 = vsyncpa [#allocation16], 1

</llo_original>
